<compile_context>
chip_gen: v7x
topology: tpu7x:2x2x1
jax: 0.10.0
libtpu: 0.0.40
codegen_flags: <defaults>
</compile_context>

<pallas_src>
import math

import jax
import jax.numpy as jnp
from jax.experimental import pallas as pl
from jax.experimental.pallas import tpu as pltpu

IN_FEATURES = 768
OUT_FEATURES = 768
_MXU_DIM = 256          # v6e/v7x MXU edge; multiples of 256 are also 128-aligned (v5e)


def _round_up(x, m):
    return ((x + m - 1) // m) * m


def _device_vmem_bytes():
    """Physical per-core VMEM; conservative (v7x = 64 MiB) fallback if unavailable."""
    try:
        return int(pltpu.get_tpu_info().vmem_capacity_bytes)
    except Exception:
        return 64 * (1 << 20)


def _make_kernel(compute_dtype):
    def kernel(x_ref, w_ref, b_ref, o_ref):
        # x_ref: (TM, K) activations; w_ref: (K, N) pre-transposed resident weight;
        # b_ref: (1, N) f32 resident bias; o_ref: (TM, N).
        x = x_ref[...]
        if compute_dtype is not None and x.dtype != compute_dtype:
            # In-kernel VPU cast: keeps activation DMA at the input dtype width while
            # feeding the MXU at native (e.g. bf16) rate; hides under the tile DMA.
            x = x.astype(compute_dtype)
        acc = jnp.dot(x, w_ref[...], preferred_element_type=jnp.float32)
        o_ref[...] = (acc + b_ref[...]).astype(o_ref.dtype)
    return kernel


def _pick_tile_m(m, tile_m, align):
    m_pad = _round_up(max(m, 1), align)
    # Small / moderate M: one block, no grid split (no per-step overhead on 1-TC
    # parts, no duplicated resident weight across v7x's two TCs).
    if m_pad <= max(tile_m, 2 * _MXU_DIM):
        return m_pad
    # Large M: MXU-dimension-aligned tile for full systolic passes.
    return max(_MXU_DIM, (tile_m // _MXU_DIM) * _MXU_DIM)


def _vmem_footprint(tm, x_bytes, o_bytes, w_bytes):
    # Conservative: assumes the resident weight/bias end up double-buffered.
    return (2 * tm * IN_FEATURES * x_bytes
            + 2 * tm * OUT_FEATURES * o_bytes
            + 2 * IN_FEATURES * OUT_FEATURES * w_bytes
            + 2 * OUT_FEATURES * 4)


def _build_call(kernel, M, tm, grid_m, out_dtype, compiler_kwargs, cost, buffered):
    resident_kwargs = {"pipeline_mode": pl.Buffered(1)} if buffered else {}
    return pl.pallas_call(
        kernel,
        out_shape=jax.ShapeDtypeStruct((M, OUT_FEATURES), out_dtype),
        grid_spec=pltpu.PrefetchScalarGridSpec(
            num_scalar_prefetch=0,
            grid=(grid_m,),
            in_specs=[
                pl.BlockSpec((tm, IN_FEATURES), lambda i: (i, 0)),
                # Constant index_map: weight & bias are DMA'd once and stay resident.
                pl.BlockSpec((IN_FEATURES, OUT_FEATURES), lambda i: (0, 0),
                             **resident_kwargs),
                pl.BlockSpec((1, OUT_FEATURES), lambda i: (0, 0), **resident_kwargs),
            ],
            out_specs=pl.BlockSpec((tm, OUT_FEATURES), lambda i: (i, 0)),
        ),
        compiler_params=pltpu.CompilerParams(**compiler_kwargs),
        cost_estimate=cost,
    )


def video_encoder_vd_ft(x, weight, bias, *, tile_m=1024, compute_dtype=None):
    """Forward of VideoEncoderVdFt: x @ weight.T + bias (PyTorch (out, in) weight)."""
    orig_shape = x.shape
    assert orig_shape[-1] == IN_FEATURES
    assert weight.shape == (OUT_FEATURES, IN_FEATURES)
    out_dtype = x.dtype

    x2d = x.reshape(-1, IN_FEATURES)
    M = x2d.shape[0]

    # One-time (K, N) transpose in the wrapper (2.25 MiB, cached/fused by XLA): the
    # kernel's MXU feed is then a plain row-major (TM, K) x (K, N) contraction.
    w_kn = weight.T
    if compute_dtype is not None and w_kn.dtype != compute_dtype:
        w_kn = w_kn.astype(compute_dtype)      # cast ONLY the tiny resident weight
    b2d = bias.astype(jnp.float32).reshape(1, OUT_FEATURES)

    align = 16 if compute_dtype == jnp.bfloat16 else 8
    tm = _pick_tile_m(M, tile_m, align)

    x_bytes = jnp.dtype(x2d.dtype).itemsize
    o_bytes = jnp.dtype(out_dtype).itemsize
    w_bytes = jnp.dtype(w_kn.dtype).itemsize
    phys_vmem = _device_vmem_bytes()

    # Re-derive tm from the device's VMEM budget (keeps huge tile_m legal on v7x).
    budget = int(0.6 * phys_vmem)
    while tm > _MXU_DIM and _vmem_footprint(tm, x_bytes, o_bytes, w_bytes) > budget:
        tm = max(_MXU_DIM, _round_up(tm // 2, _MXU_DIM))
    grid_m = pl.cdiv(M, tm)

    compiler_kwargs = dict(
        dimension_semantics=("parallel",) if grid_m > 1 else ("arbitrary",))
    need = _vmem_footprint(tm, x_bytes, o_bytes, w_bytes)
    if need > 12 * (1 << 20):
        compiler_kwargs["vmem_limit_bytes"] = min(
            need + (4 << 20), max(int(0.75 * phys_vmem), 16 << 20))

    cost = pl.CostEstimate(
        flops=2 * M * IN_FEATURES * OUT_FEATURES,
        transcendentals=0,
        bytes_accessed=(M * IN_FEATURES * x_bytes
                        + IN_FEATURES * OUT_FEATURES * w_bytes
                        + OUT_FEATURES * 4
                        + M * OUT_FEATURES * o_bytes),
    )

    kernel = _make_kernel(compute_dtype)
    try:
        call = _build_call(kernel, M, tm, grid_m, out_dtype, compiler_kwargs, cost,
                           buffered=hasattr(pl, "Buffered"))
        out = call(x2d, w_kn, b2d)
    except Exception:
        # Fallback: default double-buffering if single-buffered resident operands
        # (pipeline_mode=pl.Buffered(1)) are unsupported by this Pallas version.
        call = _build_call(kernel, M, tm, grid_m, out_dtype, compiler_kwargs, cost,
                           buffered=False)
        out = call(x2d, w_kn, b2d)

    return out.reshape(*orig_shape[:-1], OUT_FEATURES)


def init_params(key):
    """Deterministic init matching nn.Linear(768, 768) default (uniform +-1/sqrt(in))."""
    k_w, k_b = jax.random.split(key)
    bound = 1.0 / math.sqrt(IN_FEATURES)
    weight = jax.random.uniform(
        k_w, (OUT_FEATURES, IN_FEATURES), jnp.float32, -bound, bound)
    bias = jax.random.uniform(
        k_b, (OUT_FEATURES,), jnp.float32, -bound, bound)
    return weight, bias


if __name__ == "__main__":
    key = jax.random.PRNGKey(0)
    k_x, k_p = jax.random.split(key)

    # Small shapes consistent with the module: (batch=2, seq=8, features=768).
    batch, seq = 2, 8
    x = jax.random.normal(k_x, (batch, seq, IN_FEATURES), jnp.float32)
    weight, bias = init_params(k_p)

    # Default full-f32 path (matches nn.Linear semantics, modulo MXU bf16 passes).
    out = video_encoder_vd_ft(x, weight, bias)
    out = jax.block_until_ready(out)

    ref = x @ weight.T + bias
    assert out.shape == (batch, seq, OUT_FEATURES)
    assert jnp.allclose(out, ref, atol=2e-4, rtol=2e-4), \
        float(jnp.max(jnp.abs(out - ref)))

    # Optional bf16 fast path: weight cast once in wrapper, x tile cast in-kernel.
    out_bf16 = video_encoder_vd_ft(x, weight, bias, compute_dtype=jnp.bfloat16)
    out_bf16 = jax.block_until_ready(out_bf16)
    assert jnp.allclose(out_bf16, ref, atol=1e-1, rtol=2e-2)

    print("KERNEL_OK")
</pallas_src>

<mosaic_0001>
module attributes {stable_mosaic.version = 11 : i64} {
  func.func @kernel(%arg0: i32, %arg1: memref<16x768xf32, #tpu.memory_space<vmem>>, %arg2: memref<768x768xf32, #tpu.memory_space<vmem>>, %arg3: memref<1x768xf32, #tpu.memory_space<vmem>>, %arg4: memref<16x768xf32, #tpu.memory_space<vmem>>) attributes {dimension_semantics = [#tpu.dimension_semantics<arbitrary>], iteration_bounds = array<i64: 1>, scalar_prefetch = 0 : i64, scratch_operands = 0 : i64, tpu.core_type = #tpu.core_type<tc>, window_params = [{transform_indices = @transform_0, window_bounds = array<i64: 16, 768>}, {pipeline_mode = #tpu.pipeline_mode<synchronous>, transform_indices = @transform_1, window_bounds = array<i64: 768, 768>}, {pipeline_mode = #tpu.pipeline_mode<synchronous>, transform_indices = @transform_2, window_bounds = array<i64: 1, 768>}, {transform_indices = @transform_3, window_bounds = array<i64: 16, 768>}]} {
    %c0 = arith.constant 0 : index
    %c0_0 = arith.constant 0 : index
    %0 = vector.load %arg1[%c0, %c0_0] : memref<16x768xf32, #tpu.memory_space<vmem>>, vector<16x768xf32>
    %c0_1 = arith.constant 0 : index
    %c0_2 = arith.constant 0 : index
    %1 = vector.load %arg2[%c0_1, %c0_2] : memref<768x768xf32, #tpu.memory_space<vmem>>, vector<768x768xf32>
    %cst = arith.constant dense<0.000000e+00> : vector<16x768xf32>
    %2 = tpu.matmul %0, %1, %cst {dimension_numbers = #tpu.dot_dimension_numbers<[1], [0], [0], [1], [0, 0, 1, 1], [], []>} : vector<16x768xf32>, vector<768x768xf32>, vector<16x768xf32> -> vector<16x768xf32>
    %c0_3 = arith.constant 0 : index
    %c0_4 = arith.constant 0 : index
    %3 = vector.load %arg3[%c0_3, %c0_4] : memref<1x768xf32, #tpu.memory_space<vmem>>, vector<1x768xf32>
    %4 = vector.broadcast %3 : vector<1x768xf32> to vector<16x768xf32>
    %5 = arith.addf %2, %4 : vector<16x768xf32>
    %c0_5 = arith.constant 0 : index
    %c0_6 = arith.constant 0 : index
    %6 = vector.load %arg4[%c0_5, %c0_6] : memref<16x768xf32, #tpu.memory_space<vmem>>, vector<16x768xf32>
    tpu.vector_store %arg4[%c0_5, %c0_6], %5 {strides = array<i32>} : memref<16x768xf32, #tpu.memory_space<vmem>>, vector<16x768xf32>,
    return
  }
  func.func @transform_0(%arg0: i32) -> (i32, i32) {
    %c0_i32 = arith.constant 0 : i32
    %c0_i32_0 = arith.constant 0 : i32
    return %arg0, %c0_i32 : i32, i32
  }
  func.func @transform_1(%arg0: i32) -> (i32, i32) {
    %c0_i32 = arith.constant 0 : i32
    %c0_i32_0 = arith.constant 0 : i32
    %c0_i32_1 = arith.constant 0 : i32
    return %c0_i32, %c0_i32_0 : i32, i32
  }
  func.func @transform_2(%arg0: i32) -> (i32, i32) {
    %c0_i32 = arith.constant 0 : i32
    %c0_i32_0 = arith.constant 0 : i32
    %c0_i32_1 = arith.constant 0 : i32
    return %c0_i32, %c0_i32_0 : i32, i32
  }
  func.func @transform_3(%arg0: i32) -> (i32, i32) {
    %c0_i32 = arith.constant 0 : i32
    %c0_i32_0 = arith.constant 0 : i32
    return %arg0, %c0_i32 : i32, i32
  }
}

module attributes {stable_mosaic.version = 11 : i64} {
  func.func @kernel(%arg0: i32, %arg1: memref<16x768xf32, #tpu.memory_space<vmem>>, %arg2: memref<768x768xf32, #tpu.memory_space<vmem>>, %arg3: memref<1x768xf32, #tpu.memory_space<vmem>>, %arg4: memref<16x768xf32, #tpu.memory_space<vmem>>) attributes {dimension_semantics = [#tpu.dimension_semantics<arbitrary>], iteration_bounds = array<i64: 1>, scalar_prefetch = 0 : i64, scratch_operands = 0 : i64, tpu.core_type = #tpu.core_type<tc>, window_params = [{transform_indices = @transform_0, window_bounds = array<i64: 16, 768>}, {pipeline_mode = #tpu.pipeline_mode<synchronous>, transform_indices = @transform_1, window_bounds = array<i64: 768, 768>}, {pipeline_mode = #tpu.pipeline_mode<synchronous>, transform_indices = @transform_2, window_bounds = array<i64: 1, 768>}, {transform_indices = @transform_3, window_bounds = array<i64: 16, 768>}]} {
    %c0 = arith.constant 0 : index
    %c0_0 = arith.constant 0 : index
    %0 = vector.load %arg1[%c0, %c0_0] : memref<16x768xf32, #tpu.memory_space<vmem>>, vector<16x768xf32>
    %c0_1 = arith.constant 0 : index
    %c0_2 = arith.constant 0 : index
    %1 = vector.load %arg2[%c0_1, %c0_2] : memref<768x768xf32, #tpu.memory_space<vmem>>, vector<768x768xf32>
    %cst = arith.constant dense<0.000000e+00> : vector<16x768xf32>
    %2 = tpu.matmul %0, %1, %cst {dimension_numbers = #tpu.dot_dimension_numbers<[1], [0], [0], [1], [0, 0, 1, 1], [], []>} : vector<16x768xf32>, vector<768x768xf32>, vector<16x768xf32> -> vector<16x768xf32>
    %c0_3 = arith.constant 0 : index
    %c0_4 = arith.constant 0 : index
    %3 = vector.load %arg3[%c0_3, %c0_4] : memref<1x768xf32, #tpu.memory_space<vmem>>, vector<1x768xf32>
    %4 = vector.broadcast %3 : vector<1x768xf32> to vector<16x768xf32>
    %5 = arith.addf %2, %4 : vector<16x768xf32>
    %c0_5 = arith.constant 0 : index
    %c0_6 = arith.constant 0 : index
    %6 = vector.load %arg4[%c0_5, %c0_6] : memref<16x768xf32, #tpu.memory_space<vmem>>, vector<16x768xf32>
    tpu.vector_store %arg4[%c0_5, %c0_6], %5 {strides = array<i32>} : memref<16x768xf32, #tpu.memory_space<vmem>>, vector<16x768xf32>,
    return
  }
  func.func @transform_0(%arg0: i32) -> (i32, i32) {
    %c0_i32 = arith.constant 0 : i32
    %c0_i32_0 = arith.constant 0 : i32
    return %arg0, %c0_i32 : i32, i32
  }
  func.func @transform_1(%arg0: i32) -> (i32, i32) {
    %c0_i32 = arith.constant 0 : i32
    %c0_i32_0 = arith.constant 0 : i32
    %c0_i32_1 = arith.constant 0 : i32
    return %c0_i32, %c0_i32_0 : i32, i32
  }
  func.func @transform_2(%arg0: i32) -> (i32, i32) {
    %c0_i32 = arith.constant 0 : i32
    %c0_i32_0 = arith.constant 0 : i32
    %c0_i32_1 = arith.constant 0 : i32
    return %c0_i32, %c0_i32_0 : i32, i32
  }
  func.func @transform_3(%arg0: i32) -> (i32, i32) {
    %c0_i32 = arith.constant 0 : i32
    %c0_i32_0 = arith.constant 0 : i32
    return %arg0, %c0_i32 : i32, i32
  }
}

</mosaic_0001>

<llo_original>
// kernel: tpu_custom_call.1
$region0: #{tpu_custom_call.1}
  #allocation0 [shape = 'u32[]', space=smem, size = 0x4, offset = 0x4, fixed_abs, tag = 'smem constant byte address 0x4 - core index']
  #allocation1 [shape = 'u32[144,128]{1,0:T(1,128)}', space=vmem, size = 0x12000, scoped, tag = 'internal scratch']
  %s0 = inlined_call_operand.hbm [shape: f32[16,768], index: 0, kind: input, shape index: {}]
  %s1 = inlined_call_operand.hbm [shape: f32[768,768], index: 1, kind: input, shape index: {}]
  %s2 = inlined_call_operand.hbm [shape: f32[1,768], index: 2, kind: input, shape index: {}]
  %s3 = inlined_call_operand.hbm [shape: f32[16,768], index: 3, kind: output, shape index: {}]
  %s4 = sld [smem:[#allocation0]]
  $region34: #{tpu_custom_call.1} parent=0
    _
  %s6 = ssub.s32 1, %s4
  %s7 = scalar_select 0, %s6, %s4
  $region1: #{tpu_custom_call.1} parent=0
    #allocation2 [shape = 'u8[49152]{0}', space=vmem, size = 0xc000, scoped, tag = 'input window, operand 0, single buffered']
    #allocation3 [shape = 's32[1]{0}', space=sflag, size = 0x4, scoped, tag = 'scoped memory for tpu_custom_call.1']
    #allocation4 [shape = 's32[1]{0}', space=sflag, size = 0x4, scoped, tag = 'scoped memory for tpu_custom_call.1']
    #allocation5 [shape = 'u8[2359296]{0}', space=vmem, size = 0x240000, scoped, tag = 'input window, operand 1, single buffered']
    #allocation6 [shape = 's32[1]{0}', space=sflag, size = 0x4, scoped, tag = 'scoped memory for tpu_custom_call.1']
    #allocation7 [shape = 'u8[3072]{0}', space=vmem, size = 0xc00, scoped, tag = 'input window, operand 2, single buffered']
    #allocation8 [shape = 'u8[49152]{0}', space=vmem, size = 0xc000, scoped, tag = 'output window, operand 0, single buffered']
    %8 = vsyncpa [#allocation3], 0
    %9 = vsyncpa [#allocation6], 0
    %10 = vsyncpa [#allocation4], 0
    // Predicated region
    $region2: #{tpu_custom_call.1} parent=1 // pred_check
      _
    $region3: #{tpu_custom_call.1} parent=1 // pred_check_branch
      %12 = sbr.rel (0) target = $region5
    $region4: #{tpu_custom_call.1} parent=1 // pred_region
      %s14 = ssub.s32 1536, 1536
      %15 = vsyncadd [#allocation3], %s14
      %s16 = sshll.u32 [#allocation2], 4
      %s17 = int_to_ptr.vmem [resolvable:$true] %s16
      %22 = dma.hbm_to_vmem [thread:$0]  %s0, 1536, %s17, [#allocation3], 768, 768, 48
    $region5: #{tpu_custom_call.1} parent=1 // pred_fallthru
      _
    // Predicated region
    $region6: #{tpu_custom_call.1} parent=1 // pred_check
      _
    $region7: #{tpu_custom_call.1} parent=1 // pred_check_branch
      %24 = sbr.rel (0) target = $region9
    $region8: #{tpu_custom_call.1} parent=1 // pred_region
      %s26 = ssub.s32 73728, 73728
      %27 = vsyncadd [#allocation6], %s26
      %s28 = sshll.u32 [#allocation5], 4
      %s29 = int_to_ptr.vmem [resolvable:$true] %s28
      %34 = dma.hbm_to_vmem [thread:$0]  %s1, 73728, %s29, [#allocation6], 768, 768, 48
    $region9: #{tpu_custom_call.1} parent=1 // pred_fallthru
      _
    // Predicated region
    $region10: #{tpu_custom_call.1} parent=1 // pred_check
      _
    $region11: #{tpu_custom_call.1} parent=1 // pred_check_branch
      %36 = sbr.rel (0) target = $region13
    $region12: #{tpu_custom_call.1} parent=1 // pred_region
      %s38 = ssub.s32 96, 96
      %39 = vsyncadd [#allocation6], %s38
      %s41 = sshll.u32 [#allocation7], 4
      %s42 = int_to_ptr.vmem [resolvable:$true] %s41
      %44 = dma.hbm_to_vmem [thread:$0]  %s2, 96, %s42, [#allocation6]
    $region13: #{tpu_custom_call.1} parent=1 // pred_fallthru
      _
    // Predicated region
    $region14: #{tpu_custom_call.1} parent=1 // pred_check
      _
    $region15: #{tpu_custom_call.1} parent=1 // pred_check_branch
      %46 = sbr.rel (0) target = $region17
    $region16: #{tpu_custom_call.1} parent=1 // pred_region
      %47 = dma.done [#allocation3], 1536
    $region17: #{tpu_custom_call.1} parent=1 // pred_fallthru
      _
    // Predicated region
    $region18: #{tpu_custom_call.1} parent=1 // pred_check
      _
    $region19: #{tpu_custom_call.1} parent=1 // pred_check_branch
      %49 = sbr.rel (0) target = $region21
    $region20: #{tpu_custom_call.1} parent=1 // pred_region
      %50 = dma.done [#allocation6], 73728
    $region21: #{tpu_custom_call.1} parent=1 // pred_fallthru
      _
    // Predicated region
    $region22: #{tpu_custom_call.1} parent=1 // pred_check
      _
    $region23: #{tpu_custom_call.1} parent=1 // pred_check_branch
      %52 = sbr.rel (0) target = $region25
    $region24: #{tpu_custom_call.1} parent=1 // pred_region
      %53 = dma.done [#allocation6], 96
    $region25: #{tpu_custom_call.1} parent=1 // pred_fallthru
      _
    %v54 = vld [vmem:[#allocation2] sm:$0xff]
    %v55 = vld [vmem:[#allocation2 + $0x8] sm:$0xff]
    %v56 = vld [vmem:[#allocation2 + $0x10] sm:$0xff]
    %v57 = vld [vmem:[#allocation2 + $0x18] sm:$0xff]
    %v58 = vld [vmem:[#allocation2 + $0x20] sm:$0xff]
    %v59 = vld [vmem:[#allocation2 + $0x28] sm:$0xff]
    %v60 = vld [vmem:[#allocation2 + $0x30] sm:$0xff]
    %v61 = vld [vmem:[#allocation2 + $0x38] sm:$0xff]
    %v62 = vld [vmem:[#allocation2 + $0x40] sm:$0xff]
    %v63 = vld [vmem:[#allocation2 + $0x48] sm:$0xff]
    %v64 = vld [vmem:[#allocation2 + $0x50] sm:$0xff]
    %v65 = vld [vmem:[#allocation2 + $0x58] sm:$0xff]
    %v66 = vld [vmem:[#allocation5] sm:$0xff]
    %v67 = vld [vmem:[#allocation5 + $0x8] sm:$0xff]
    %v68 = vld [vmem:[#allocation5 + $0x10] sm:$0xff]
    %v69 = vld [vmem:[#allocation5 + $0x18] sm:$0xff]
    %v70 = vld [vmem:[#allocation5 + $0x20] sm:$0xff]
    %v71 = vld [vmem:[#allocation5 + $0x28] sm:$0xff]
    %v72 = vld [vmem:[#allocation5 + $0x30] sm:$0xff]
    %v73 = vld [vmem:[#allocation5 + $0x38] sm:$0xff]
    %v74 = vld [vmem:[#allocation5 + $0x40] sm:$0xff]
    %v75 = vld [vmem:[#allocation5 + $0x48] sm:$0xff]
    %v76 = vld [vmem:[#allocation5 + $0x50] sm:$0xff]
    %v77 = vld [vmem:[#allocation5 + $0x58] sm:$0xff]
    %v78 = vld [vmem:[#allocation5 + $0x60] sm:$0xff]
    %v79 = vld [vmem:[#allocation5 + $0x68] sm:$0xff]
    %v80 = vld [vmem:[#allocation5 + $0x70] sm:$0xff]
    %v81 = vld [vmem:[#allocation5 + $0x78] sm:$0xff]
    %v82 = vld [vmem:[#allocation5 + $0x80] sm:$0xff]
    %v83 = vld [vmem:[#allocation5 + $0x88] sm:$0xff]
    %v84 = vld [vmem:[#allocation5 + $0x90] sm:$0xff]
    %v85 = vld [vmem:[#allocation5 + $0x98] sm:$0xff]
    %v86 = vld [vmem:[#allocation5 + $0xa0] sm:$0xff]
    %v87 = vld [vmem:[#allocation5 + $0xa8] sm:$0xff]
    %v88 = vld [vmem:[#allocation5 + $0xb0] sm:$0xff]
    %v89 = vld [vmem:[#allocation5 + $0xb8] sm:$0xff]
    %v90 = vld [vmem:[#allocation5 + $0xc0] sm:$0xff]
    %v91 = vld [vmem:[#allocation5 + $0xc8] sm:$0xff]
    %v92 = vld [vmem:[#allocation5 + $0xd0] sm:$0xff]
    %v93 = vld [vmem:[#allocation5 + $0xd8] sm:$0xff]
    %v94 = vld [vmem:[#allocation5 + $0xe0] sm:$0xff]
    %v95 = vld [vmem:[#allocation5 + $0xe8] sm:$0xff]
    %v96 = vld [vmem:[#allocation5 + $0xf0] sm:$0xff]
    %v97 = vld [vmem:[#allocation5 + $0xf8] sm:$0xff]
    %v98 = vld [vmem:[#allocation5 + $0x100] sm:$0xff]
    %v99 = vld [vmem:[#allocation5 + $0x108] sm:$0xff]
    %v100 = vld [vmem:[#allocation5 + $0x110] sm:$0xff]
    %v101 = vld [vmem:[#allocation5 + $0x118] sm:$0xff]
    %v102 = vld [vmem:[#allocation5 + $0x120] sm:$0xff]
    %v103 = vld [vmem:[#allocation5 + $0x128] sm:$0xff]
    %v104 = vld [vmem:[#allocation5 + $0x130] sm:$0xff]
    %v105 = vld [vmem:[#allocation5 + $0x138] sm:$0xff]
    %v106 = vld [vmem:[#allocation5 + $0x140] sm:$0xff]
    %v107 = vld [vmem:[#allocation5 + $0x148] sm:$0xff]
    %v108 = vld [vmem:[#allocation5 + $0x150] sm:$0xff]
    %v109 = vld [vmem:[#allocation5 + $0x158] sm:$0xff]
    %v110 = vld [vmem:[#allocation5 + $0x160] sm:$0xff]
    %v111 = vld [vmem:[#allocation5 + $0x168] sm:$0xff]
    %v112 = vld [vmem:[#allocation5 + $0x170] sm:$0xff]
    %v113 = vld [vmem:[#allocation5 + $0x178] sm:$0xff]
    %v114 = vld [vmem:[#allocation5 + $0x180] sm:$0xff]
    %v115 = vld [vmem:[#allocation5 + $0x188] sm:$0xff]
    %v116 = vld [vmem:[#allocation5 + $0x190] sm:$0xff]
    %v117 = vld [vmem:[#allocation5 + $0x198] sm:$0xff]
    %v118 = vld [vmem:[#allocation5 + $0x1a0] sm:$0xff]
    %v119 = vld [vmem:[#allocation5 + $0x1a8] sm:$0xff]
    %v120 = vld [vmem:[#allocation5 + $0x1b0] sm:$0xff]
    %v121 = vld [vmem:[#allocation5 + $0x1b8] sm:$0xff]
    %v122 = vld [vmem:[#allocation5 + $0x1c0] sm:$0xff]
    %v123 = vld [vmem:[#allocation5 + $0x1c8] sm:$0xff]
    %v124 = vld [vmem:[#allocation5 + $0x1d0] sm:$0xff]
    %v125 = vld [vmem:[#allocation5 + $0x1d8] sm:$0xff]
    %v126 = vld [vmem:[#allocation5 + $0x1e0] sm:$0xff]
    %v127 = vld [vmem:[#allocation5 + $0x1e8] sm:$0xff]
    %v128 = vld [vmem:[#allocation5 + $0x1f0] sm:$0xff]
    %v129 = vld [vmem:[#allocation5 + $0x1f8] sm:$0xff]
    %v130 = vld [vmem:[#allocation5 + $0x200] sm:$0xff]
    %v131 = vld [vmem:[#allocation5 + $0x208] sm:$0xff]
    %v132 = vld [vmem:[#allocation5 + $0x210] sm:$0xff]
    %v133 = vld [vmem:[#allocation5 + $0x218] sm:$0xff]
    %v134 = vld [vmem:[#allocation5 + $0x220] sm:$0xff]
    %v135 = vld [vmem:[#allocation5 + $0x228] sm:$0xff]
    %v136 = vld [vmem:[#allocation5 + $0x230] sm:$0xff]
    %v137 = vld [vmem:[#allocation5 + $0x238] sm:$0xff]
    %v138 = vld [vmem:[#allocation5 + $0x240] sm:$0xff]
    %v139 = vld [vmem:[#allocation5 + $0x248] sm:$0xff]
    %v140 = vld [vmem:[#allocation5 + $0x250] sm:$0xff]
    %v141 = vld [vmem:[#allocation5 + $0x258] sm:$0xff]
    %v142 = vld [vmem:[#allocation5 + $0x260] sm:$0xff]
    %v143 = vld [vmem:[#allocation5 + $0x268] sm:$0xff]
    %v144 = vld [vmem:[#allocation5 + $0x270] sm:$0xff]
    %v145 = vld [vmem:[#allocation5 + $0x278] sm:$0xff]
    %v146 = vld [vmem:[#allocation5 + $0x280] sm:$0xff]
    %v147 = vld [vmem:[#allocation5 + $0x288] sm:$0xff]
    %v148 = vld [vmem:[#allocation5 + $0x290] sm:$0xff]
    %v149 = vld [vmem:[#allocation5 + $0x298] sm:$0xff]
    %v150 = vld [vmem:[#allocation5 + $0x2a0] sm:$0xff]
    %v151 = vld [vmem:[#allocation5 + $0x2a8] sm:$0xff]
    %v152 = vld [vmem:[#allocation5 + $0x2b0] sm:$0xff]
    %v153 = vld [vmem:[#allocation5 + $0x2b8] sm:$0xff]
    %v154 = vld [vmem:[#allocation5 + $0x2c0] sm:$0xff]
    %v155 = vld [vmem:[#allocation5 + $0x2c8] sm:$0xff]
    %v156 = vld [vmem:[#allocation5 + $0x2d0] sm:$0xff]
    %v157 = vld [vmem:[#allocation5 + $0x2d8] sm:$0xff]
    %v158 = vld [vmem:[#allocation5 + $0x2e0] sm:$0xff]
    %v159 = vld [vmem:[#allocation5 + $0x2e8] sm:$0xff]
    %v160 = vld [vmem:[#allocation5 + $0x2f0] sm:$0xff]
    %v161 = vld [vmem:[#allocation5 + $0x2f8] sm:$0xff]
    %v162 = vld [vmem:[#allocation5 + $0x300] sm:$0xff]
    %v163 = vld [vmem:[#allocation5 + $0x308] sm:$0xff]
    %v164 = vld [vmem:[#allocation5 + $0x310] sm:$0xff]
    %v165 = vld [vmem:[#allocation5 + $0x318] sm:$0xff]
    %v166 = vld [vmem:[#allocation5 + $0x320] sm:$0xff]
    %v167 = vld [vmem:[#allocation5 + $0x328] sm:$0xff]
    %v168 = vld [vmem:[#allocation5 + $0x330] sm:$0xff]
    %v169 = vld [vmem:[#allocation5 + $0x338] sm:$0xff]
    %v170 = vld [vmem:[#allocation5 + $0x340] sm:$0xff]
    %v171 = vld [vmem:[#allocation5 + $0x348] sm:$0xff]
    %v172 = vld [vmem:[#allocation5 + $0x350] sm:$0xff]
    %v173 = vld [vmem:[#allocation5 + $0x358] sm:$0xff]
    %v174 = vld [vmem:[#allocation5 + $0x360] sm:$0xff]
    %v175 = vld [vmem:[#allocation5 + $0x368] sm:$0xff]
    %v176 = vld [vmem:[#allocation5 + $0x370] sm:$0xff]
    %v177 = vld [vmem:[#allocation5 + $0x378] sm:$0xff]
    %v178 = vld [vmem:[#allocation5 + $0x380] sm:$0xff]
    %v179 = vld [vmem:[#allocation5 + $0x388] sm:$0xff]
    %v180 = vld [vmem:[#allocation5 + $0x390] sm:$0xff]
    %v181 = vld [vmem:[#allocation5 + $0x398] sm:$0xff]
    %v182 = vld [vmem:[#allocation5 + $0x3a0] sm:$0xff]
    %v183 = vld [vmem:[#allocation5 + $0x3a8] sm:$0xff]
    %v184 = vld [vmem:[#allocation5 + $0x3b0] sm:$0xff]
    %v185 = vld [vmem:[#allocation5 + $0x3b8] sm:$0xff]
    %v186 = vld [vmem:[#allocation5 + $0x3c0] sm:$0xff]
    %v187 = vld [vmem:[#allocation5 + $0x3c8] sm:$0xff]
    %v188 = vld [vmem:[#allocation5 + $0x3d0] sm:$0xff]
    %v189 = vld [vmem:[#allocation5 + $0x3d8] sm:$0xff]
    %v190 = vld [vmem:[#allocation5 + $0x3e0] sm:$0xff]
    %v191 = vld [vmem:[#allocation5 + $0x3e8] sm:$0xff]
    %v192 = vld [vmem:[#allocation5 + $0x3f0] sm:$0xff]
    %v193 = vld [vmem:[#allocation5 + $0x3f8] sm:$0xff]
    %v194 = vld [vmem:[#allocation5 + $0x400] sm:$0xff]
    %v195 = vld [vmem:[#allocation5 + $0x408] sm:$0xff]
    %v196 = vld [vmem:[#allocation5 + $0x410] sm:$0xff]
    %v197 = vld [vmem:[#allocation5 + $0x418] sm:$0xff]
    %v198 = vld [vmem:[#allocation5 + $0x420] sm:$0xff]
    %v199 = vld [vmem:[#allocation5 + $0x428] sm:$0xff]
    %v200 = vld [vmem:[#allocation5 + $0x430] sm:$0xff]
    %v201 = vld [vmem:[#allocation5 + $0x438] sm:$0xff]
    %v202 = vld [vmem:[#allocation5 + $0x440] sm:$0xff]
    %v203 = vld [vmem:[#allocation5 + $0x448] sm:$0xff]
    %v204 = vld [vmem:[#allocation5 + $0x450] sm:$0xff]
    %v205 = vld [vmem:[#allocation5 + $0x458] sm:$0xff]
    %v206 = vld [vmem:[#allocation5 + $0x460] sm:$0xff]
    %v207 = vld [vmem:[#allocation5 + $0x468] sm:$0xff]
    %v208 = vld [vmem:[#allocation5 + $0x470] sm:$0xff]
    %v209 = vld [vmem:[#allocation5 + $0x478] sm:$0xff]
    %v210 = vld [vmem:[#allocation5 + $0x480] sm:$0xff]
    %v211 = vld [vmem:[#allocation5 + $0x488] sm:$0xff]
    %v212 = vld [vmem:[#allocation5 + $0x490] sm:$0xff]
    %v213 = vld [vmem:[#allocation5 + $0x498] sm:$0xff]
    %v214 = vld [vmem:[#allocation5 + $0x4a0] sm:$0xff]
    %v215 = vld [vmem:[#allocation5 + $0x4a8] sm:$0xff]
    %v216 = vld [vmem:[#allocation5 + $0x4b0] sm:$0xff]
    %v217 = vld [vmem:[#allocation5 + $0x4b8] sm:$0xff]
    %v218 = vld [vmem:[#allocation5 + $0x4c0] sm:$0xff]
    %v219 = vld [vmem:[#allocation5 + $0x4c8] sm:$0xff]
    %v220 = vld [vmem:[#allocation5 + $0x4d0] sm:$0xff]
    %v221 = vld [vmem:[#allocation5 + $0x4d8] sm:$0xff]
    %v222 = vld [vmem:[#allocation5 + $0x4e0] sm:$0xff]
    %v223 = vld [vmem:[#allocation5 + $0x4e8] sm:$0xff]
    %v224 = vld [vmem:[#allocation5 + $0x4f0] sm:$0xff]
    %v225 = vld [vmem:[#allocation5 + $0x4f8] sm:$0xff]
    %v226 = vld [vmem:[#allocation5 + $0x500] sm:$0xff]
    %v227 = vld [vmem:[#allocation5 + $0x508] sm:$0xff]
    %v228 = vld [vmem:[#allocation5 + $0x510] sm:$0xff]
    %v229 = vld [vmem:[#allocation5 + $0x518] sm:$0xff]
    %v230 = vld [vmem:[#allocation5 + $0x520] sm:$0xff]
    %v231 = vld [vmem:[#allocation5 + $0x528] sm:$0xff]
    %v232 = vld [vmem:[#allocation5 + $0x530] sm:$0xff]
    %v233 = vld [vmem:[#allocation5 + $0x538] sm:$0xff]
    %v234 = vld [vmem:[#allocation5 + $0x540] sm:$0xff]
    %v235 = vld [vmem:[#allocation5 + $0x548] sm:$0xff]
    %v236 = vld [vmem:[#allocation5 + $0x550] sm:$0xff]
    %v237 = vld [vmem:[#allocation5 + $0x558] sm:$0xff]
    %v238 = vld [vmem:[#allocation5 + $0x560] sm:$0xff]
    %v239 = vld [vmem:[#allocation5 + $0x568] sm:$0xff]
    %v240 = vld [vmem:[#allocation5 + $0x570] sm:$0xff]
    %v241 = vld [vmem:[#allocation5 + $0x578] sm:$0xff]
    %v242 = vld [vmem:[#allocation5 + $0x580] sm:$0xff]
    %v243 = vld [vmem:[#allocation5 + $0x588] sm:$0xff]
    %v244 = vld [vmem:[#allocation5 + $0x590] sm:$0xff]
    %v245 = vld [vmem:[#allocation5 + $0x598] sm:$0xff]
    %v246 = vld [vmem:[#allocation5 + $0x5a0] sm:$0xff]
    %v247 = vld [vmem:[#allocation5 + $0x5a8] sm:$0xff]
    %v248 = vld [vmem:[#allocation5 + $0x5b0] sm:$0xff]
    %v249 = vld [vmem:[#allocation5 + $0x5b8] sm:$0xff]
    %v250 = vld [vmem:[#allocation5 + $0x5c0] sm:$0xff]
    %v251 = vld [vmem:[#allocation5 + $0x5c8] sm:$0xff]
    %v252 = vld [vmem:[#allocation5 + $0x5d0] sm:$0xff]
    %v253 = vld [vmem:[#allocation5 + $0x5d8] sm:$0xff]
    %v254 = vld [vmem:[#allocation5 + $0x5e0] sm:$0xff]
    %v255 = vld [vmem:[#allocation5 + $0x5e8] sm:$0xff]
    %v256 = vld [vmem:[#allocation5 + $0x5f0] sm:$0xff]
    %v257 = vld [vmem:[#allocation5 + $0x5f8] sm:$0xff]
    %v258 = vld [vmem:[#allocation5 + $0x600] sm:$0xff]
    %v259 = vld [vmem:[#allocation5 + $0x608] sm:$0xff]
    %v260 = vld [vmem:[#allocation5 + $0x610] sm:$0xff]
    %v261 = vld [vmem:[#allocation5 + $0x618] sm:$0xff]
    %v262 = vld [vmem:[#allocation5 + $0x620] sm:$0xff]
    %v263 = vld [vmem:[#allocation5 + $0x628] sm:$0xff]
    %v264 = vld [vmem:[#allocation5 + $0x630] sm:$0xff]
    %v265 = vld [vmem:[#allocation5 + $0x638] sm:$0xff]
    %v266 = vld [vmem:[#allocation5 + $0x640] sm:$0xff]
    %v267 = vld [vmem:[#allocation5 + $0x648] sm:$0xff]
    %v268 = vld [vmem:[#allocation5 + $0x650] sm:$0xff]
    %v269 = vld [vmem:[#allocation5 + $0x658] sm:$0xff]
    %v270 = vld [vmem:[#allocation5 + $0x660] sm:$0xff]
    %v271 = vld [vmem:[#allocation5 + $0x668] sm:$0xff]
    %v272 = vld [vmem:[#allocation5 + $0x670] sm:$0xff]
    %v273 = vld [vmem:[#allocation5 + $0x678] sm:$0xff]
    %v274 = vld [vmem:[#allocation5 + $0x680] sm:$0xff]
    %v275 = vld [vmem:[#allocation5 + $0x688] sm:$0xff]
    %v276 = vld [vmem:[#allocation5 + $0x690] sm:$0xff]
    %v277 = vld [vmem:[#allocation5 + $0x698] sm:$0xff]
    %v278 = vld [vmem:[#allocation5 + $0x6a0] sm:$0xff]
    %v279 = vld [vmem:[#allocation5 + $0x6a8] sm:$0xff]
    %v280 = vld [vmem:[#allocation5 + $0x6b0] sm:$0xff]
    %v281 = vld [vmem:[#allocation5 + $0x6b8] sm:$0xff]
    %v282 = vld [vmem:[#allocation5 + $0x6c0] sm:$0xff]
    %v283 = vld [vmem:[#allocation5 + $0x6c8] sm:$0xff]
    %v284 = vld [vmem:[#allocation5 + $0x6d0] sm:$0xff]
    %v285 = vld [vmem:[#allocation5 + $0x6d8] sm:$0xff]
    %v286 = vld [vmem:[#allocation5 + $0x6e0] sm:$0xff]
    %v287 = vld [vmem:[#allocation5 + $0x6e8] sm:$0xff]
    %v288 = vld [vmem:[#allocation5 + $0x6f0] sm:$0xff]
    %v289 = vld [vmem:[#allocation5 + $0x6f8] sm:$0xff]
    %v290 = vld [vmem:[#allocation5 + $0x700] sm:$0xff]
    %v291 = vld [vmem:[#allocation5 + $0x708] sm:$0xff]
    %v292 = vld [vmem:[#allocation5 + $0x710] sm:$0xff]
    %v293 = vld [vmem:[#allocation5 + $0x718] sm:$0xff]
    %v294 = vld [vmem:[#allocation5 + $0x720] sm:$0xff]
    %v295 = vld [vmem:[#allocation5 + $0x728] sm:$0xff]
    %v296 = vld [vmem:[#allocation5 + $0x730] sm:$0xff]
    %v297 = vld [vmem:[#allocation5 + $0x738] sm:$0xff]
    %v298 = vld [vmem:[#allocation5 + $0x740] sm:$0xff]
    %v299 = vld [vmem:[#allocation5 + $0x748] sm:$0xff]
    %v300 = vld [vmem:[#allocation5 + $0x750] sm:$0xff]
    %v301 = vld [vmem:[#allocation5 + $0x758] sm:$0xff]
    %v302 = vld [vmem:[#allocation5 + $0x760] sm:$0xff]
    %v303 = vld [vmem:[#allocation5 + $0x768] sm:$0xff]
    %v304 = vld [vmem:[#allocation5 + $0x770] sm:$0xff]
    %v305 = vld [vmem:[#allocation5 + $0x778] sm:$0xff]
    %v306 = vld [vmem:[#allocation5 + $0x780] sm:$0xff]
    %v307 = vld [vmem:[#allocation5 + $0x788] sm:$0xff]
    %v308 = vld [vmem:[#allocation5 + $0x790] sm:$0xff]
    %v309 = vld [vmem:[#allocation5 + $0x798] sm:$0xff]
    %v310 = vld [vmem:[#allocation5 + $0x7a0] sm:$0xff]
    %v311 = vld [vmem:[#allocation5 + $0x7a8] sm:$0xff]
    %v312 = vld [vmem:[#allocation5 + $0x7b0] sm:$0xff]
    %v313 = vld [vmem:[#allocation5 + $0x7b8] sm:$0xff]
    %v314 = vld [vmem:[#allocation5 + $0x7c0] sm:$0xff]
    %v315 = vld [vmem:[#allocation5 + $0x7c8] sm:$0xff]
    %v316 = vld [vmem:[#allocation5 + $0x7d0] sm:$0xff]
    %v317 = vld [vmem:[#allocation5 + $0x7d8] sm:$0xff]
    %v318 = vld [vmem:[#allocation5 + $0x7e0] sm:$0xff]
    %v319 = vld [vmem:[#allocation5 + $0x7e8] sm:$0xff]
    %v320 = vld [vmem:[#allocation5 + $0x7f0] sm:$0xff]
    %v321 = vld [vmem:[#allocation5 + $0x7f8] sm:$0xff]
    %v322 = vld [vmem:[#allocation5 + $0x800] sm:$0xff]
    %v323 = vld [vmem:[#allocation5 + $0x808] sm:$0xff]
    %v324 = vld [vmem:[#allocation5 + $0x810] sm:$0xff]
    %v325 = vld [vmem:[#allocation5 + $0x818] sm:$0xff]
    %v326 = vld [vmem:[#allocation5 + $0x820] sm:$0xff]
    %v327 = vld [vmem:[#allocation5 + $0x828] sm:$0xff]
    %v328 = vld [vmem:[#allocation5 + $0x830] sm:$0xff]
    %v329 = vld [vmem:[#allocation5 + $0x838] sm:$0xff]
    %v330 = vld [vmem:[#allocation5 + $0x840] sm:$0xff]
    %v331 = vld [vmem:[#allocation5 + $0x848] sm:$0xff]
    %v332 = vld [vmem:[#allocation5 + $0x850] sm:$0xff]
    %v333 = vld [vmem:[#allocation5 + $0x858] sm:$0xff]
    %v334 = vld [vmem:[#allocation5 + $0x860] sm:$0xff]
    %v335 = vld [vmem:[#allocation5 + $0x868] sm:$0xff]
    %v336 = vld [vmem:[#allocation5 + $0x870] sm:$0xff]
    %v337 = vld [vmem:[#allocation5 + $0x878] sm:$0xff]
    %v338 = vld [vmem:[#allocation5 + $0x880] sm:$0xff]
    %v339 = vld [vmem:[#allocation5 + $0x888] sm:$0xff]
    %v340 = vld [vmem:[#allocation5 + $0x890] sm:$0xff]
    %v341 = vld [vmem:[#allocation5 + $0x898] sm:$0xff]
    %v342 = vld [vmem:[#allocation5 + $0x8a0] sm:$0xff]
    %v343 = vld [vmem:[#allocation5 + $0x8a8] sm:$0xff]
    %v344 = vld [vmem:[#allocation5 + $0x8b0] sm:$0xff]
    %v345 = vld [vmem:[#allocation5 + $0x8b8] sm:$0xff]
    %v346 = vld [vmem:[#allocation5 + $0x8c0] sm:$0xff]
    %v347 = vld [vmem:[#allocation5 + $0x8c8] sm:$0xff]
    %v348 = vld [vmem:[#allocation5 + $0x8d0] sm:$0xff]
    %v349 = vld [vmem:[#allocation5 + $0x8d8] sm:$0xff]
    %v350 = vld [vmem:[#allocation5 + $0x8e0] sm:$0xff]
    %v351 = vld [vmem:[#allocation5 + $0x8e8] sm:$0xff]
    %v352 = vld [vmem:[#allocation5 + $0x8f0] sm:$0xff]
    %v353 = vld [vmem:[#allocation5 + $0x8f8] sm:$0xff]
    %v354 = vld [vmem:[#allocation5 + $0x900] sm:$0xff]
    %v355 = vld [vmem:[#allocation5 + $0x908] sm:$0xff]
    %v356 = vld [vmem:[#allocation5 + $0x910] sm:$0xff]
    %v357 = vld [vmem:[#allocation5 + $0x918] sm:$0xff]
    %v358 = vld [vmem:[#allocation5 + $0x920] sm:$0xff]
    %v359 = vld [vmem:[#allocation5 + $0x928] sm:$0xff]
    %v360 = vld [vmem:[#allocation5 + $0x930] sm:$0xff]
    %v361 = vld [vmem:[#allocation5 + $0x938] sm:$0xff]
    %v362 = vld [vmem:[#allocation5 + $0x940] sm:$0xff]
    %v363 = vld [vmem:[#allocation5 + $0x948] sm:$0xff]
    %v364 = vld [vmem:[#allocation5 + $0x950] sm:$0xff]
    %v365 = vld [vmem:[#allocation5 + $0x958] sm:$0xff]
    %v366 = vld [vmem:[#allocation5 + $0x960] sm:$0xff]
    %v367 = vld [vmem:[#allocation5 + $0x968] sm:$0xff]
    %v368 = vld [vmem:[#allocation5 + $0x970] sm:$0xff]
    %v369 = vld [vmem:[#allocation5 + $0x978] sm:$0xff]
    %v370 = vld [vmem:[#allocation5 + $0x980] sm:$0xff]
    %v371 = vld [vmem:[#allocation5 + $0x988] sm:$0xff]
    %v372 = vld [vmem:[#allocation5 + $0x990] sm:$0xff]
    %v373 = vld [vmem:[#allocation5 + $0x998] sm:$0xff]
    %v374 = vld [vmem:[#allocation5 + $0x9a0] sm:$0xff]
    %v375 = vld [vmem:[#allocation5 + $0x9a8] sm:$0xff]
    %v376 = vld [vmem:[#allocation5 + $0x9b0] sm:$0xff]
    %v377 = vld [vmem:[#allocation5 + $0x9b8] sm:$0xff]
    %v378 = vld [vmem:[#allocation5 + $0x9c0] sm:$0xff]
    %v379 = vld [vmem:[#allocation5 + $0x9c8] sm:$0xff]
    %v380 = vld [vmem:[#allocation5 + $0x9d0] sm:$0xff]
    %v381 = vld [vmem:[#allocation5 + $0x9d8] sm:$0xff]
    %v382 = vld [vmem:[#allocation5 + $0x9e0] sm:$0xff]
    %v383 = vld [vmem:[#allocation5 + $0x9e8] sm:$0xff]
    %v384 = vld [vmem:[#allocation5 + $0x9f0] sm:$0xff]
    %v385 = vld [vmem:[#allocation5 + $0x9f8] sm:$0xff]
    %v386 = vld [vmem:[#allocation5 + $0xa00] sm:$0xff]
    %v387 = vld [vmem:[#allocation5 + $0xa08] sm:$0xff]
    %v388 = vld [vmem:[#allocation5 + $0xa10] sm:$0xff]
    %v389 = vld [vmem:[#allocation5 + $0xa18] sm:$0xff]
    %v390 = vld [vmem:[#allocation5 + $0xa20] sm:$0xff]
    %v391 = vld [vmem:[#allocation5 + $0xa28] sm:$0xff]
    %v392 = vld [vmem:[#allocation5 + $0xa30] sm:$0xff]
    %v393 = vld [vmem:[#allocation5 + $0xa38] sm:$0xff]
    %v394 = vld [vmem:[#allocation5 + $0xa40] sm:$0xff]
    %v395 = vld [vmem:[#allocation5 + $0xa48] sm:$0xff]
    %v396 = vld [vmem:[#allocation5 + $0xa50] sm:$0xff]
    %v397 = vld [vmem:[#allocation5 + $0xa58] sm:$0xff]
    %v398 = vld [vmem:[#allocation5 + $0xa60] sm:$0xff]
    %v399 = vld [vmem:[#allocation5 + $0xa68] sm:$0xff]
    %v400 = vld [vmem:[#allocation5 + $0xa70] sm:$0xff]
    %v401 = vld [vmem:[#allocation5 + $0xa78] sm:$0xff]
    %v402 = vld [vmem:[#allocation5 + $0xa80] sm:$0xff]
    %v403 = vld [vmem:[#allocation5 + $0xa88] sm:$0xff]
    %v404 = vld [vmem:[#allocation5 + $0xa90] sm:$0xff]
    %v405 = vld [vmem:[#allocation5 + $0xa98] sm:$0xff]
    %v406 = vld [vmem:[#allocation5 + $0xaa0] sm:$0xff]
    %v407 = vld [vmem:[#allocation5 + $0xaa8] sm:$0xff]
    %v408 = vld [vmem:[#allocation5 + $0xab0] sm:$0xff]
    %v409 = vld [vmem:[#allocation5 + $0xab8] sm:$0xff]
    %v410 = vld [vmem:[#allocation5 + $0xac0] sm:$0xff]
    %v411 = vld [vmem:[#allocation5 + $0xac8] sm:$0xff]
    %v412 = vld [vmem:[#allocation5 + $0xad0] sm:$0xff]
    %v413 = vld [vmem:[#allocation5 + $0xad8] sm:$0xff]
    %v414 = vld [vmem:[#allocation5 + $0xae0] sm:$0xff]
    %v415 = vld [vmem:[#allocation5 + $0xae8] sm:$0xff]
    %v416 = vld [vmem:[#allocation5 + $0xaf0] sm:$0xff]
    %v417 = vld [vmem:[#allocation5 + $0xaf8] sm:$0xff]
    %v418 = vld [vmem:[#allocation5 + $0xb00] sm:$0xff]
    %v419 = vld [vmem:[#allocation5 + $0xb08] sm:$0xff]
    %v420 = vld [vmem:[#allocation5 + $0xb10] sm:$0xff]
    %v421 = vld [vmem:[#allocation5 + $0xb18] sm:$0xff]
    %v422 = vld [vmem:[#allocation5 + $0xb20] sm:$0xff]
    %v423 = vld [vmem:[#allocation5 + $0xb28] sm:$0xff]
    %v424 = vld [vmem:[#allocation5 + $0xb30] sm:$0xff]
    %v425 = vld [vmem:[#allocation5 + $0xb38] sm:$0xff]
    %v426 = vld [vmem:[#allocation5 + $0xb40] sm:$0xff]
    %v427 = vld [vmem:[#allocation5 + $0xb48] sm:$0xff]
    %v428 = vld [vmem:[#allocation5 + $0xb50] sm:$0xff]
    %v429 = vld [vmem:[#allocation5 + $0xb58] sm:$0xff]
    %v430 = vld [vmem:[#allocation5 + $0xb60] sm:$0xff]
    %v431 = vld [vmem:[#allocation5 + $0xb68] sm:$0xff]
    %v432 = vld [vmem:[#allocation5 + $0xb70] sm:$0xff]
    %v433 = vld [vmem:[#allocation5 + $0xb78] sm:$0xff]
    %v434 = vld [vmem:[#allocation5 + $0xb80] sm:$0xff]
    %v435 = vld [vmem:[#allocation5 + $0xb88] sm:$0xff]
    %v436 = vld [vmem:[#allocation5 + $0xb90] sm:$0xff]
    %v437 = vld [vmem:[#allocation5 + $0xb98] sm:$0xff]
    %v438 = vld [vmem:[#allocation5 + $0xba0] sm:$0xff]
    %v439 = vld [vmem:[#allocation5 + $0xba8] sm:$0xff]
    %v440 = vld [vmem:[#allocation5 + $0xbb0] sm:$0xff]
    %v441 = vld [vmem:[#allocation5 + $0xbb8] sm:$0xff]
    %v442 = vld [vmem:[#allocation5 + $0xbc0] sm:$0xff]
    %v443 = vld [vmem:[#allocation5 + $0xbc8] sm:$0xff]
    %v444 = vld [vmem:[#allocation5 + $0xbd0] sm:$0xff]
    %v445 = vld [vmem:[#allocation5 + $0xbd8] sm:$0xff]
    %v446 = vld [vmem:[#allocation5 + $0xbe0] sm:$0xff]
    %v447 = vld [vmem:[#allocation5 + $0xbe8] sm:$0xff]
    %v448 = vld [vmem:[#allocation5 + $0xbf0] sm:$0xff]
    %v449 = vld [vmem:[#allocation5 + $0xbf8] sm:$0xff]
    %v450 = vld [vmem:[#allocation5 + $0xc00] sm:$0xff]
    %v451 = vld [vmem:[#allocation5 + $0xc08] sm:$0xff]
    %v452 = vld [vmem:[#allocation5 + $0xc10] sm:$0xff]
    %v453 = vld [vmem:[#allocation5 + $0xc18] sm:$0xff]
    %v454 = vld [vmem:[#allocation5 + $0xc20] sm:$0xff]
    %v455 = vld [vmem:[#allocation5 + $0xc28] sm:$0xff]
    %v456 = vld [vmem:[#allocation5 + $0xc30] sm:$0xff]
    %v457 = vld [vmem:[#allocation5 + $0xc38] sm:$0xff]
    %v458 = vld [vmem:[#allocation5 + $0xc40] sm:$0xff]
    %v459 = vld [vmem:[#allocation5 + $0xc48] sm:$0xff]
    %v460 = vld [vmem:[#allocation5 + $0xc50] sm:$0xff]
    %v461 = vld [vmem:[#allocation5 + $0xc58] sm:$0xff]
    %v462 = vld [vmem:[#allocation5 + $0xc60] sm:$0xff]
    %v463 = vld [vmem:[#allocation5 + $0xc68] sm:$0xff]
    %v464 = vld [vmem:[#allocation5 + $0xc70] sm:$0xff]
    %v465 = vld [vmem:[#allocation5 + $0xc78] sm:$0xff]
    %v466 = vld [vmem:[#allocation5 + $0xc80] sm:$0xff]
    %v467 = vld [vmem:[#allocation5 + $0xc88] sm:$0xff]
    %v468 = vld [vmem:[#allocation5 + $0xc90] sm:$0xff]
    %v469 = vld [vmem:[#allocation5 + $0xc98] sm:$0xff]
    %v470 = vld [vmem:[#allocation5 + $0xca0] sm:$0xff]
    %v471 = vld [vmem:[#allocation5 + $0xca8] sm:$0xff]
    %v472 = vld [vmem:[#allocation5 + $0xcb0] sm:$0xff]
    %v473 = vld [vmem:[#allocation5 + $0xcb8] sm:$0xff]
    %v474 = vld [vmem:[#allocation5 + $0xcc0] sm:$0xff]
    %v475 = vld [vmem:[#allocation5 + $0xcc8] sm:$0xff]
    %v476 = vld [vmem:[#allocation5 + $0xcd0] sm:$0xff]
    %v477 = vld [vmem:[#allocation5 + $0xcd8] sm:$0xff]
    %v478 = vld [vmem:[#allocation5 + $0xce0] sm:$0xff]
    %v479 = vld [vmem:[#allocation5 + $0xce8] sm:$0xff]
    %v480 = vld [vmem:[#allocation5 + $0xcf0] sm:$0xff]
    %v481 = vld [vmem:[#allocation5 + $0xcf8] sm:$0xff]
    %v482 = vld [vmem:[#allocation5 + $0xd00] sm:$0xff]
    %v483 = vld [vmem:[#allocation5 + $0xd08] sm:$0xff]
    %v484 = vld [vmem:[#allocation5 + $0xd10] sm:$0xff]
    %v485 = vld [vmem:[#allocation5 + $0xd18] sm:$0xff]
    %v486 = vld [vmem:[#allocation5 + $0xd20] sm:$0xff]
    %v487 = vld [vmem:[#allocation5 + $0xd28] sm:$0xff]
    %v488 = vld [vmem:[#allocation5 + $0xd30] sm:$0xff]
    %v489 = vld [vmem:[#allocation5 + $0xd38] sm:$0xff]
    %v490 = vld [vmem:[#allocation5 + $0xd40] sm:$0xff]
    %v491 = vld [vmem:[#allocation5 + $0xd48] sm:$0xff]
    %v492 = vld [vmem:[#allocation5 + $0xd50] sm:$0xff]
    %v493 = vld [vmem:[#allocation5 + $0xd58] sm:$0xff]
    %v494 = vld [vmem:[#allocation5 + $0xd60] sm:$0xff]
    %v495 = vld [vmem:[#allocation5 + $0xd68] sm:$0xff]
    %v496 = vld [vmem:[#allocation5 + $0xd70] sm:$0xff]
    %v497 = vld [vmem:[#allocation5 + $0xd78] sm:$0xff]
    %v498 = vld [vmem:[#allocation5 + $0xd80] sm:$0xff]
    %v499 = vld [vmem:[#allocation5 + $0xd88] sm:$0xff]
    %v500 = vld [vmem:[#allocation5 + $0xd90] sm:$0xff]
    %v501 = vld [vmem:[#allocation5 + $0xd98] sm:$0xff]
    %v502 = vld [vmem:[#allocation5 + $0xda0] sm:$0xff]
    %v503 = vld [vmem:[#allocation5 + $0xda8] sm:$0xff]
    %v504 = vld [vmem:[#allocation5 + $0xdb0] sm:$0xff]
    %v505 = vld [vmem:[#allocation5 + $0xdb8] sm:$0xff]
    %v506 = vld [vmem:[#allocation5 + $0xdc0] sm:$0xff]
    %v507 = vld [vmem:[#allocation5 + $0xdc8] sm:$0xff]
    %v508 = vld [vmem:[#allocation5 + $0xdd0] sm:$0xff]
    %v509 = vld [vmem:[#allocation5 + $0xdd8] sm:$0xff]
    %v510 = vld [vmem:[#allocation5 + $0xde0] sm:$0xff]
    %v511 = vld [vmem:[#allocation5 + $0xde8] sm:$0xff]
    %v512 = vld [vmem:[#allocation5 + $0xdf0] sm:$0xff]
    %v513 = vld [vmem:[#allocation5 + $0xdf8] sm:$0xff]
    %v514 = vld [vmem:[#allocation5 + $0xe00] sm:$0xff]
    %v515 = vld [vmem:[#allocation5 + $0xe08] sm:$0xff]
    %v516 = vld [vmem:[#allocation5 + $0xe10] sm:$0xff]
    %v517 = vld [vmem:[#allocation5 + $0xe18] sm:$0xff]
    %v518 = vld [vmem:[#allocation5 + $0xe20] sm:$0xff]
    %v519 = vld [vmem:[#allocation5 + $0xe28] sm:$0xff]
    %v520 = vld [vmem:[#allocation5 + $0xe30] sm:$0xff]
    %v521 = vld [vmem:[#allocation5 + $0xe38] sm:$0xff]
    %v522 = vld [vmem:[#allocation5 + $0xe40] sm:$0xff]
    %v523 = vld [vmem:[#allocation5 + $0xe48] sm:$0xff]
    %v524 = vld [vmem:[#allocation5 + $0xe50] sm:$0xff]
    %v525 = vld [vmem:[#allocation5 + $0xe58] sm:$0xff]
    %v526 = vld [vmem:[#allocation5 + $0xe60] sm:$0xff]
    %v527 = vld [vmem:[#allocation5 + $0xe68] sm:$0xff]
    %v528 = vld [vmem:[#allocation5 + $0xe70] sm:$0xff]
    %v529 = vld [vmem:[#allocation5 + $0xe78] sm:$0xff]
    %v530 = vld [vmem:[#allocation5 + $0xe80] sm:$0xff]
    %v531 = vld [vmem:[#allocation5 + $0xe88] sm:$0xff]
    %v532 = vld [vmem:[#allocation5 + $0xe90] sm:$0xff]
    %v533 = vld [vmem:[#allocation5 + $0xe98] sm:$0xff]
    %v534 = vld [vmem:[#allocation5 + $0xea0] sm:$0xff]
    %v535 = vld [vmem:[#allocation5 + $0xea8] sm:$0xff]
    %v536 = vld [vmem:[#allocation5 + $0xeb0] sm:$0xff]
    %v537 = vld [vmem:[#allocation5 + $0xeb8] sm:$0xff]
    %v538 = vld [vmem:[#allocation5 + $0xec0] sm:$0xff]
    %v539 = vld [vmem:[#allocation5 + $0xec8] sm:$0xff]
    %v540 = vld [vmem:[#allocation5 + $0xed0] sm:$0xff]
    %v541 = vld [vmem:[#allocation5 + $0xed8] sm:$0xff]
    %v542 = vld [vmem:[#allocation5 + $0xee0] sm:$0xff]
    %v543 = vld [vmem:[#allocation5 + $0xee8] sm:$0xff]
    %v544 = vld [vmem:[#allocation5 + $0xef0] sm:$0xff]
    %v545 = vld [vmem:[#allocation5 + $0xef8] sm:$0xff]
    %v546 = vld [vmem:[#allocation5 + $0xf00] sm:$0xff]
    %v547 = vld [vmem:[#allocation5 + $0xf08] sm:$0xff]
    %v548 = vld [vmem:[#allocation5 + $0xf10] sm:$0xff]
    %v549 = vld [vmem:[#allocation5 + $0xf18] sm:$0xff]
    %v550 = vld [vmem:[#allocation5 + $0xf20] sm:$0xff]
    %v551 = vld [vmem:[#allocation5 + $0xf28] sm:$0xff]
    %v552 = vld [vmem:[#allocation5 + $0xf30] sm:$0xff]
    %v553 = vld [vmem:[#allocation5 + $0xf38] sm:$0xff]
    %v554 = vld [vmem:[#allocation5 + $0xf40] sm:$0xff]
    %v555 = vld [vmem:[#allocation5 + $0xf48] sm:$0xff]
    %v556 = vld [vmem:[#allocation5 + $0xf50] sm:$0xff]
    %v557 = vld [vmem:[#allocation5 + $0xf58] sm:$0xff]
    %v558 = vld [vmem:[#allocation5 + $0xf60] sm:$0xff]
    %v559 = vld [vmem:[#allocation5 + $0xf68] sm:$0xff]
    %v560 = vld [vmem:[#allocation5 + $0xf70] sm:$0xff]
    %v561 = vld [vmem:[#allocation5 + $0xf78] sm:$0xff]
    %v562 = vld [vmem:[#allocation5 + $0xf80] sm:$0xff]
    %v563 = vld [vmem:[#allocation5 + $0xf88] sm:$0xff]
    %v564 = vld [vmem:[#allocation5 + $0xf90] sm:$0xff]
    %v565 = vld [vmem:[#allocation5 + $0xf98] sm:$0xff]
    %v566 = vld [vmem:[#allocation5 + $0xfa0] sm:$0xff]
    %v567 = vld [vmem:[#allocation5 + $0xfa8] sm:$0xff]
    %v568 = vld [vmem:[#allocation5 + $0xfb0] sm:$0xff]
    %v569 = vld [vmem:[#allocation5 + $0xfb8] sm:$0xff]
    %v570 = vld [vmem:[#allocation5 + $0xfc0] sm:$0xff]
    %v571 = vld [vmem:[#allocation5 + $0xfc8] sm:$0xff]
    %v572 = vld [vmem:[#allocation5 + $0xfd0] sm:$0xff]
    %v573 = vld [vmem:[#allocation5 + $0xfd8] sm:$0xff]
    %v574 = vld [vmem:[#allocation5 + $0xfe0] sm:$0xff]
    %v575 = vld [vmem:[#allocation5 + $0xfe8] sm:$0xff]
    %v576 = vld [vmem:[#allocation5 + $0xff0] sm:$0xff]
    %v577 = vld [vmem:[#allocation5 + $0xff8] sm:$0xff]
    %v578 = vld [vmem:[#allocation5 + $0x1000] sm:$0xff]
    %v579 = vld [vmem:[#allocation5 + $0x1008] sm:$0xff]
    %v580 = vld [vmem:[#allocation5 + $0x1010] sm:$0xff]
    %v581 = vld [vmem:[#allocation5 + $0x1018] sm:$0xff]
    %v582 = vld [vmem:[#allocation5 + $0x1020] sm:$0xff]
    %v583 = vld [vmem:[#allocation5 + $0x1028] sm:$0xff]
    %v584 = vld [vmem:[#allocation5 + $0x1030] sm:$0xff]
    %v585 = vld [vmem:[#allocation5 + $0x1038] sm:$0xff]
    %v586 = vld [vmem:[#allocation5 + $0x1040] sm:$0xff]
    %v587 = vld [vmem:[#allocation5 + $0x1048] sm:$0xff]
    %v588 = vld [vmem:[#allocation5 + $0x1050] sm:$0xff]
    %v589 = vld [vmem:[#allocation5 + $0x1058] sm:$0xff]
    %v590 = vld [vmem:[#allocation5 + $0x1060] sm:$0xff]
    %v591 = vld [vmem:[#allocation5 + $0x1068] sm:$0xff]
    %v592 = vld [vmem:[#allocation5 + $0x1070] sm:$0xff]
    %v593 = vld [vmem:[#allocation5 + $0x1078] sm:$0xff]
    %v594 = vld [vmem:[#allocation5 + $0x1080] sm:$0xff]
    %v595 = vld [vmem:[#allocation5 + $0x1088] sm:$0xff]
    %v596 = vld [vmem:[#allocation5 + $0x1090] sm:$0xff]
    %v597 = vld [vmem:[#allocation5 + $0x1098] sm:$0xff]
    %v598 = vld [vmem:[#allocation5 + $0x10a0] sm:$0xff]
    %v599 = vld [vmem:[#allocation5 + $0x10a8] sm:$0xff]
    %v600 = vld [vmem:[#allocation5 + $0x10b0] sm:$0xff]
    %v601 = vld [vmem:[#allocation5 + $0x10b8] sm:$0xff]
    %v602 = vld [vmem:[#allocation5 + $0x10c0] sm:$0xff]
    %v603 = vld [vmem:[#allocation5 + $0x10c8] sm:$0xff]
    %v604 = vld [vmem:[#allocation5 + $0x10d0] sm:$0xff]
    %v605 = vld [vmem:[#allocation5 + $0x10d8] sm:$0xff]
    %v606 = vld [vmem:[#allocation5 + $0x10e0] sm:$0xff]
    %v607 = vld [vmem:[#allocation5 + $0x10e8] sm:$0xff]
    %v608 = vld [vmem:[#allocation5 + $0x10f0] sm:$0xff]
    %v609 = vld [vmem:[#allocation5 + $0x10f8] sm:$0xff]
    %v610 = vld [vmem:[#allocation5 + $0x1100] sm:$0xff]
    %v611 = vld [vmem:[#allocation5 + $0x1108] sm:$0xff]
    %v612 = vld [vmem:[#allocation5 + $0x1110] sm:$0xff]
    %v613 = vld [vmem:[#allocation5 + $0x1118] sm:$0xff]
    %v614 = vld [vmem:[#allocation5 + $0x1120] sm:$0xff]
    %v615 = vld [vmem:[#allocation5 + $0x1128] sm:$0xff]
    %v616 = vld [vmem:[#allocation5 + $0x1130] sm:$0xff]
    %v617 = vld [vmem:[#allocation5 + $0x1138] sm:$0xff]
    %v618 = vld [vmem:[#allocation5 + $0x1140] sm:$0xff]
    %v619 = vld [vmem:[#allocation5 + $0x1148] sm:$0xff]
    %v620 = vld [vmem:[#allocation5 + $0x1150] sm:$0xff]
    %v621 = vld [vmem:[#allocation5 + $0x1158] sm:$0xff]
    %v622 = vld [vmem:[#allocation5 + $0x1160] sm:$0xff]
    %v623 = vld [vmem:[#allocation5 + $0x1168] sm:$0xff]
    %v624 = vld [vmem:[#allocation5 + $0x1170] sm:$0xff]
    %v625 = vld [vmem:[#allocation5 + $0x1178] sm:$0xff]
    %v626 = vld [vmem:[#allocation5 + $0x1180] sm:$0xff]
    %v627 = vld [vmem:[#allocation5 + $0x1188] sm:$0xff]
    %v628 = vld [vmem:[#allocation5 + $0x1190] sm:$0xff]
    %v629 = vld [vmem:[#allocation5 + $0x1198] sm:$0xff]
    %v630 = vld [vmem:[#allocation5 + $0x11a0] sm:$0xff]
    %v631 = vld [vmem:[#allocation5 + $0x11a8] sm:$0xff]
    %v632 = vld [vmem:[#allocation5 + $0x11b0] sm:$0xff]
    %v633 = vld [vmem:[#allocation5 + $0x11b8] sm:$0xff]
    %v634 = vld [vmem:[#allocation5 + $0x11c0] sm:$0xff]
    %v635 = vld [vmem:[#allocation5 + $0x11c8] sm:$0xff]
    %v636 = vld [vmem:[#allocation5 + $0x11d0] sm:$0xff]
    %v637 = vld [vmem:[#allocation5 + $0x11d8] sm:$0xff]
    %v638 = vld [vmem:[#allocation5 + $0x11e0] sm:$0xff]
    %v639 = vld [vmem:[#allocation5 + $0x11e8] sm:$0xff]
    %v640 = vld [vmem:[#allocation5 + $0x11f0] sm:$0xff]
    %v641 = vld [vmem:[#allocation5 + $0x11f8] sm:$0xff]
    %v642 = vld [vmem:[#allocation7] sm:$0x3f]
    %v644 = vlaneseq
    %v645 = vshrl.u32 %v644, 7
    %v646 = vsub.s32 0, %v645
    %v647 = vrot.slane %v642, %v646
    %v648 = vlaneseq
    %v649 = vshrl.u32 %v648, 7
    %v650 = vsub.s32 1, %v649
    %v651 = vrot.slane %v642, %v650
    %v652 = vlaneseq
    %v653 = vshrl.u32 %v652, 7
    %v654 = vsub.s32 2, %v653
    %v655 = vrot.slane %v642, %v654
    %v656 = vlaneseq
    %v657 = vshrl.u32 %v656, 7
    %v658 = vsub.s32 3, %v657
    %v659 = vrot.slane %v642, %v658
    %v660 = vlaneseq
    %v661 = vshrl.u32 %v660, 7
    %v662 = vsub.s32 4, %v661
    %v663 = vrot.slane %v642, %v662
    %v664 = vlaneseq
    %v665 = vshrl.u32 %v664, 7
    %v666 = vsub.s32 5, %v665
    %v667 = vrot.slane %v642, %v666
    %674 = vmatprep.subr.mxu0 %v67
    %675 = vmatpush1.msra.mxu0 %v66
    %676 = vmatprep.subr.mxu0 %v73
    %677 = vmatpush1.msra.mxu0 %v72
    %678 = vmatprep.subr.mxu0 %v79
    %679 = vmatpush1.msra.mxu0 %v78
    %680 = vmatprep.subr.mxu0 %v85
    %681 = vmatpush1.msra.mxu0 %v84
    %682 = vmatprep.subr.mxu0 %v91
    %683 = vmatpush1.msra.mxu0 %v90
    %684 = vmatprep.subr.mxu0 %v97
    %685 = vmatpush1.msra.mxu0 %v96
    %686 = vmatprep.subr.mxu0 %v103
    %687 = vmatpush1.msra.mxu0 %v102
    %688 = vmatprep.subr.mxu0 %v109
    %689 = vmatpush1.msra.mxu0 %v108
    %690 = vmatprep.subr.mxu0 %v115
    %691 = vmatpush1.msra.mxu0 %v114
    %692 = vmatprep.subr.mxu0 %v121
    %693 = vmatpush1.msra.mxu0 %v120
    %694 = vmatprep.subr.mxu0 %v127
    %695 = vmatpush1.msra.mxu0 %v126
    %696 = vmatprep.subr.mxu0 %v133
    %697 = vmatpush1.msra.mxu0 %v132
    %698 = vmatprep.subr.mxu0 %v139
    %699 = vmatpush1.msra.mxu0 %v138
    %700 = vmatprep.subr.mxu0 %v145
    %701 = vmatpush1.msra.mxu0 %v144
    %702 = vmatprep.subr.mxu0 %v151
    %703 = vmatpush1.msra.mxu0 %v150
    %704 = vmatprep.subr.mxu0 %v157
    %705 = vmatpush1.msra.mxu0 %v156
    %706 = vmatprep.subr.mxu0 %v163
    %707 = vmatpush1.msra.mxu0 %v162
    %708 = vmatprep.subr.mxu0 %v169
    %709 = vmatpush1.msra.mxu0 %v168
    %710 = vmatprep.subr.mxu0 %v175
    %711 = vmatpush1.msra.mxu0 %v174
    %712 = vmatprep.subr.mxu0 %v181
    %713 = vmatpush1.msra.mxu0 %v180
    %714 = vmatprep.subr.mxu0 %v187
    %715 = vmatpush1.msra.mxu0 %v186
    %716 = vmatprep.subr.mxu0 %v193
    %717 = vmatpush1.msra.mxu0 %v192
    %718 = vmatprep.subr.mxu0 %v199
    %719 = vmatpush1.msra.mxu0 %v198
    %720 = vmatprep.subr.mxu0 %v205
    %721 = vmatpush1.msra.mxu0 %v204
    %722 = vmatprep.subr.mxu0 %v211
    %723 = vmatpush1.msra.mxu0 %v210
    %724 = vmatprep.subr.mxu0 %v217
    %725 = vmatpush1.msra.mxu0 %v216
    %726 = vmatprep.subr.mxu0 %v223
    %727 = vmatpush1.msra.mxu0 %v222
    %728 = vmatprep.subr.mxu0 %v229
    %729 = vmatpush1.msra.mxu0 %v228
    %730 = vmatprep.subr.mxu0 %v235
    %731 = vmatpush1.msra.mxu0 %v234
    %732 = vmatprep.subr.mxu0 %v241
    %733 = vmatpush1.msra.mxu0 %v240
    %734 = vmatprep.subr.mxu0 %v247
    %735 = vmatpush1.msra.mxu0 %v246
    %736 = vmatprep.subr.mxu0 %v253
    %737 = vmatpush1.msra.mxu0 %v252
    %738 = vmatprep.mubr.f32.mxu0 %v55
    %739 = vmatmul.mubr.f32.gmra.mrb[0].mxu0 %v54
    %v740 = vpop.f32.mrb[0].mxu0
    %v741 = vadd.f32 %v647, %v740
    %v742 = vpop.f32.mrb[0].mxu0
    %v743 = vadd.f32 %v651, %v742
    %744 = vmatprep.mubr.f32.mxu0 %v61
    %745 = vmatmul.mubr.f32.gmra.mrb[0].mxu0 %v60
    %v746 = vpop.f32.mrb[0].mxu0
    %v747 = vadd.f32 %v647, %v746
    %v748 = vpop.f32.mrb[0].mxu0
    %v749 = vadd.f32 %v651, %v748
    %750 = vdwg.mxu0
    %751 = vmatprep.subr.mxu0 %v259
    %752 = vmatpush1.msra.mxu0 %v258
    %753 = vmatprep.subr.mxu0 %v265
    %754 = vmatpush1.msra.mxu0 %v264
    %755 = vmatprep.subr.mxu0 %v271
    %756 = vmatpush1.msra.mxu0 %v270
    %757 = vmatprep.subr.mxu0 %v277
    %758 = vmatpush1.msra.mxu0 %v276
    %759 = vmatprep.subr.mxu0 %v283
    %760 = vmatpush1.msra.mxu0 %v282
    %761 = vmatprep.subr.mxu0 %v289
    %762 = vmatpush1.msra.mxu0 %v288
    %763 = vmatprep.subr.mxu0 %v295
    %764 = vmatpush1.msra.mxu0 %v294
    %765 = vmatprep.subr.mxu0 %v301
    %766 = vmatpush1.msra.mxu0 %v300
    %767 = vmatprep.subr.mxu0 %v307
    %768 = vmatpush1.msra.mxu0 %v306
    %769 = vmatprep.subr.mxu0 %v313
    %770 = vmatpush1.msra.mxu0 %v312
    %771 = vmatprep.subr.mxu0 %v319
    %772 = vmatpush1.msra.mxu0 %v318
    %773 = vmatprep.subr.mxu0 %v325
    %774 = vmatpush1.msra.mxu0 %v324
    %775 = vmatprep.subr.mxu0 %v331
    %776 = vmatpush1.msra.mxu0 %v330
    %777 = vmatprep.subr.mxu0 %v337
    %778 = vmatpush1.msra.mxu0 %v336
    %779 = vmatprep.subr.mxu0 %v343
    %780 = vmatpush1.msra.mxu0 %v342
    %781 = vmatprep.subr.mxu0 %v349
    %782 = vmatpush1.msra.mxu0 %v348
    %783 = vmatprep.subr.mxu0 %v355
    %784 = vmatpush1.msra.mxu0 %v354
    %785 = vmatprep.subr.mxu0 %v361
    %786 = vmatpush1.msra.mxu0 %v360
    %787 = vmatprep.subr.mxu0 %v367
    %788 = vmatpush1.msra.mxu0 %v366
    %789 = vmatprep.subr.mxu0 %v373
    %790 = vmatpush1.msra.mxu0 %v372
    %791 = vmatprep.subr.mxu0 %v379
    %792 = vmatpush1.msra.mxu0 %v378
    %793 = vmatprep.subr.mxu0 %v385
    %794 = vmatpush1.msra.mxu0 %v384
    %795 = vmatprep.subr.mxu0 %v391
    %796 = vmatpush1.msra.mxu0 %v390
    %797 = vmatprep.subr.mxu0 %v397
    %798 = vmatpush1.msra.mxu0 %v396
    %799 = vmatprep.subr.mxu0 %v403
    %800 = vmatpush1.msra.mxu0 %v402
    %801 = vmatprep.subr.mxu0 %v409
    %802 = vmatpush1.msra.mxu0 %v408
    %803 = vmatprep.subr.mxu0 %v415
    %804 = vmatpush1.msra.mxu0 %v414
    %805 = vmatprep.subr.mxu0 %v421
    %806 = vmatpush1.msra.mxu0 %v420
    %807 = vmatprep.subr.mxu0 %v427
    %808 = vmatpush1.msra.mxu0 %v426
    %809 = vmatprep.subr.mxu0 %v433
    %810 = vmatpush1.msra.mxu0 %v432
    %811 = vmatprep.subr.mxu0 %v439
    %812 = vmatpush1.msra.mxu0 %v438
    %813 = vmatprep.subr.mxu0 %v445
    %814 = vmatpush1.msra.mxu0 %v444
    %815 = vmatprep.mubr.f32.mxu0 %v57
    %816 = vmatmul.mubr.f32.gmra.mrb[0].mxu0 %v56
    %v817 = vpop.f32.mrb[0].mxu0
    %v818 = vadd.f32 %v741, %v817
    %v819 = vpop.f32.mrb[0].mxu0
    %v820 = vadd.f32 %v743, %v819
    %821 = vmatprep.mubr.f32.mxu0 %v63
    %822 = vmatmul.mubr.f32.gmra.mrb[0].mxu0 %v62
    %v823 = vpop.f32.mrb[0].mxu0
    %v824 = vadd.f32 %v747, %v823
    %v825 = vpop.f32.mrb[0].mxu0
    %v826 = vadd.f32 %v749, %v825
    %827 = vdwg.mxu0
    %828 = vmatprep.subr.mxu0 %v451
    %829 = vmatpush1.msra.mxu0 %v450
    %830 = vmatprep.subr.mxu0 %v457
    %831 = vmatpush1.msra.mxu0 %v456
    %832 = vmatprep.subr.mxu0 %v463
    %833 = vmatpush1.msra.mxu0 %v462
    %834 = vmatprep.subr.mxu0 %v469
    %835 = vmatpush1.msra.mxu0 %v468
    %836 = vmatprep.subr.mxu0 %v475
    %837 = vmatpush1.msra.mxu0 %v474
    %838 = vmatprep.subr.mxu0 %v481
    %839 = vmatpush1.msra.mxu0 %v480
    %840 = vmatprep.subr.mxu0 %v487
    %841 = vmatpush1.msra.mxu0 %v486
    %842 = vmatprep.subr.mxu0 %v493
    %843 = vmatpush1.msra.mxu0 %v492
    %844 = vmatprep.subr.mxu0 %v499
    %845 = vmatpush1.msra.mxu0 %v498
    %846 = vmatprep.subr.mxu0 %v505
    %847 = vmatpush1.msra.mxu0 %v504
    %848 = vmatprep.subr.mxu0 %v511
    %849 = vmatpush1.msra.mxu0 %v510
    %850 = vmatprep.subr.mxu0 %v517
    %851 = vmatpush1.msra.mxu0 %v516
    %852 = vmatprep.subr.mxu0 %v523
    %853 = vmatpush1.msra.mxu0 %v522
    %854 = vmatprep.subr.mxu0 %v529
    %855 = vmatpush1.msra.mxu0 %v528
    %856 = vmatprep.subr.mxu0 %v535
    %857 = vmatpush1.msra.mxu0 %v534
    %858 = vmatprep.subr.mxu0 %v541
    %859 = vmatpush1.msra.mxu0 %v540
    %860 = vmatprep.subr.mxu0 %v547
    %861 = vmatpush1.msra.mxu0 %v546
    %862 = vmatprep.subr.mxu0 %v553
    %863 = vmatpush1.msra.mxu0 %v552
    %864 = vmatprep.subr.mxu0 %v559
    %865 = vmatpush1.msra.mxu0 %v558
    %866 = vmatprep.subr.mxu0 %v565
    %867 = vmatpush1.msra.mxu0 %v564
    %868 = vmatprep.subr.mxu0 %v571
    %869 = vmatpush1.msra.mxu0 %v570
    %870 = vmatprep.subr.mxu0 %v577
    %871 = vmatpush1.msra.mxu0 %v576
    %872 = vmatprep.subr.mxu0 %v583
    %873 = vmatpush1.msra.mxu0 %v582
    %874 = vmatprep.subr.mxu0 %v589
    %875 = vmatpush1.msra.mxu0 %v588
    %876 = vmatprep.subr.mxu0 %v595
    %877 = vmatpush1.msra.mxu0 %v594
    %878 = vmatprep.subr.mxu0 %v601
    %879 = vmatpush1.msra.mxu0 %v600
    %880 = vmatprep.subr.mxu0 %v607
    %881 = vmatpush1.msra.mxu0 %v606
    %882 = vmatprep.subr.mxu0 %v613
    %883 = vmatpush1.msra.mxu0 %v612
    %884 = vmatprep.subr.mxu0 %v619
    %885 = vmatpush1.msra.mxu0 %v618
    %886 = vmatprep.subr.mxu0 %v625
    %887 = vmatpush1.msra.mxu0 %v624
    %888 = vmatprep.subr.mxu0 %v631
    %889 = vmatpush1.msra.mxu0 %v630
    %890 = vmatprep.subr.mxu0 %v637
    %891 = vmatpush1.msra.mxu0 %v636
    %892 = vmatprep.mubr.f32.mxu0 %v59
    %893 = vmatmul.mubr.f32.gmra.mrb[0].mxu0 %v58
    %v894 = vpop.f32.mrb[0].mxu0
    %v895 = vadd.f32 %v818, %v894
    %v896 = vpop.f32.mrb[0].mxu0
    %v897 = vadd.f32 %v820, %v896
    %898 = vmatprep.mubr.f32.mxu0 %v65
    %899 = vmatmul.mubr.f32.gmra.mrb[0].mxu0 %v64
    %v900 = vpop.f32.mrb[0].mxu0
    %v901 = vadd.f32 %v824, %v900
    %v902 = vpop.f32.mrb[0].mxu0
    %v903 = vadd.f32 %v826, %v902
    %904 = vdwg.mxu0
    %905 = vmatprep.subr.mxu0 %v69
    %906 = vmatpush1.msra.mxu0 %v68
    %907 = vmatprep.subr.mxu0 %v75
    %908 = vmatpush1.msra.mxu0 %v74
    %909 = vmatprep.subr.mxu0 %v81
    %910 = vmatpush1.msra.mxu0 %v80
    %911 = vmatprep.subr.mxu0 %v87
    %912 = vmatpush1.msra.mxu0 %v86
    %913 = vmatprep.subr.mxu0 %v93
    %914 = vmatpush1.msra.mxu0 %v92
    %915 = vmatprep.subr.mxu0 %v99
    %916 = vmatpush1.msra.mxu0 %v98
    %917 = vmatprep.subr.mxu0 %v105
    %918 = vmatpush1.msra.mxu0 %v104
    %919 = vmatprep.subr.mxu0 %v111
    %920 = vmatpush1.msra.mxu0 %v110
    %921 = vmatprep.subr.mxu0 %v117
    %922 = vmatpush1.msra.mxu0 %v116
    %923 = vmatprep.subr.mxu0 %v123
    %924 = vmatpush1.msra.mxu0 %v122
    %925 = vmatprep.subr.mxu0 %v129
    %926 = vmatpush1.msra.mxu0 %v128
    %927 = vmatprep.subr.mxu0 %v135
    %928 = vmatpush1.msra.mxu0 %v134
    %929 = vmatprep.subr.mxu0 %v141
    %930 = vmatpush1.msra.mxu0 %v140
    %931 = vmatprep.subr.mxu0 %v147
    %932 = vmatpush1.msra.mxu0 %v146
    %933 = vmatprep.subr.mxu0 %v153
    %934 = vmatpush1.msra.mxu0 %v152
    %935 = vmatprep.subr.mxu0 %v159
    %936 = vmatpush1.msra.mxu0 %v158
    %937 = vmatprep.subr.mxu0 %v165
    %938 = vmatpush1.msra.mxu0 %v164
    %939 = vmatprep.subr.mxu0 %v171
    %940 = vmatpush1.msra.mxu0 %v170
    %941 = vmatprep.subr.mxu0 %v177
    %942 = vmatpush1.msra.mxu0 %v176
    %943 = vmatprep.subr.mxu0 %v183
    %944 = vmatpush1.msra.mxu0 %v182
    %945 = vmatprep.subr.mxu0 %v189
    %946 = vmatpush1.msra.mxu0 %v188
    %947 = vmatprep.subr.mxu0 %v195
    %948 = vmatpush1.msra.mxu0 %v194
    %949 = vmatprep.subr.mxu0 %v201
    %950 = vmatpush1.msra.mxu0 %v200
    %951 = vmatprep.subr.mxu0 %v207
    %952 = vmatpush1.msra.mxu0 %v206
    %953 = vmatprep.subr.mxu0 %v213
    %954 = vmatpush1.msra.mxu0 %v212
    %955 = vmatprep.subr.mxu0 %v219
    %956 = vmatpush1.msra.mxu0 %v218
    %957 = vmatprep.subr.mxu0 %v225
    %958 = vmatpush1.msra.mxu0 %v224
    %959 = vmatprep.subr.mxu0 %v231
    %960 = vmatpush1.msra.mxu0 %v230
    %961 = vmatprep.subr.mxu0 %v237
    %962 = vmatpush1.msra.mxu0 %v236
    %963 = vmatprep.subr.mxu0 %v243
    %964 = vmatpush1.msra.mxu0 %v242
    %965 = vmatprep.subr.mxu0 %v249
    %966 = vmatpush1.msra.mxu0 %v248
    %967 = vmatprep.subr.mxu0 %v255
    %968 = vmatpush1.msra.mxu0 %v254
    %969 = vmatprep.mubr.f32.mxu0 %v55
    %970 = vmatmul.mubr.f32.gmra.mrb[0].mxu0 %v54
    %v971 = vpop.f32.mrb[0].mxu0
    %v972 = vadd.f32 %v655, %v971
    %v973 = vpop.f32.mrb[0].mxu0
    %v974 = vadd.f32 %v659, %v973
    %975 = vmatprep.mubr.f32.mxu0 %v61
    %976 = vmatmul.mubr.f32.gmra.mrb[0].mxu0 %v60
    %v977 = vpop.f32.mrb[0].mxu0
    %v978 = vadd.f32 %v655, %v977
    %v979 = vpop.f32.mrb[0].mxu0
    %v980 = vadd.f32 %v659, %v979
    %981 = vdwg.mxu0
    %982 = vmatprep.subr.mxu0 %v261
    %983 = vmatpush1.msra.mxu0 %v260
    %984 = vmatprep.subr.mxu0 %v267
    %985 = vmatpush1.msra.mxu0 %v266
    %986 = vmatprep.subr.mxu0 %v273
    %987 = vmatpush1.msra.mxu0 %v272
    %988 = vmatprep.subr.mxu0 %v279
    %989 = vmatpush1.msra.mxu0 %v278
    %990 = vmatprep.subr.mxu0 %v285
    %991 = vmatpush1.msra.mxu0 %v284
    %992 = vmatprep.subr.mxu0 %v291
    %993 = vmatpush1.msra.mxu0 %v290
    %994 = vmatprep.subr.mxu0 %v297
    %995 = vmatpush1.msra.mxu0 %v296
    %996 = vmatprep.subr.mxu0 %v303
    %997 = vmatpush1.msra.mxu0 %v302
    %998 = vmatprep.subr.mxu0 %v309
    %999 = vmatpush1.msra.mxu0 %v308
    %1000 = vmatprep.subr.mxu0 %v315
    %1001 = vmatpush1.msra.mxu0 %v314
    %1002 = vmatprep.subr.mxu0 %v321
    %1003 = vmatpush1.msra.mxu0 %v320
    %1004 = vmatprep.subr.mxu0 %v327
    %1005 = vmatpush1.msra.mxu0 %v326
    %1006 = vmatprep.subr.mxu0 %v333
    %1007 = vmatpush1.msra.mxu0 %v332
    %1008 = vmatprep.subr.mxu0 %v339
    %1009 = vmatpush1.msra.mxu0 %v338
    %1010 = vmatprep.subr.mxu0 %v345
    %1011 = vmatpush1.msra.mxu0 %v344
    %1012 = vmatprep.subr.mxu0 %v351
    %1013 = vmatpush1.msra.mxu0 %v350
    %1014 = vmatprep.subr.mxu0 %v357
    %1015 = vmatpush1.msra.mxu0 %v356
    %1016 = vmatprep.subr.mxu0 %v363
    %1017 = vmatpush1.msra.mxu0 %v362
    %1018 = vmatprep.subr.mxu0 %v369
    %1019 = vmatpush1.msra.mxu0 %v368
    %1020 = vmatprep.subr.mxu0 %v375
    %1021 = vmatpush1.msra.mxu0 %v374
    %1022 = vmatprep.subr.mxu0 %v381
    %1023 = vmatpush1.msra.mxu0 %v380
    %1024 = vmatprep.subr.mxu0 %v387
    %1025 = vmatpush1.msra.mxu0 %v386
    %1026 = vmatprep.subr.mxu0 %v393
    %1027 = vmatpush1.msra.mxu0 %v392
    %1028 = vmatprep.subr.mxu0 %v399
    %1029 = vmatpush1.msra.mxu0 %v398
    %1030 = vmatprep.subr.mxu0 %v405
    %1031 = vmatpush1.msra.mxu0 %v404
    %1032 = vmatprep.subr.mxu0 %v411
    %1033 = vmatpush1.msra.mxu0 %v410
    %1034 = vmatprep.subr.mxu0 %v417
    %1035 = vmatpush1.msra.mxu0 %v416
    %1036 = vmatprep.subr.mxu0 %v423
    %1037 = vmatpush1.msra.mxu0 %v422
    %1038 = vmatprep.subr.mxu0 %v429
    %1039 = vmatpush1.msra.mxu0 %v428
    %1040 = vmatprep.subr.mxu0 %v435
    %1041 = vmatpush1.msra.mxu0 %v434
    %1042 = vmatprep.subr.mxu0 %v441
    %1043 = vmatpush1.msra.mxu0 %v440
    %1044 = vmatprep.subr.mxu0 %v447
    %1045 = vmatpush1.msra.mxu0 %v446
    %1046 = vmatprep.mubr.f32.mxu0 %v57
    %1047 = vmatmul.mubr.f32.gmra.mrb[0].mxu0 %v56
    %v1048 = vpop.f32.mrb[0].mxu0
    %v1049 = vadd.f32 %v972, %v1048
    %v1050 = vpop.f32.mrb[0].mxu0
    %v1051 = vadd.f32 %v974, %v1050
    %1052 = vmatprep.mubr.f32.mxu0 %v63
    %1053 = vmatmul.mubr.f32.gmra.mrb[0].mxu0 %v62
    %v1054 = vpop.f32.mrb[0].mxu0
    %v1055 = vadd.f32 %v978, %v1054
    %v1056 = vpop.f32.mrb[0].mxu0
    %v1057 = vadd.f32 %v980, %v1056
    %1058 = vdwg.mxu0
    %1059 = vmatprep.subr.mxu0 %v453
    %1060 = vmatpush1.msra.mxu0 %v452
    %1061 = vmatprep.subr.mxu0 %v459
    %1062 = vmatpush1.msra.mxu0 %v458
    %1063 = vmatprep.subr.mxu0 %v465
    %1064 = vmatpush1.msra.mxu0 %v464
    %1065 = vmatprep.subr.mxu0 %v471
    %1066 = vmatpush1.msra.mxu0 %v470
    %1067 = vmatprep.subr.mxu0 %v477
    %1068 = vmatpush1.msra.mxu0 %v476
    %1069 = vmatprep.subr.mxu0 %v483
    %1070 = vmatpush1.msra.mxu0 %v482
    %1071 = vmatprep.subr.mxu0 %v489
    %1072 = vmatpush1.msra.mxu0 %v488
    %1073 = vmatprep.subr.mxu0 %v495
    %1074 = vmatpush1.msra.mxu0 %v494
    %1075 = vmatprep.subr.mxu0 %v501
    %1076 = vmatpush1.msra.mxu0 %v500
    %1077 = vmatprep.subr.mxu0 %v507
    %1078 = vmatpush1.msra.mxu0 %v506
    %1079 = vmatprep.subr.mxu0 %v513
    %1080 = vmatpush1.msra.mxu0 %v512
    %1081 = vmatprep.subr.mxu0 %v519
    %1082 = vmatpush1.msra.mxu0 %v518
    %1083 = vmatprep.subr.mxu0 %v525
    %1084 = vmatpush1.msra.mxu0 %v524
    %1085 = vmatprep.subr.mxu0 %v531
    %1086 = vmatpush1.msra.mxu0 %v530
    %1087 = vmatprep.subr.mxu0 %v537
    %1088 = vmatpush1.msra.mxu0 %v536
    %1089 = vmatprep.subr.mxu0 %v543
    %1090 = vmatpush1.msra.mxu0 %v542
    %1091 = vmatprep.subr.mxu0 %v549
    %1092 = vmatpush1.msra.mxu0 %v548
    %1093 = vmatprep.subr.mxu0 %v555
    %1094 = vmatpush1.msra.mxu0 %v554
    %1095 = vmatprep.subr.mxu0 %v561
    %1096 = vmatpush1.msra.mxu0 %v560
    %1097 = vmatprep.subr.mxu0 %v567
    %1098 = vmatpush1.msra.mxu0 %v566
    %1099 = vmatprep.subr.mxu0 %v573
    %1100 = vmatpush1.msra.mxu0 %v572
    %1101 = vmatprep.subr.mxu0 %v579
    %1102 = vmatpush1.msra.mxu0 %v578
    %1103 = vmatprep.subr.mxu0 %v585
    %1104 = vmatpush1.msra.mxu0 %v584
    %1105 = vmatprep.subr.mxu0 %v591
    %1106 = vmatpush1.msra.mxu0 %v590
    %1107 = vmatprep.subr.mxu0 %v597
    %1108 = vmatpush1.msra.mxu0 %v596
    %1109 = vmatprep.subr.mxu0 %v603
    %1110 = vmatpush1.msra.mxu0 %v602
    %1111 = vmatprep.subr.mxu0 %v609
    %1112 = vmatpush1.msra.mxu0 %v608
    %1113 = vmatprep.subr.mxu0 %v615
    %1114 = vmatpush1.msra.mxu0 %v614
    %1115 = vmatprep.subr.mxu0 %v621
    %1116 = vmatpush1.msra.mxu0 %v620
    %1117 = vmatprep.subr.mxu0 %v627
    %1118 = vmatpush1.msra.mxu0 %v626
    %1119 = vmatprep.subr.mxu0 %v633
    %1120 = vmatpush1.msra.mxu0 %v632
    %1121 = vmatprep.subr.mxu0 %v639
    %1122 = vmatpush1.msra.mxu0 %v638
    %1123 = vmatprep.mubr.f32.mxu0 %v59
    %1124 = vmatmul.mubr.f32.gmra.mrb[0].mxu0 %v58
    %v1125 = vpop.f32.mrb[0].mxu0
    %v1126 = vadd.f32 %v1049, %v1125
    %v1127 = vpop.f32.mrb[0].mxu0
    %v1128 = vadd.f32 %v1051, %v1127
    %1129 = vmatprep.mubr.f32.mxu0 %v65
    %1130 = vmatmul.mubr.f32.gmra.mrb[0].mxu0 %v64
    %v1131 = vpop.f32.mrb[0].mxu0
    %v1132 = vadd.f32 %v1055, %v1131
    %v1133 = vpop.f32.mrb[0].mxu0
    %v1134 = vadd.f32 %v1057, %v1133
    %1135 = vdwg.mxu0
    %1136 = vmatprep.subr.mxu0 %v71
    %1137 = vmatpush1.msra.mxu0 %v70
    %1138 = vmatprep.subr.mxu0 %v77
    %1139 = vmatpush1.msra.mxu0 %v76
    %1140 = vmatprep.subr.mxu0 %v83
    %1141 = vmatpush1.msra.mxu0 %v82
    %1142 = vmatprep.subr.mxu0 %v89
    %1143 = vmatpush1.msra.mxu0 %v88
    %1144 = vmatprep.subr.mxu0 %v95
    %1145 = vmatpush1.msra.mxu0 %v94
    %1146 = vmatprep.subr.mxu0 %v101
    %1147 = vmatpush1.msra.mxu0 %v100
    %1148 = vmatprep.subr.mxu0 %v107
    %1149 = vmatpush1.msra.mxu0 %v106
    %1150 = vmatprep.subr.mxu0 %v113
    %1151 = vmatpush1.msra.mxu0 %v112
    %1152 = vmatprep.subr.mxu0 %v119
    %1153 = vmatpush1.msra.mxu0 %v118
    %1154 = vmatprep.subr.mxu0 %v125
    %1155 = vmatpush1.msra.mxu0 %v124
    %1156 = vmatprep.subr.mxu0 %v131
    %1157 = vmatpush1.msra.mxu0 %v130
    %1158 = vmatprep.subr.mxu0 %v137
    %1159 = vmatpush1.msra.mxu0 %v136
    %1160 = vmatprep.subr.mxu0 %v143
    %1161 = vmatpush1.msra.mxu0 %v142
    %1162 = vmatprep.subr.mxu0 %v149
    %1163 = vmatpush1.msra.mxu0 %v148
    %1164 = vmatprep.subr.mxu0 %v155
    %1165 = vmatpush1.msra.mxu0 %v154
    %1166 = vmatprep.subr.mxu0 %v161
    %1167 = vmatpush1.msra.mxu0 %v160
    %1168 = vmatprep.subr.mxu0 %v167
    %1169 = vmatpush1.msra.mxu0 %v166
    %1170 = vmatprep.subr.mxu0 %v173
    %1171 = vmatpush1.msra.mxu0 %v172
    %1172 = vmatprep.subr.mxu0 %v179
    %1173 = vmatpush1.msra.mxu0 %v178
    %1174 = vmatprep.subr.mxu0 %v185
    %1175 = vmatpush1.msra.mxu0 %v184
    %1176 = vmatprep.subr.mxu0 %v191
    %1177 = vmatpush1.msra.mxu0 %v190
    %1178 = vmatprep.subr.mxu0 %v197
    %1179 = vmatpush1.msra.mxu0 %v196
    %1180 = vmatprep.subr.mxu0 %v203
    %1181 = vmatpush1.msra.mxu0 %v202
    %1182 = vmatprep.subr.mxu0 %v209
    %1183 = vmatpush1.msra.mxu0 %v208
    %1184 = vmatprep.subr.mxu0 %v215
    %1185 = vmatpush1.msra.mxu0 %v214
    %1186 = vmatprep.subr.mxu0 %v221
    %1187 = vmatpush1.msra.mxu0 %v220
    %1188 = vmatprep.subr.mxu0 %v227
    %1189 = vmatpush1.msra.mxu0 %v226
    %1190 = vmatprep.subr.mxu0 %v233
    %1191 = vmatpush1.msra.mxu0 %v232
    %1192 = vmatprep.subr.mxu0 %v239
    %1193 = vmatpush1.msra.mxu0 %v238
    %1194 = vmatprep.subr.mxu0 %v245
    %1195 = vmatpush1.msra.mxu0 %v244
    %1196 = vmatprep.subr.mxu0 %v251
    %1197 = vmatpush1.msra.mxu0 %v250
    %1198 = vmatprep.subr.mxu0 %v257
    %1199 = vmatpush1.msra.mxu0 %v256
    %1200 = vmatprep.mubr.f32.mxu0 %v55
    %1201 = vmatmul.mubr.f32.gmra.mrb[0].mxu0 %v54
    %v1202 = vpop.f32.mrb[0].mxu0
    %v1203 = vadd.f32 %v663, %v1202
    %v1204 = vpop.f32.mrb[0].mxu0
    %v1205 = vadd.f32 %v667, %v1204
    %1206 = vmatprep.mubr.f32.mxu0 %v61
    %1207 = vmatmul.mubr.f32.gmra.mrb[0].mxu0 %v60
    %v1208 = vpop.f32.mrb[0].mxu0
    %v1209 = vadd.f32 %v663, %v1208
    %v1210 = vpop.f32.mrb[0].mxu0
    %v1211 = vadd.f32 %v667, %v1210
    %1212 = vdwg.mxu0
    %1213 = vmatprep.subr.mxu0 %v263
    %1214 = vmatpush1.msra.mxu0 %v262
    %1215 = vmatprep.subr.mxu0 %v269
    %1216 = vmatpush1.msra.mxu0 %v268
    %1217 = vmatprep.subr.mxu0 %v275
    %1218 = vmatpush1.msra.mxu0 %v274
    %1219 = vmatprep.subr.mxu0 %v281
    %1220 = vmatpush1.msra.mxu0 %v280
    %1221 = vmatprep.subr.mxu0 %v287
    %1222 = vmatpush1.msra.mxu0 %v286
    %1223 = vmatprep.subr.mxu0 %v293
    %1224 = vmatpush1.msra.mxu0 %v292
    %1225 = vmatprep.subr.mxu0 %v299
    %1226 = vmatpush1.msra.mxu0 %v298
    %1227 = vmatprep.subr.mxu0 %v305
    %1228 = vmatpush1.msra.mxu0 %v304
    %1229 = vmatprep.subr.mxu0 %v311
    %1230 = vmatpush1.msra.mxu0 %v310
    %1231 = vmatprep.subr.mxu0 %v317
    %1232 = vmatpush1.msra.mxu0 %v316
    %1233 = vmatprep.subr.mxu0 %v323
    %1234 = vmatpush1.msra.mxu0 %v322
    %1235 = vmatprep.subr.mxu0 %v329
    %1236 = vmatpush1.msra.mxu0 %v328
    %1237 = vmatprep.subr.mxu0 %v335
    %1238 = vmatpush1.msra.mxu0 %v334
    %1239 = vmatprep.subr.mxu0 %v341
    %1240 = vmatpush1.msra.mxu0 %v340
    %1241 = vmatprep.subr.mxu0 %v347
    %1242 = vmatpush1.msra.mxu0 %v346
    %1243 = vmatprep.subr.mxu0 %v353
    %1244 = vmatpush1.msra.mxu0 %v352
    %1245 = vmatprep.subr.mxu0 %v359
    %1246 = vmatpush1.msra.mxu0 %v358
    %1247 = vmatprep.subr.mxu0 %v365
    %1248 = vmatpush1.msra.mxu0 %v364
    %1249 = vmatprep.subr.mxu0 %v371
    %1250 = vmatpush1.msra.mxu0 %v370
    %1251 = vmatprep.subr.mxu0 %v377
    %1252 = vmatpush1.msra.mxu0 %v376
    %1253 = vmatprep.subr.mxu0 %v383
    %1254 = vmatpush1.msra.mxu0 %v382
    %1255 = vmatprep.subr.mxu0 %v389
    %1256 = vmatpush1.msra.mxu0 %v388
    %1257 = vmatprep.subr.mxu0 %v395
    %1258 = vmatpush1.msra.mxu0 %v394
    %1259 = vmatprep.subr.mxu0 %v401
    %1260 = vmatpush1.msra.mxu0 %v400
    %1261 = vmatprep.subr.mxu0 %v407
    %1262 = vmatpush1.msra.mxu0 %v406
    %1263 = vmatprep.subr.mxu0 %v413
    %1264 = vmatpush1.msra.mxu0 %v412
    %1265 = vmatprep.subr.mxu0 %v419
    %1266 = vmatpush1.msra.mxu0 %v418
    %1267 = vmatprep.subr.mxu0 %v425
    %1268 = vmatpush1.msra.mxu0 %v424
    %1269 = vmatprep.subr.mxu0 %v431
    %1270 = vmatpush1.msra.mxu0 %v430
    %1271 = vmatprep.subr.mxu0 %v437
    %1272 = vmatpush1.msra.mxu0 %v436
    %1273 = vmatprep.subr.mxu0 %v443
    %1274 = vmatpush1.msra.mxu0 %v442
    %1275 = vmatprep.subr.mxu0 %v449
    %1276 = vmatpush1.msra.mxu0 %v448
    %1277 = vmatprep.mubr.f32.mxu0 %v57
    %1278 = vmatmul.mubr.f32.gmra.mrb[0].mxu0 %v56
    %v1279 = vpop.f32.mrb[0].mxu0
    %v1280 = vadd.f32 %v1203, %v1279
    %v1281 = vpop.f32.mrb[0].mxu0
    %v1282 = vadd.f32 %v1205, %v1281
    %1283 = vmatprep.mubr.f32.mxu0 %v63
    %1284 = vmatmul.mubr.f32.gmra.mrb[0].mxu0 %v62
    %v1285 = vpop.f32.mrb[0].mxu0
    %v1286 = vadd.f32 %v1209, %v1285
    %v1287 = vpop.f32.mrb[0].mxu0
    %v1288 = vadd.f32 %v1211, %v1287
    %1289 = vdwg.mxu0
    %1290 = vmatprep.subr.mxu0 %v455
    %1291 = vmatpush1.msra.mxu0 %v454
    %1292 = vmatprep.subr.mxu0 %v461
    %1293 = vmatpush1.msra.mxu0 %v460
    %1294 = vmatprep.subr.mxu0 %v467
    %1295 = vmatpush1.msra.mxu0 %v466
    %1296 = vmatprep.subr.mxu0 %v473
    %1297 = vmatpush1.msra.mxu0 %v472
    %1298 = vmatprep.subr.mxu0 %v479
    %1299 = vmatpush1.msra.mxu0 %v478
    %1300 = vmatprep.subr.mxu0 %v485
    %1301 = vmatpush1.msra.mxu0 %v484
    %1302 = vmatprep.subr.mxu0 %v491
    %1303 = vmatpush1.msra.mxu0 %v490
    %1304 = vmatprep.subr.mxu0 %v497
    %1305 = vmatpush1.msra.mxu0 %v496
    %1306 = vmatprep.subr.mxu0 %v503
    %1307 = vmatpush1.msra.mxu0 %v502
    %1308 = vmatprep.subr.mxu0 %v509
    %1309 = vmatpush1.msra.mxu0 %v508
    %1310 = vmatprep.subr.mxu0 %v515
    %1311 = vmatpush1.msra.mxu0 %v514
    %1312 = vmatprep.subr.mxu0 %v521
    %1313 = vmatpush1.msra.mxu0 %v520
    %1314 = vmatprep.subr.mxu0 %v527
    %1315 = vmatpush1.msra.mxu0 %v526
    %1316 = vmatprep.subr.mxu0 %v533
    %1317 = vmatpush1.msra.mxu0 %v532
    %1318 = vmatprep.subr.mxu0 %v539
    %1319 = vmatpush1.msra.mxu0 %v538
    %1320 = vmatprep.subr.mxu0 %v545
    %1321 = vmatpush1.msra.mxu0 %v544
    %1322 = vmatprep.subr.mxu0 %v551
    %1323 = vmatpush1.msra.mxu0 %v550
    %1324 = vmatprep.subr.mxu0 %v557
    %1325 = vmatpush1.msra.mxu0 %v556
    %1326 = vmatprep.subr.mxu0 %v563
    %1327 = vmatpush1.msra.mxu0 %v562
    %1328 = vmatprep.subr.mxu0 %v569
    %1329 = vmatpush1.msra.mxu0 %v568
    %1330 = vmatprep.subr.mxu0 %v575
    %1331 = vmatpush1.msra.mxu0 %v574
    %1332 = vmatprep.subr.mxu0 %v581
    %1333 = vmatpush1.msra.mxu0 %v580
    %1334 = vmatprep.subr.mxu0 %v587
    %1335 = vmatpush1.msra.mxu0 %v586
    %1336 = vmatprep.subr.mxu0 %v593
    %1337 = vmatpush1.msra.mxu0 %v592
    %1338 = vmatprep.subr.mxu0 %v599
    %1339 = vmatpush1.msra.mxu0 %v598
    %1340 = vmatprep.subr.mxu0 %v605
    %1341 = vmatpush1.msra.mxu0 %v604
    %1342 = vmatprep.subr.mxu0 %v611
    %1343 = vmatpush1.msra.mxu0 %v610
    %1344 = vmatprep.subr.mxu0 %v617
    %1345 = vmatpush1.msra.mxu0 %v616
    %1346 = vmatprep.subr.mxu0 %v623
    %1347 = vmatpush1.msra.mxu0 %v622
    %1348 = vmatprep.subr.mxu0 %v629
    %1349 = vmatpush1.msra.mxu0 %v628
    %1350 = vmatprep.subr.mxu0 %v635
    %1351 = vmatpush1.msra.mxu0 %v634
    %1352 = vmatprep.subr.mxu0 %v641
    %1353 = vmatpush1.msra.mxu0 %v640
    %1354 = vmatprep.mubr.f32.mxu0 %v59
    %1355 = vmatmul.mubr.f32.gmra.mrb[0].mxu0 %v58
    %v1356 = vpop.f32.mrb[0].mxu0
    %v1357 = vadd.f32 %v1280, %v1356
    %v1358 = vpop.f32.mrb[0].mxu0
    %v1359 = vadd.f32 %v1282, %v1358
    %1360 = vmatprep.mubr.f32.mxu0 %v65
    %1361 = vmatmul.mubr.f32.gmra.mrb[0].mxu0 %v64
    %v1362 = vpop.f32.mrb[0].mxu0
    %v1363 = vadd.f32 %v1286, %v1362
    %v1364 = vpop.f32.mrb[0].mxu0
    %v1365 = vadd.f32 %v1288, %v1364
    %1366 = vdwg.mxu0
    %1367 = vst [vmem:[#allocation8] sm:$0xff] %v895
    %1368 = vst [vmem:[#allocation8 + $0x8] sm:$0xff] %v897
    %1369 = vst [vmem:[#allocation8 + $0x10] sm:$0xff] %v1126
    %1370 = vst [vmem:[#allocation8 + $0x18] sm:$0xff] %v1128
    %1371 = vst [vmem:[#allocation8 + $0x20] sm:$0xff] %v1357
    %1372 = vst [vmem:[#allocation8 + $0x28] sm:$0xff] %v1359
    %1373 = vst [vmem:[#allocation8 + $0x30] sm:$0xff] %v901
    %1374 = vst [vmem:[#allocation8 + $0x38] sm:$0xff] %v903
    %1375 = vst [vmem:[#allocation8 + $0x40] sm:$0xff] %v1132
    %1376 = vst [vmem:[#allocation8 + $0x48] sm:$0xff] %v1134
    %1377 = vst [vmem:[#allocation8 + $0x50] sm:$0xff] %v1363
    %1378 = vst [vmem:[#allocation8 + $0x58] sm:$0xff] %v1365
    // Predicated region
    $region26: #{tpu_custom_call.1} parent=1 // pred_check
      _
    $region27: #{tpu_custom_call.1} parent=1 // pred_check_branch
      %1380 = sbr.rel (0) target = $region29
    $region28: #{tpu_custom_call.1} parent=1 // pred_region
      %s1382 = ssub.s32 1536, 1536
      %1383 = vsyncadd [#allocation4], %s1382
      %s1384 = sshll.u32 [#allocation8], 4
      %s1385 = int_to_ptr.vmem [resolvable:$true] %s1384
      %1390 = dma.vmem_to_hbm [thread:$0]  %s1385, 1536, %s3, [#allocation4], 768, 768, 48
    $region29: #{tpu_custom_call.1} parent=1 // pred_fallthru
      _
    // Predicated region
    $region30: #{tpu_custom_call.1} parent=1 // pred_check
      _
    $region31: #{tpu_custom_call.1} parent=1 // pred_check_branch
      %1392 = sbr.rel (0) target = $region33
    $region32: #{tpu_custom_call.1} parent=1 // pred_region
      %1393 = dma.done [#allocation4], 1536
    $region33: #{tpu_custom_call.1} parent=1 // pred_fallthru
      _
    %1394 = vsyncpa [#allocation3], 1
    %1395 = vsyncpa [#allocation6], 1
    %1396 = vsyncpa [#allocation4], 1

// kernel: tpu_custom_call.1
$region0: #{tpu_custom_call.1}
  #allocation0 [shape = 'u32[]', space=smem, size = 0x4, offset = 0x4, fixed_abs, tag = 'smem constant byte address 0x4 - core index']
  #allocation1 [shape = 'u32[144,128]{1,0:T(1,128)}', space=vmem, size = 0x12000, scoped, tag = 'internal scratch']
  %s0 = inlined_call_operand.hbm [shape: f32[16,768], index: 0, kind: input, shape index: {}]
  %s1 = inlined_call_operand.hbm [shape: f32[768,768], index: 1, kind: input, shape index: {}]
  %s2 = inlined_call_operand.hbm [shape: f32[1,768], index: 2, kind: input, shape index: {}]
  %s3 = inlined_call_operand.hbm [shape: f32[16,768], index: 3, kind: output, shape index: {}]
  %s4 = sld [smem:[#allocation0]]
  $region34: #{tpu_custom_call.1} parent=0
    _
  %s6 = ssub.s32 1, %s4
  %s7 = scalar_select 0, %s6, %s4
  $region1: #{tpu_custom_call.1} parent=0
    #allocation2 [shape = 'u8[49152]{0}', space=vmem, size = 0xc000, scoped, tag = 'input window, operand 0, single buffered']
    #allocation3 [shape = 's32[1]{0}', space=sflag, size = 0x4, scoped, tag = 'scoped memory for tpu_custom_call.1']
    #allocation4 [shape = 's32[1]{0}', space=sflag, size = 0x4, scoped, tag = 'scoped memory for tpu_custom_call.1']
    #allocation5 [shape = 'u8[2359296]{0}', space=vmem, size = 0x240000, scoped, tag = 'input window, operand 1, single buffered']
    #allocation6 [shape = 's32[1]{0}', space=sflag, size = 0x4, scoped, tag = 'scoped memory for tpu_custom_call.1']
    #allocation7 [shape = 'u8[3072]{0}', space=vmem, size = 0xc00, scoped, tag = 'input window, operand 2, single buffered']
    #allocation8 [shape = 'u8[49152]{0}', space=vmem, size = 0xc000, scoped, tag = 'output window, operand 0, single buffered']
    %8 = vsyncpa [#allocation3], 0
    %9 = vsyncpa [#allocation6], 0
    %10 = vsyncpa [#allocation4], 0
    // Predicated region
    $region2: #{tpu_custom_call.1} parent=1 // pred_check
      _
    $region3: #{tpu_custom_call.1} parent=1 // pred_check_branch
      %12 = sbr.rel (0) target = $region5
    $region4: #{tpu_custom_call.1} parent=1 // pred_region
      %s14 = ssub.s32 1536, 1536
      %15 = vsyncadd [#allocation3], %s14
      %s16 = sshll.u32 [#allocation2], 4
      %s17 = int_to_ptr.vmem [resolvable:$true] %s16
      %22 = dma.hbm_to_vmem [thread:$0]  %s0, 1536, %s17, [#allocation3], 768, 768, 48
    $region5: #{tpu_custom_call.1} parent=1 // pred_fallthru
      _
    // Predicated region
    $region6: #{tpu_custom_call.1} parent=1 // pred_check
      _
    $region7: #{tpu_custom_call.1} parent=1 // pred_check_branch
      %24 = sbr.rel (0) target = $region9
    $region8: #{tpu_custom_call.1} parent=1 // pred_region
      %s26 = ssub.s32 73728, 73728
      %27 = vsyncadd [#allocation6], %s26
      %s28 = sshll.u32 [#allocation5], 4
      %s29 = int_to_ptr.vmem [resolvable:$true] %s28
      %34 = dma.hbm_to_vmem [thread:$0]  %s1, 73728, %s29, [#allocation6], 768, 768, 48
    $region9: #{tpu_custom_call.1} parent=1 // pred_fallthru
      _
    // Predicated region
    $region10: #{tpu_custom_call.1} parent=1 // pred_check
      _
    $region11: #{tpu_custom_call.1} parent=1 // pred_check_branch
      %36 = sbr.rel (0) target = $region13
    $region12: #{tpu_custom_call.1} parent=1 // pred_region
      %s38 = ssub.s32 96, 96
      %39 = vsyncadd [#allocation6], %s38
      %s41 = sshll.u32 [#allocation7], 4
      %s42 = int_to_ptr.vmem [resolvable:$true] %s41
      %44 = dma.hbm_to_vmem [thread:$0]  %s2, 96, %s42, [#allocation6]
    $region13: #{tpu_custom_call.1} parent=1 // pred_fallthru
      _
    // Predicated region
    $region14: #{tpu_custom_call.1} parent=1 // pred_check
      _
    $region15: #{tpu_custom_call.1} parent=1 // pred_check_branch
      %46 = sbr.rel (0) target = $region17
    $region16: #{tpu_custom_call.1} parent=1 // pred_region
      %47 = dma.done [#allocation3], 1536
    $region17: #{tpu_custom_call.1} parent=1 // pred_fallthru
      _
    // Predicated region
    $region18: #{tpu_custom_call.1} parent=1 // pred_check
      _
    $region19: #{tpu_custom_call.1} parent=1 // pred_check_branch
      %49 = sbr.rel (0) target = $region21
    $region20: #{tpu_custom_call.1} parent=1 // pred_region
      %50 = dma.done [#allocation6], 73728
    $region21: #{tpu_custom_call.1} parent=1 // pred_fallthru
      _
    // Predicated region
    $region22: #{tpu_custom_call.1} parent=1 // pred_check
      _
    $region23: #{tpu_custom_call.1} parent=1 // pred_check_branch
      %52 = sbr.rel (0) target = $region25
    $region24: #{tpu_custom_call.1} parent=1 // pred_region
      %53 = dma.done [#allocation6], 96
    $region25: #{tpu_custom_call.1} parent=1 // pred_fallthru
      _
    %v54 = vld [vmem:[#allocation2] sm:$0xff]
    %v55 = vld [vmem:[#allocation2 + $0x8] sm:$0xff]
    %v56 = vld [vmem:[#allocation2 + $0x10] sm:$0xff]
    %v57 = vld [vmem:[#allocation2 + $0x18] sm:$0xff]
    %v58 = vld [vmem:[#allocation2 + $0x20] sm:$0xff]
    %v59 = vld [vmem:[#allocation2 + $0x28] sm:$0xff]
    %v60 = vld [vmem:[#allocation2 + $0x30] sm:$0xff]
    %v61 = vld [vmem:[#allocation2 + $0x38] sm:$0xff]
    %v62 = vld [vmem:[#allocation2 + $0x40] sm:$0xff]
    %v63 = vld [vmem:[#allocation2 + $0x48] sm:$0xff]
    %v64 = vld [vmem:[#allocation2 + $0x50] sm:$0xff]
    %v65 = vld [vmem:[#allocation2 + $0x58] sm:$0xff]
    %v66 = vld [vmem:[#allocation5] sm:$0xff]
    %v67 = vld [vmem:[#allocation5 + $0x8] sm:$0xff]
    %v68 = vld [vmem:[#allocation5 + $0x10] sm:$0xff]
    %v69 = vld [vmem:[#allocation5 + $0x18] sm:$0xff]
    %v70 = vld [vmem:[#allocation5 + $0x20] sm:$0xff]
    %v71 = vld [vmem:[#allocation5 + $0x28] sm:$0xff]
    %v72 = vld [vmem:[#allocation5 + $0x30] sm:$0xff]
    %v73 = vld [vmem:[#allocation5 + $0x38] sm:$0xff]
    %v74 = vld [vmem:[#allocation5 + $0x40] sm:$0xff]
    %v75 = vld [vmem:[#allocation5 + $0x48] sm:$0xff]
    %v76 = vld [vmem:[#allocation5 + $0x50] sm:$0xff]
    %v77 = vld [vmem:[#allocation5 + $0x58] sm:$0xff]
    %v78 = vld [vmem:[#allocation5 + $0x60] sm:$0xff]
    %v79 = vld [vmem:[#allocation5 + $0x68] sm:$0xff]
    %v80 = vld [vmem:[#allocation5 + $0x70] sm:$0xff]
    %v81 = vld [vmem:[#allocation5 + $0x78] sm:$0xff]
    %v82 = vld [vmem:[#allocation5 + $0x80] sm:$0xff]
    %v83 = vld [vmem:[#allocation5 + $0x88] sm:$0xff]
    %v84 = vld [vmem:[#allocation5 + $0x90] sm:$0xff]
    %v85 = vld [vmem:[#allocation5 + $0x98] sm:$0xff]
    %v86 = vld [vmem:[#allocation5 + $0xa0] sm:$0xff]
    %v87 = vld [vmem:[#allocation5 + $0xa8] sm:$0xff]
    %v88 = vld [vmem:[#allocation5 + $0xb0] sm:$0xff]
    %v89 = vld [vmem:[#allocation5 + $0xb8] sm:$0xff]
    %v90 = vld [vmem:[#allocation5 + $0xc0] sm:$0xff]
    %v91 = vld [vmem:[#allocation5 + $0xc8] sm:$0xff]
    %v92 = vld [vmem:[#allocation5 + $0xd0] sm:$0xff]
    %v93 = vld [vmem:[#allocation5 + $0xd8] sm:$0xff]
    %v94 = vld [vmem:[#allocation5 + $0xe0] sm:$0xff]
    %v95 = vld [vmem:[#allocation5 + $0xe8] sm:$0xff]
    %v96 = vld [vmem:[#allocation5 + $0xf0] sm:$0xff]
    %v97 = vld [vmem:[#allocation5 + $0xf8] sm:$0xff]
    %v98 = vld [vmem:[#allocation5 + $0x100] sm:$0xff]
    %v99 = vld [vmem:[#allocation5 + $0x108] sm:$0xff]
    %v100 = vld [vmem:[#allocation5 + $0x110] sm:$0xff]
    %v101 = vld [vmem:[#allocation5 + $0x118] sm:$0xff]
    %v102 = vld [vmem:[#allocation5 + $0x120] sm:$0xff]
    %v103 = vld [vmem:[#allocation5 + $0x128] sm:$0xff]
    %v104 = vld [vmem:[#allocation5 + $0x130] sm:$0xff]
    %v105 = vld [vmem:[#allocation5 + $0x138] sm:$0xff]
    %v106 = vld [vmem:[#allocation5 + $0x140] sm:$0xff]
    %v107 = vld [vmem:[#allocation5 + $0x148] sm:$0xff]
    %v108 = vld [vmem:[#allocation5 + $0x150] sm:$0xff]
    %v109 = vld [vmem:[#allocation5 + $0x158] sm:$0xff]
    %v110 = vld [vmem:[#allocation5 + $0x160] sm:$0xff]
    %v111 = vld [vmem:[#allocation5 + $0x168] sm:$0xff]
    %v112 = vld [vmem:[#allocation5 + $0x170] sm:$0xff]
    %v113 = vld [vmem:[#allocation5 + $0x178] sm:$0xff]
    %v114 = vld [vmem:[#allocation5 + $0x180] sm:$0xff]
    %v115 = vld [vmem:[#allocation5 + $0x188] sm:$0xff]
    %v116 = vld [vmem:[#allocation5 + $0x190] sm:$0xff]
    %v117 = vld [vmem:[#allocation5 + $0x198] sm:$0xff]
    %v118 = vld [vmem:[#allocation5 + $0x1a0] sm:$0xff]
    %v119 = vld [vmem:[#allocation5 + $0x1a8] sm:$0xff]
    %v120 = vld [vmem:[#allocation5 + $0x1b0] sm:$0xff]
    %v121 = vld [vmem:[#allocation5 + $0x1b8] sm:$0xff]
    %v122 = vld [vmem:[#allocation5 + $0x1c0] sm:$0xff]
    %v123 = vld [vmem:[#allocation5 + $0x1c8] sm:$0xff]
    %v124 = vld [vmem:[#allocation5 + $0x1d0] sm:$0xff]
    %v125 = vld [vmem:[#allocation5 + $0x1d8] sm:$0xff]
    %v126 = vld [vmem:[#allocation5 + $0x1e0] sm:$0xff]
    %v127 = vld [vmem:[#allocation5 + $0x1e8] sm:$0xff]
    %v128 = vld [vmem:[#allocation5 + $0x1f0] sm:$0xff]
    %v129 = vld [vmem:[#allocation5 + $0x1f8] sm:$0xff]
    %v130 = vld [vmem:[#allocation5 + $0x200] sm:$0xff]
    %v131 = vld [vmem:[#allocation5 + $0x208] sm:$0xff]
    %v132 = vld [vmem:[#allocation5 + $0x210] sm:$0xff]
    %v133 = vld [vmem:[#allocation5 + $0x218] sm:$0xff]
    %v134 = vld [vmem:[#allocation5 + $0x220] sm:$0xff]
    %v135 = vld [vmem:[#allocation5 + $0x228] sm:$0xff]
    %v136 = vld [vmem:[#allocation5 + $0x230] sm:$0xff]
    %v137 = vld [vmem:[#allocation5 + $0x238] sm:$0xff]
    %v138 = vld [vmem:[#allocation5 + $0x240] sm:$0xff]
    %v139 = vld [vmem:[#allocation5 + $0x248] sm:$0xff]
    %v140 = vld [vmem:[#allocation5 + $0x250] sm:$0xff]
    %v141 = vld [vmem:[#allocation5 + $0x258] sm:$0xff]
    %v142 = vld [vmem:[#allocation5 + $0x260] sm:$0xff]
    %v143 = vld [vmem:[#allocation5 + $0x268] sm:$0xff]
    %v144 = vld [vmem:[#allocation5 + $0x270] sm:$0xff]
    %v145 = vld [vmem:[#allocation5 + $0x278] sm:$0xff]
    %v146 = vld [vmem:[#allocation5 + $0x280] sm:$0xff]
    %v147 = vld [vmem:[#allocation5 + $0x288] sm:$0xff]
    %v148 = vld [vmem:[#allocation5 + $0x290] sm:$0xff]
    %v149 = vld [vmem:[#allocation5 + $0x298] sm:$0xff]
    %v150 = vld [vmem:[#allocation5 + $0x2a0] sm:$0xff]
    %v151 = vld [vmem:[#allocation5 + $0x2a8] sm:$0xff]
    %v152 = vld [vmem:[#allocation5 + $0x2b0] sm:$0xff]
    %v153 = vld [vmem:[#allocation5 + $0x2b8] sm:$0xff]
    %v154 = vld [vmem:[#allocation5 + $0x2c0] sm:$0xff]
    %v155 = vld [vmem:[#allocation5 + $0x2c8] sm:$0xff]
    %v156 = vld [vmem:[#allocation5 + $0x2d0] sm:$0xff]
    %v157 = vld [vmem:[#allocation5 + $0x2d8] sm:$0xff]
    %v158 = vld [vmem:[#allocation5 + $0x2e0] sm:$0xff]
    %v159 = vld [vmem:[#allocation5 + $0x2e8] sm:$0xff]
    %v160 = vld [vmem:[#allocation5 + $0x2f0] sm:$0xff]
    %v161 = vld [vmem:[#allocation5 + $0x2f8] sm:$0xff]
    %v162 = vld [vmem:[#allocation5 + $0x300] sm:$0xff]
    %v163 = vld [vmem:[#allocation5 + $0x308] sm:$0xff]
    %v164 = vld [vmem:[#allocation5 + $0x310] sm:$0xff]
    %v165 = vld [vmem:[#allocation5 + $0x318] sm:$0xff]
    %v166 = vld [vmem:[#allocation5 + $0x320] sm:$0xff]
    %v167 = vld [vmem:[#allocation5 + $0x328] sm:$0xff]
    %v168 = vld [vmem:[#allocation5 + $0x330] sm:$0xff]
    %v169 = vld [vmem:[#allocation5 + $0x338] sm:$0xff]
    %v170 = vld [vmem:[#allocation5 + $0x340] sm:$0xff]
    %v171 = vld [vmem:[#allocation5 + $0x348] sm:$0xff]
    %v172 = vld [vmem:[#allocation5 + $0x350] sm:$0xff]
    %v173 = vld [vmem:[#allocation5 + $0x358] sm:$0xff]
    %v174 = vld [vmem:[#allocation5 + $0x360] sm:$0xff]
    %v175 = vld [vmem:[#allocation5 + $0x368] sm:$0xff]
    %v176 = vld [vmem:[#allocation5 + $0x370] sm:$0xff]
    %v177 = vld [vmem:[#allocation5 + $0x378] sm:$0xff]
    %v178 = vld [vmem:[#allocation5 + $0x380] sm:$0xff]
    %v179 = vld [vmem:[#allocation5 + $0x388] sm:$0xff]
    %v180 = vld [vmem:[#allocation5 + $0x390] sm:$0xff]
    %v181 = vld [vmem:[#allocation5 + $0x398] sm:$0xff]
    %v182 = vld [vmem:[#allocation5 + $0x3a0] sm:$0xff]
    %v183 = vld [vmem:[#allocation5 + $0x3a8] sm:$0xff]
    %v184 = vld [vmem:[#allocation5 + $0x3b0] sm:$0xff]
    %v185 = vld [vmem:[#allocation5 + $0x3b8] sm:$0xff]
    %v186 = vld [vmem:[#allocation5 + $0x3c0] sm:$0xff]
    %v187 = vld [vmem:[#allocation5 + $0x3c8] sm:$0xff]
    %v188 = vld [vmem:[#allocation5 + $0x3d0] sm:$0xff]
    %v189 = vld [vmem:[#allocation5 + $0x3d8] sm:$0xff]
    %v190 = vld [vmem:[#allocation5 + $0x3e0] sm:$0xff]
    %v191 = vld [vmem:[#allocation5 + $0x3e8] sm:$0xff]
    %v192 = vld [vmem:[#allocation5 + $0x3f0] sm:$0xff]
    %v193 = vld [vmem:[#allocation5 + $0x3f8] sm:$0xff]
    %v194 = vld [vmem:[#allocation5 + $0x400] sm:$0xff]
    %v195 = vld [vmem:[#allocation5 + $0x408] sm:$0xff]
    %v196 = vld [vmem:[#allocation5 + $0x410] sm:$0xff]
    %v197 = vld [vmem:[#allocation5 + $0x418] sm:$0xff]
    %v198 = vld [vmem:[#allocation5 + $0x420] sm:$0xff]
    %v199 = vld [vmem:[#allocation5 + $0x428] sm:$0xff]
    %v200 = vld [vmem:[#allocation5 + $0x430] sm:$0xff]
    %v201 = vld [vmem:[#allocation5 + $0x438] sm:$0xff]
    %v202 = vld [vmem:[#allocation5 + $0x440] sm:$0xff]
    %v203 = vld [vmem:[#allocation5 + $0x448] sm:$0xff]
    %v204 = vld [vmem:[#allocation5 + $0x450] sm:$0xff]
    %v205 = vld [vmem:[#allocation5 + $0x458] sm:$0xff]
    %v206 = vld [vmem:[#allocation5 + $0x460] sm:$0xff]
    %v207 = vld [vmem:[#allocation5 + $0x468] sm:$0xff]
    %v208 = vld [vmem:[#allocation5 + $0x470] sm:$0xff]
    %v209 = vld [vmem:[#allocation5 + $0x478] sm:$0xff]
    %v210 = vld [vmem:[#allocation5 + $0x480] sm:$0xff]
    %v211 = vld [vmem:[#allocation5 + $0x488] sm:$0xff]
    %v212 = vld [vmem:[#allocation5 + $0x490] sm:$0xff]
    %v213 = vld [vmem:[#allocation5 + $0x498] sm:$0xff]
    %v214 = vld [vmem:[#allocation5 + $0x4a0] sm:$0xff]
    %v215 = vld [vmem:[#allocation5 + $0x4a8] sm:$0xff]
    %v216 = vld [vmem:[#allocation5 + $0x4b0] sm:$0xff]
    %v217 = vld [vmem:[#allocation5 + $0x4b8] sm:$0xff]
    %v218 = vld [vmem:[#allocation5 + $0x4c0] sm:$0xff]
    %v219 = vld [vmem:[#allocation5 + $0x4c8] sm:$0xff]
    %v220 = vld [vmem:[#allocation5 + $0x4d0] sm:$0xff]
    %v221 = vld [vmem:[#allocation5 + $0x4d8] sm:$0xff]
    %v222 = vld [vmem:[#allocation5 + $0x4e0] sm:$0xff]
    %v223 = vld [vmem:[#allocation5 + $0x4e8] sm:$0xff]
    %v224 = vld [vmem:[#allocation5 + $0x4f0] sm:$0xff]
    %v225 = vld [vmem:[#allocation5 + $0x4f8] sm:$0xff]
    %v226 = vld [vmem:[#allocation5 + $0x500] sm:$0xff]
    %v227 = vld [vmem:[#allocation5 + $0x508] sm:$0xff]
    %v228 = vld [vmem:[#allocation5 + $0x510] sm:$0xff]
    %v229 = vld [vmem:[#allocation5 + $0x518] sm:$0xff]
    %v230 = vld [vmem:[#allocation5 + $0x520] sm:$0xff]
    %v231 = vld [vmem:[#allocation5 + $0x528] sm:$0xff]
    %v232 = vld [vmem:[#allocation5 + $0x530] sm:$0xff]
    %v233 = vld [vmem:[#allocation5 + $0x538] sm:$0xff]
    %v234 = vld [vmem:[#allocation5 + $0x540] sm:$0xff]
    %v235 = vld [vmem:[#allocation5 + $0x548] sm:$0xff]
    %v236 = vld [vmem:[#allocation5 + $0x550] sm:$0xff]
    %v237 = vld [vmem:[#allocation5 + $0x558] sm:$0xff]
    %v238 = vld [vmem:[#allocation5 + $0x560] sm:$0xff]
    %v239 = vld [vmem:[#allocation5 + $0x568] sm:$0xff]
    %v240 = vld [vmem:[#allocation5 + $0x570] sm:$0xff]
    %v241 = vld [vmem:[#allocation5 + $0x578] sm:$0xff]
    %v242 = vld [vmem:[#allocation5 + $0x580] sm:$0xff]
    %v243 = vld [vmem:[#allocation5 + $0x588] sm:$0xff]
    %v244 = vld [vmem:[#allocation5 + $0x590] sm:$0xff]
    %v245 = vld [vmem:[#allocation5 + $0x598] sm:$0xff]
    %v246 = vld [vmem:[#allocation5 + $0x5a0] sm:$0xff]
    %v247 = vld [vmem:[#allocation5 + $0x5a8] sm:$0xff]
    %v248 = vld [vmem:[#allocation5 + $0x5b0] sm:$0xff]
    %v249 = vld [vmem:[#allocation5 + $0x5b8] sm:$0xff]
    %v250 = vld [vmem:[#allocation5 + $0x5c0] sm:$0xff]
    %v251 = vld [vmem:[#allocation5 + $0x5c8] sm:$0xff]
    %v252 = vld [vmem:[#allocation5 + $0x5d0] sm:$0xff]
    %v253 = vld [vmem:[#allocation5 + $0x5d8] sm:$0xff]
    %v254 = vld [vmem:[#allocation5 + $0x5e0] sm:$0xff]
    %v255 = vld [vmem:[#allocation5 + $0x5e8] sm:$0xff]
    %v256 = vld [vmem:[#allocation5 + $0x5f0] sm:$0xff]
    %v257 = vld [vmem:[#allocation5 + $0x5f8] sm:$0xff]
    %v258 = vld [vmem:[#allocation5 + $0x600] sm:$0xff]
    %v259 = vld [vmem:[#allocation5 + $0x608] sm:$0xff]
    %v260 = vld [vmem:[#allocation5 + $0x610] sm:$0xff]
    %v261 = vld [vmem:[#allocation5 + $0x618] sm:$0xff]
    %v262 = vld [vmem:[#allocation5 + $0x620] sm:$0xff]
    %v263 = vld [vmem:[#allocation5 + $0x628] sm:$0xff]
    %v264 = vld [vmem:[#allocation5 + $0x630] sm:$0xff]
    %v265 = vld [vmem:[#allocation5 + $0x638] sm:$0xff]
    %v266 = vld [vmem:[#allocation5 + $0x640] sm:$0xff]
    %v267 = vld [vmem:[#allocation5 + $0x648] sm:$0xff]
    %v268 = vld [vmem:[#allocation5 + $0x650] sm:$0xff]
    %v269 = vld [vmem:[#allocation5 + $0x658] sm:$0xff]
    %v270 = vld [vmem:[#allocation5 + $0x660] sm:$0xff]
    %v271 = vld [vmem:[#allocation5 + $0x668] sm:$0xff]
    %v272 = vld [vmem:[#allocation5 + $0x670] sm:$0xff]
    %v273 = vld [vmem:[#allocation5 + $0x678] sm:$0xff]
    %v274 = vld [vmem:[#allocation5 + $0x680] sm:$0xff]
    %v275 = vld [vmem:[#allocation5 + $0x688] sm:$0xff]
    %v276 = vld [vmem:[#allocation5 + $0x690] sm:$0xff]
    %v277 = vld [vmem:[#allocation5 + $0x698] sm:$0xff]
    %v278 = vld [vmem:[#allocation5 + $0x6a0] sm:$0xff]
    %v279 = vld [vmem:[#allocation5 + $0x6a8] sm:$0xff]
    %v280 = vld [vmem:[#allocation5 + $0x6b0] sm:$0xff]
    %v281 = vld [vmem:[#allocation5 + $0x6b8] sm:$0xff]
    %v282 = vld [vmem:[#allocation5 + $0x6c0] sm:$0xff]
    %v283 = vld [vmem:[#allocation5 + $0x6c8] sm:$0xff]
    %v284 = vld [vmem:[#allocation5 + $0x6d0] sm:$0xff]
    %v285 = vld [vmem:[#allocation5 + $0x6d8] sm:$0xff]
    %v286 = vld [vmem:[#allocation5 + $0x6e0] sm:$0xff]
    %v287 = vld [vmem:[#allocation5 + $0x6e8] sm:$0xff]
    %v288 = vld [vmem:[#allocation5 + $0x6f0] sm:$0xff]
    %v289 = vld [vmem:[#allocation5 + $0x6f8] sm:$0xff]
    %v290 = vld [vmem:[#allocation5 + $0x700] sm:$0xff]
    %v291 = vld [vmem:[#allocation5 + $0x708] sm:$0xff]
    %v292 = vld [vmem:[#allocation5 + $0x710] sm:$0xff]
    %v293 = vld [vmem:[#allocation5 + $0x718] sm:$0xff]
    %v294 = vld [vmem:[#allocation5 + $0x720] sm:$0xff]
    %v295 = vld [vmem:[#allocation5 + $0x728] sm:$0xff]
    %v296 = vld [vmem:[#allocation5 + $0x730] sm:$0xff]
    %v297 = vld [vmem:[#allocation5 + $0x738] sm:$0xff]
    %v298 = vld [vmem:[#allocation5 + $0x740] sm:$0xff]
    %v299 = vld [vmem:[#allocation5 + $0x748] sm:$0xff]
    %v300 = vld [vmem:[#allocation5 + $0x750] sm:$0xff]
    %v301 = vld [vmem:[#allocation5 + $0x758] sm:$0xff]
    %v302 = vld [vmem:[#allocation5 + $0x760] sm:$0xff]
    %v303 = vld [vmem:[#allocation5 + $0x768] sm:$0xff]
    %v304 = vld [vmem:[#allocation5 + $0x770] sm:$0xff]
    %v305 = vld [vmem:[#allocation5 + $0x778] sm:$0xff]
    %v306 = vld [vmem:[#allocation5 + $0x780] sm:$0xff]
    %v307 = vld [vmem:[#allocation5 + $0x788] sm:$0xff]
    %v308 = vld [vmem:[#allocation5 + $0x790] sm:$0xff]
    %v309 = vld [vmem:[#allocation5 + $0x798] sm:$0xff]
    %v310 = vld [vmem:[#allocation5 + $0x7a0] sm:$0xff]
    %v311 = vld [vmem:[#allocation5 + $0x7a8] sm:$0xff]
    %v312 = vld [vmem:[#allocation5 + $0x7b0] sm:$0xff]
    %v313 = vld [vmem:[#allocation5 + $0x7b8] sm:$0xff]
    %v314 = vld [vmem:[#allocation5 + $0x7c0] sm:$0xff]
    %v315 = vld [vmem:[#allocation5 + $0x7c8] sm:$0xff]
    %v316 = vld [vmem:[#allocation5 + $0x7d0] sm:$0xff]
    %v317 = vld [vmem:[#allocation5 + $0x7d8] sm:$0xff]
    %v318 = vld [vmem:[#allocation5 + $0x7e0] sm:$0xff]
    %v319 = vld [vmem:[#allocation5 + $0x7e8] sm:$0xff]
    %v320 = vld [vmem:[#allocation5 + $0x7f0] sm:$0xff]
    %v321 = vld [vmem:[#allocation5 + $0x7f8] sm:$0xff]
    %v322 = vld [vmem:[#allocation5 + $0x800] sm:$0xff]
    %v323 = vld [vmem:[#allocation5 + $0x808] sm:$0xff]
    %v324 = vld [vmem:[#allocation5 + $0x810] sm:$0xff]
    %v325 = vld [vmem:[#allocation5 + $0x818] sm:$0xff]
    %v326 = vld [vmem:[#allocation5 + $0x820] sm:$0xff]
    %v327 = vld [vmem:[#allocation5 + $0x828] sm:$0xff]
    %v328 = vld [vmem:[#allocation5 + $0x830] sm:$0xff]
    %v329 = vld [vmem:[#allocation5 + $0x838] sm:$0xff]
    %v330 = vld [vmem:[#allocation5 + $0x840] sm:$0xff]
    %v331 = vld [vmem:[#allocation5 + $0x848] sm:$0xff]
    %v332 = vld [vmem:[#allocation5 + $0x850] sm:$0xff]
    %v333 = vld [vmem:[#allocation5 + $0x858] sm:$0xff]
    %v334 = vld [vmem:[#allocation5 + $0x860] sm:$0xff]
    %v335 = vld [vmem:[#allocation5 + $0x868] sm:$0xff]
    %v336 = vld [vmem:[#allocation5 + $0x870] sm:$0xff]
    %v337 = vld [vmem:[#allocation5 + $0x878] sm:$0xff]
    %v338 = vld [vmem:[#allocation5 + $0x880] sm:$0xff]
    %v339 = vld [vmem:[#allocation5 + $0x888] sm:$0xff]
    %v340 = vld [vmem:[#allocation5 + $0x890] sm:$0xff]
    %v341 = vld [vmem:[#allocation5 + $0x898] sm:$0xff]
    %v342 = vld [vmem:[#allocation5 + $0x8a0] sm:$0xff]
    %v343 = vld [vmem:[#allocation5 + $0x8a8] sm:$0xff]
    %v344 = vld [vmem:[#allocation5 + $0x8b0] sm:$0xff]
    %v345 = vld [vmem:[#allocation5 + $0x8b8] sm:$0xff]
    %v346 = vld [vmem:[#allocation5 + $0x8c0] sm:$0xff]
    %v347 = vld [vmem:[#allocation5 + $0x8c8] sm:$0xff]
    %v348 = vld [vmem:[#allocation5 + $0x8d0] sm:$0xff]
    %v349 = vld [vmem:[#allocation5 + $0x8d8] sm:$0xff]
    %v350 = vld [vmem:[#allocation5 + $0x8e0] sm:$0xff]
    %v351 = vld [vmem:[#allocation5 + $0x8e8] sm:$0xff]
    %v352 = vld [vmem:[#allocation5 + $0x8f0] sm:$0xff]
    %v353 = vld [vmem:[#allocation5 + $0x8f8] sm:$0xff]
    %v354 = vld [vmem:[#allocation5 + $0x900] sm:$0xff]
    %v355 = vld [vmem:[#allocation5 + $0x908] sm:$0xff]
    %v356 = vld [vmem:[#allocation5 + $0x910] sm:$0xff]
    %v357 = vld [vmem:[#allocation5 + $0x918] sm:$0xff]
    %v358 = vld [vmem:[#allocation5 + $0x920] sm:$0xff]
    %v359 = vld [vmem:[#allocation5 + $0x928] sm:$0xff]
    %v360 = vld [vmem:[#allocation5 + $0x930] sm:$0xff]
    %v361 = vld [vmem:[#allocation5 + $0x938] sm:$0xff]
    %v362 = vld [vmem:[#allocation5 + $0x940] sm:$0xff]
    %v363 = vld [vmem:[#allocation5 + $0x948] sm:$0xff]
    %v364 = vld [vmem:[#allocation5 + $0x950] sm:$0xff]
    %v365 = vld [vmem:[#allocation5 + $0x958] sm:$0xff]
    %v366 = vld [vmem:[#allocation5 + $0x960] sm:$0xff]
    %v367 = vld [vmem:[#allocation5 + $0x968] sm:$0xff]
    %v368 = vld [vmem:[#allocation5 + $0x970] sm:$0xff]
    %v369 = vld [vmem:[#allocation5 + $0x978] sm:$0xff]
    %v370 = vld [vmem:[#allocation5 + $0x980] sm:$0xff]
    %v371 = vld [vmem:[#allocation5 + $0x988] sm:$0xff]
    %v372 = vld [vmem:[#allocation5 + $0x990] sm:$0xff]
    %v373 = vld [vmem:[#allocation5 + $0x998] sm:$0xff]
    %v374 = vld [vmem:[#allocation5 + $0x9a0] sm:$0xff]
    %v375 = vld [vmem:[#allocation5 + $0x9a8] sm:$0xff]
    %v376 = vld [vmem:[#allocation5 + $0x9b0] sm:$0xff]
    %v377 = vld [vmem:[#allocation5 + $0x9b8] sm:$0xff]
    %v378 = vld [vmem:[#allocation5 + $0x9c0] sm:$0xff]
    %v379 = vld [vmem:[#allocation5 + $0x9c8] sm:$0xff]
    %v380 = vld [vmem:[#allocation5 + $0x9d0] sm:$0xff]
    %v381 = vld [vmem:[#allocation5 + $0x9d8] sm:$0xff]
    %v382 = vld [vmem:[#allocation5 + $0x9e0] sm:$0xff]
    %v383 = vld [vmem:[#allocation5 + $0x9e8] sm:$0xff]
    %v384 = vld [vmem:[#allocation5 + $0x9f0] sm:$0xff]
    %v385 = vld [vmem:[#allocation5 + $0x9f8] sm:$0xff]
    %v386 = vld [vmem:[#allocation5 + $0xa00] sm:$0xff]
    %v387 = vld [vmem:[#allocation5 + $0xa08] sm:$0xff]
    %v388 = vld [vmem:[#allocation5 + $0xa10] sm:$0xff]
    %v389 = vld [vmem:[#allocation5 + $0xa18] sm:$0xff]
    %v390 = vld [vmem:[#allocation5 + $0xa20] sm:$0xff]
    %v391 = vld [vmem:[#allocation5 + $0xa28] sm:$0xff]
    %v392 = vld [vmem:[#allocation5 + $0xa30] sm:$0xff]
    %v393 = vld [vmem:[#allocation5 + $0xa38] sm:$0xff]
    %v394 = vld [vmem:[#allocation5 + $0xa40] sm:$0xff]
    %v395 = vld [vmem:[#allocation5 + $0xa48] sm:$0xff]
    %v396 = vld [vmem:[#allocation5 + $0xa50] sm:$0xff]
    %v397 = vld [vmem:[#allocation5 + $0xa58] sm:$0xff]
    %v398 = vld [vmem:[#allocation5 + $0xa60] sm:$0xff]
    %v399 = vld [vmem:[#allocation5 + $0xa68] sm:$0xff]
    %v400 = vld [vmem:[#allocation5 + $0xa70] sm:$0xff]
    %v401 = vld [vmem:[#allocation5 + $0xa78] sm:$0xff]
    %v402 = vld [vmem:[#allocation5 + $0xa80] sm:$0xff]
    %v403 = vld [vmem:[#allocation5 + $0xa88] sm:$0xff]
    %v404 = vld [vmem:[#allocation5 + $0xa90] sm:$0xff]
    %v405 = vld [vmem:[#allocation5 + $0xa98] sm:$0xff]
    %v406 = vld [vmem:[#allocation5 + $0xaa0] sm:$0xff]
    %v407 = vld [vmem:[#allocation5 + $0xaa8] sm:$0xff]
    %v408 = vld [vmem:[#allocation5 + $0xab0] sm:$0xff]
    %v409 = vld [vmem:[#allocation5 + $0xab8] sm:$0xff]
    %v410 = vld [vmem:[#allocation5 + $0xac0] sm:$0xff]
    %v411 = vld [vmem:[#allocation5 + $0xac8] sm:$0xff]
    %v412 = vld [vmem:[#allocation5 + $0xad0] sm:$0xff]
    %v413 = vld [vmem:[#allocation5 + $0xad8] sm:$0xff]
    %v414 = vld [vmem:[#allocation5 + $0xae0] sm:$0xff]
    %v415 = vld [vmem:[#allocation5 + $0xae8] sm:$0xff]
    %v416 = vld [vmem:[#allocation5 + $0xaf0] sm:$0xff]
    %v417 = vld [vmem:[#allocation5 + $0xaf8] sm:$0xff]
    %v418 = vld [vmem:[#allocation5 + $0xb00] sm:$0xff]
    %v419 = vld [vmem:[#allocation5 + $0xb08] sm:$0xff]
    %v420 = vld [vmem:[#allocation5 + $0xb10] sm:$0xff]
    %v421 = vld [vmem:[#allocation5 + $0xb18] sm:$0xff]
    %v422 = vld [vmem:[#allocation5 + $0xb20] sm:$0xff]
    %v423 = vld [vmem:[#allocation5 + $0xb28] sm:$0xff]
    %v424 = vld [vmem:[#allocation5 + $0xb30] sm:$0xff]
    %v425 = vld [vmem:[#allocation5 + $0xb38] sm:$0xff]
    %v426 = vld [vmem:[#allocation5 + $0xb40] sm:$0xff]
    %v427 = vld [vmem:[#allocation5 + $0xb48] sm:$0xff]
    %v428 = vld [vmem:[#allocation5 + $0xb50] sm:$0xff]
    %v429 = vld [vmem:[#allocation5 + $0xb58] sm:$0xff]
    %v430 = vld [vmem:[#allocation5 + $0xb60] sm:$0xff]
    %v431 = vld [vmem:[#allocation5 + $0xb68] sm:$0xff]
    %v432 = vld [vmem:[#allocation5 + $0xb70] sm:$0xff]
    %v433 = vld [vmem:[#allocation5 + $0xb78] sm:$0xff]
    %v434 = vld [vmem:[#allocation5 + $0xb80] sm:$0xff]
    %v435 = vld [vmem:[#allocation5 + $0xb88] sm:$0xff]
    %v436 = vld [vmem:[#allocation5 + $0xb90] sm:$0xff]
    %v437 = vld [vmem:[#allocation5 + $0xb98] sm:$0xff]
    %v438 = vld [vmem:[#allocation5 + $0xba0] sm:$0xff]
    %v439 = vld [vmem:[#allocation5 + $0xba8] sm:$0xff]
    %v440 = vld [vmem:[#allocation5 + $0xbb0] sm:$0xff]
    %v441 = vld [vmem:[#allocation5 + $0xbb8] sm:$0xff]
    %v442 = vld [vmem:[#allocation5 + $0xbc0] sm:$0xff]
    %v443 = vld [vmem:[#allocation5 + $0xbc8] sm:$0xff]
    %v444 = vld [vmem:[#allocation5 + $0xbd0] sm:$0xff]
    %v445 = vld [vmem:[#allocation5 + $0xbd8] sm:$0xff]
    %v446 = vld [vmem:[#allocation5 + $0xbe0] sm:$0xff]
    %v447 = vld [vmem:[#allocation5 + $0xbe8] sm:$0xff]
    %v448 = vld [vmem:[#allocation5 + $0xbf0] sm:$0xff]
    %v449 = vld [vmem:[#allocation5 + $0xbf8] sm:$0xff]
    %v450 = vld [vmem:[#allocation5 + $0xc00] sm:$0xff]
    %v451 = vld [vmem:[#allocation5 + $0xc08] sm:$0xff]
    %v452 = vld [vmem:[#allocation5 + $0xc10] sm:$0xff]
    %v453 = vld [vmem:[#allocation5 + $0xc18] sm:$0xff]
    %v454 = vld [vmem:[#allocation5 + $0xc20] sm:$0xff]
    %v455 = vld [vmem:[#allocation5 + $0xc28] sm:$0xff]
    %v456 = vld [vmem:[#allocation5 + $0xc30] sm:$0xff]
    %v457 = vld [vmem:[#allocation5 + $0xc38] sm:$0xff]
    %v458 = vld [vmem:[#allocation5 + $0xc40] sm:$0xff]
    %v459 = vld [vmem:[#allocation5 + $0xc48] sm:$0xff]
    %v460 = vld [vmem:[#allocation5 + $0xc50] sm:$0xff]
    %v461 = vld [vmem:[#allocation5 + $0xc58] sm:$0xff]
    %v462 = vld [vmem:[#allocation5 + $0xc60] sm:$0xff]
    %v463 = vld [vmem:[#allocation5 + $0xc68] sm:$0xff]
    %v464 = vld [vmem:[#allocation5 + $0xc70] sm:$0xff]
    %v465 = vld [vmem:[#allocation5 + $0xc78] sm:$0xff]
    %v466 = vld [vmem:[#allocation5 + $0xc80] sm:$0xff]
    %v467 = vld [vmem:[#allocation5 + $0xc88] sm:$0xff]
    %v468 = vld [vmem:[#allocation5 + $0xc90] sm:$0xff]
    %v469 = vld [vmem:[#allocation5 + $0xc98] sm:$0xff]
    %v470 = vld [vmem:[#allocation5 + $0xca0] sm:$0xff]
    %v471 = vld [vmem:[#allocation5 + $0xca8] sm:$0xff]
    %v472 = vld [vmem:[#allocation5 + $0xcb0] sm:$0xff]
    %v473 = vld [vmem:[#allocation5 + $0xcb8] sm:$0xff]
    %v474 = vld [vmem:[#allocation5 + $0xcc0] sm:$0xff]
    %v475 = vld [vmem:[#allocation5 + $0xcc8] sm:$0xff]
    %v476 = vld [vmem:[#allocation5 + $0xcd0] sm:$0xff]
    %v477 = vld [vmem:[#allocation5 + $0xcd8] sm:$0xff]
    %v478 = vld [vmem:[#allocation5 + $0xce0] sm:$0xff]
    %v479 = vld [vmem:[#allocation5 + $0xce8] sm:$0xff]
    %v480 = vld [vmem:[#allocation5 + $0xcf0] sm:$0xff]
    %v481 = vld [vmem:[#allocation5 + $0xcf8] sm:$0xff]
    %v482 = vld [vmem:[#allocation5 + $0xd00] sm:$0xff]
    %v483 = vld [vmem:[#allocation5 + $0xd08] sm:$0xff]
    %v484 = vld [vmem:[#allocation5 + $0xd10] sm:$0xff]
    %v485 = vld [vmem:[#allocation5 + $0xd18] sm:$0xff]
    %v486 = vld [vmem:[#allocation5 + $0xd20] sm:$0xff]
    %v487 = vld [vmem:[#allocation5 + $0xd28] sm:$0xff]
    %v488 = vld [vmem:[#allocation5 + $0xd30] sm:$0xff]
    %v489 = vld [vmem:[#allocation5 + $0xd38] sm:$0xff]
    %v490 = vld [vmem:[#allocation5 + $0xd40] sm:$0xff]
    %v491 = vld [vmem:[#allocation5 + $0xd48] sm:$0xff]
    %v492 = vld [vmem:[#allocation5 + $0xd50] sm:$0xff]
    %v493 = vld [vmem:[#allocation5 + $0xd58] sm:$0xff]
    %v494 = vld [vmem:[#allocation5 + $0xd60] sm:$0xff]
    %v495 = vld [vmem:[#allocation5 + $0xd68] sm:$0xff]
    %v496 = vld [vmem:[#allocation5 + $0xd70] sm:$0xff]
    %v497 = vld [vmem:[#allocation5 + $0xd78] sm:$0xff]
    %v498 = vld [vmem:[#allocation5 + $0xd80] sm:$0xff]
    %v499 = vld [vmem:[#allocation5 + $0xd88] sm:$0xff]
    %v500 = vld [vmem:[#allocation5 + $0xd90] sm:$0xff]
    %v501 = vld [vmem:[#allocation5 + $0xd98] sm:$0xff]
    %v502 = vld [vmem:[#allocation5 + $0xda0] sm:$0xff]
    %v503 = vld [vmem:[#allocation5 + $0xda8] sm:$0xff]
    %v504 = vld [vmem:[#allocation5 + $0xdb0] sm:$0xff]
    %v505 = vld [vmem:[#allocation5 + $0xdb8] sm:$0xff]
    %v506 = vld [vmem:[#allocation5 + $0xdc0] sm:$0xff]
    %v507 = vld [vmem:[#allocation5 + $0xdc8] sm:$0xff]
    %v508 = vld [vmem:[#allocation5 + $0xdd0] sm:$0xff]
    %v509 = vld [vmem:[#allocation5 + $0xdd8] sm:$0xff]
    %v510 = vld [vmem:[#allocation5 + $0xde0] sm:$0xff]
    %v511 = vld [vmem:[#allocation5 + $0xde8] sm:$0xff]
    %v512 = vld [vmem:[#allocation5 + $0xdf0] sm:$0xff]
    %v513 = vld [vmem:[#allocation5 + $0xdf8] sm:$0xff]
    %v514 = vld [vmem:[#allocation5 + $0xe00] sm:$0xff]
    %v515 = vld [vmem:[#allocation5 + $0xe08] sm:$0xff]
    %v516 = vld [vmem:[#allocation5 + $0xe10] sm:$0xff]
    %v517 = vld [vmem:[#allocation5 + $0xe18] sm:$0xff]
    %v518 = vld [vmem:[#allocation5 + $0xe20] sm:$0xff]
    %v519 = vld [vmem:[#allocation5 + $0xe28] sm:$0xff]
    %v520 = vld [vmem:[#allocation5 + $0xe30] sm:$0xff]
    %v521 = vld [vmem:[#allocation5 + $0xe38] sm:$0xff]
    %v522 = vld [vmem:[#allocation5 + $0xe40] sm:$0xff]
    %v523 = vld [vmem:[#allocation5 + $0xe48] sm:$0xff]
    %v524 = vld [vmem:[#allocation5 + $0xe50] sm:$0xff]
    %v525 = vld [vmem:[#allocation5 + $0xe58] sm:$0xff]
    %v526 = vld [vmem:[#allocation5 + $0xe60] sm:$0xff]
    %v527 = vld [vmem:[#allocation5 + $0xe68] sm:$0xff]
    %v528 = vld [vmem:[#allocation5 + $0xe70] sm:$0xff]
    %v529 = vld [vmem:[#allocation5 + $0xe78] sm:$0xff]
    %v530 = vld [vmem:[#allocation5 + $0xe80] sm:$0xff]
    %v531 = vld [vmem:[#allocation5 + $0xe88] sm:$0xff]
    %v532 = vld [vmem:[#allocation5 + $0xe90] sm:$0xff]
    %v533 = vld [vmem:[#allocation5 + $0xe98] sm:$0xff]
    %v534 = vld [vmem:[#allocation5 + $0xea0] sm:$0xff]
    %v535 = vld [vmem:[#allocation5 + $0xea8] sm:$0xff]
    %v536 = vld [vmem:[#allocation5 + $0xeb0] sm:$0xff]
    %v537 = vld [vmem:[#allocation5 + $0xeb8] sm:$0xff]
    %v538 = vld [vmem:[#allocation5 + $0xec0] sm:$0xff]
    %v539 = vld [vmem:[#allocation5 + $0xec8] sm:$0xff]
    %v540 = vld [vmem:[#allocation5 + $0xed0] sm:$0xff]
    %v541 = vld [vmem:[#allocation5 + $0xed8] sm:$0xff]
    %v542 = vld [vmem:[#allocation5 + $0xee0] sm:$0xff]
    %v543 = vld [vmem:[#allocation5 + $0xee8] sm:$0xff]
    %v544 = vld [vmem:[#allocation5 + $0xef0] sm:$0xff]
    %v545 = vld [vmem:[#allocation5 + $0xef8] sm:$0xff]
    %v546 = vld [vmem:[#allocation5 + $0xf00] sm:$0xff]
    %v547 = vld [vmem:[#allocation5 + $0xf08] sm:$0xff]
    %v548 = vld [vmem:[#allocation5 + $0xf10] sm:$0xff]
    %v549 = vld [vmem:[#allocation5 + $0xf18] sm:$0xff]
    %v550 = vld [vmem:[#allocation5 + $0xf20] sm:$0xff]
    %v551 = vld [vmem:[#allocation5 + $0xf28] sm:$0xff]
    %v552 = vld [vmem:[#allocation5 + $0xf30] sm:$0xff]
    %v553 = vld [vmem:[#allocation5 + $0xf38] sm:$0xff]
    %v554 = vld [vmem:[#allocation5 + $0xf40] sm:$0xff]
    %v555 = vld [vmem:[#allocation5 + $0xf48] sm:$0xff]
    %v556 = vld [vmem:[#allocation5 + $0xf50] sm:$0xff]
    %v557 = vld [vmem:[#allocation5 + $0xf58] sm:$0xff]
    %v558 = vld [vmem:[#allocation5 + $0xf60] sm:$0xff]
    %v559 = vld [vmem:[#allocation5 + $0xf68] sm:$0xff]
    %v560 = vld [vmem:[#allocation5 + $0xf70] sm:$0xff]
    %v561 = vld [vmem:[#allocation5 + $0xf78] sm:$0xff]
    %v562 = vld [vmem:[#allocation5 + $0xf80] sm:$0xff]
    %v563 = vld [vmem:[#allocation5 + $0xf88] sm:$0xff]
    %v564 = vld [vmem:[#allocation5 + $0xf90] sm:$0xff]
    %v565 = vld [vmem:[#allocation5 + $0xf98] sm:$0xff]
    %v566 = vld [vmem:[#allocation5 + $0xfa0] sm:$0xff]
    %v567 = vld [vmem:[#allocation5 + $0xfa8] sm:$0xff]
    %v568 = vld [vmem:[#allocation5 + $0xfb0] sm:$0xff]
    %v569 = vld [vmem:[#allocation5 + $0xfb8] sm:$0xff]
    %v570 = vld [vmem:[#allocation5 + $0xfc0] sm:$0xff]
    %v571 = vld [vmem:[#allocation5 + $0xfc8] sm:$0xff]
    %v572 = vld [vmem:[#allocation5 + $0xfd0] sm:$0xff]
    %v573 = vld [vmem:[#allocation5 + $0xfd8] sm:$0xff]
    %v574 = vld [vmem:[#allocation5 + $0xfe0] sm:$0xff]
    %v575 = vld [vmem:[#allocation5 + $0xfe8] sm:$0xff]
    %v576 = vld [vmem:[#allocation5 + $0xff0] sm:$0xff]
    %v577 = vld [vmem:[#allocation5 + $0xff8] sm:$0xff]
    %v578 = vld [vmem:[#allocation5 + $0x1000] sm:$0xff]
    %v579 = vld [vmem:[#allocation5 + $0x1008] sm:$0xff]
    %v580 = vld [vmem:[#allocation5 + $0x1010] sm:$0xff]
    %v581 = vld [vmem:[#allocation5 + $0x1018] sm:$0xff]
    %v582 = vld [vmem:[#allocation5 + $0x1020] sm:$0xff]
    %v583 = vld [vmem:[#allocation5 + $0x1028] sm:$0xff]
    %v584 = vld [vmem:[#allocation5 + $0x1030] sm:$0xff]
    %v585 = vld [vmem:[#allocation5 + $0x1038] sm:$0xff]
    %v586 = vld [vmem:[#allocation5 + $0x1040] sm:$0xff]
    %v587 = vld [vmem:[#allocation5 + $0x1048] sm:$0xff]
    %v588 = vld [vmem:[#allocation5 + $0x1050] sm:$0xff]
    %v589 = vld [vmem:[#allocation5 + $0x1058] sm:$0xff]
    %v590 = vld [vmem:[#allocation5 + $0x1060] sm:$0xff]
    %v591 = vld [vmem:[#allocation5 + $0x1068] sm:$0xff]
    %v592 = vld [vmem:[#allocation5 + $0x1070] sm:$0xff]
    %v593 = vld [vmem:[#allocation5 + $0x1078] sm:$0xff]
    %v594 = vld [vmem:[#allocation5 + $0x1080] sm:$0xff]
    %v595 = vld [vmem:[#allocation5 + $0x1088] sm:$0xff]
    %v596 = vld [vmem:[#allocation5 + $0x1090] sm:$0xff]
    %v597 = vld [vmem:[#allocation5 + $0x1098] sm:$0xff]
    %v598 = vld [vmem:[#allocation5 + $0x10a0] sm:$0xff]
    %v599 = vld [vmem:[#allocation5 + $0x10a8] sm:$0xff]
    %v600 = vld [vmem:[#allocation5 + $0x10b0] sm:$0xff]
    %v601 = vld [vmem:[#allocation5 + $0x10b8] sm:$0xff]
    %v602 = vld [vmem:[#allocation5 + $0x10c0] sm:$0xff]
    %v603 = vld [vmem:[#allocation5 + $0x10c8] sm:$0xff]
    %v604 = vld [vmem:[#allocation5 + $0x10d0] sm:$0xff]
    %v605 = vld [vmem:[#allocation5 + $0x10d8] sm:$0xff]
    %v606 = vld [vmem:[#allocation5 + $0x10e0] sm:$0xff]
    %v607 = vld [vmem:[#allocation5 + $0x10e8] sm:$0xff]
    %v608 = vld [vmem:[#allocation5 + $0x10f0] sm:$0xff]
    %v609 = vld [vmem:[#allocation5 + $0x10f8] sm:$0xff]
    %v610 = vld [vmem:[#allocation5 + $0x1100] sm:$0xff]
    %v611 = vld [vmem:[#allocation5 + $0x1108] sm:$0xff]
    %v612 = vld [vmem:[#allocation5 + $0x1110] sm:$0xff]
    %v613 = vld [vmem:[#allocation5 + $0x1118] sm:$0xff]
    %v614 = vld [vmem:[#allocation5 + $0x1120] sm:$0xff]
    %v615 = vld [vmem:[#allocation5 + $0x1128] sm:$0xff]
    %v616 = vld [vmem:[#allocation5 + $0x1130] sm:$0xff]
    %v617 = vld [vmem:[#allocation5 + $0x1138] sm:$0xff]
    %v618 = vld [vmem:[#allocation5 + $0x1140] sm:$0xff]
    %v619 = vld [vmem:[#allocation5 + $0x1148] sm:$0xff]
    %v620 = vld [vmem:[#allocation5 + $0x1150] sm:$0xff]
    %v621 = vld [vmem:[#allocation5 + $0x1158] sm:$0xff]
    %v622 = vld [vmem:[#allocation5 + $0x1160] sm:$0xff]
    %v623 = vld [vmem:[#allocation5 + $0x1168] sm:$0xff]
    %v624 = vld [vmem:[#allocation5 + $0x1170] sm:$0xff]
    %v625 = vld [vmem:[#allocation5 + $0x1178] sm:$0xff]
    %v626 = vld [vmem:[#allocation5 + $0x1180] sm:$0xff]
    %v627 = vld [vmem:[#allocation5 + $0x1188] sm:$0xff]
    %v628 = vld [vmem:[#allocation5 + $0x1190] sm:$0xff]
    %v629 = vld [vmem:[#allocation5 + $0x1198] sm:$0xff]
    %v630 = vld [vmem:[#allocation5 + $0x11a0] sm:$0xff]
    %v631 = vld [vmem:[#allocation5 + $0x11a8] sm:$0xff]
    %v632 = vld [vmem:[#allocation5 + $0x11b0] sm:$0xff]
    %v633 = vld [vmem:[#allocation5 + $0x11b8] sm:$0xff]
    %v634 = vld [vmem:[#allocation5 + $0x11c0] sm:$0xff]
    %v635 = vld [vmem:[#allocation5 + $0x11c8] sm:$0xff]
    %v636 = vld [vmem:[#allocation5 + $0x11d0] sm:$0xff]
    %v637 = vld [vmem:[#allocation5 + $0x11d8] sm:$0xff]
    %v638 = vld [vmem:[#allocation5 + $0x11e0] sm:$0xff]
    %v639 = vld [vmem:[#allocation5 + $0x11e8] sm:$0xff]
    %v640 = vld [vmem:[#allocation5 + $0x11f0] sm:$0xff]
    %v641 = vld [vmem:[#allocation5 + $0x11f8] sm:$0xff]
    %v642 = vld [vmem:[#allocation7] sm:$0x3f]
    %v644 = vlaneseq
    %v645 = vshrl.u32 %v644, 7
    %v646 = vsub.s32 0, %v645
    %v647 = vrot.slane %v642, %v646
    %v648 = vlaneseq
    %v649 = vshrl.u32 %v648, 7
    %v650 = vsub.s32 1, %v649
    %v651 = vrot.slane %v642, %v650
    %v652 = vlaneseq
    %v653 = vshrl.u32 %v652, 7
    %v654 = vsub.s32 2, %v653
    %v655 = vrot.slane %v642, %v654
    %v656 = vlaneseq
    %v657 = vshrl.u32 %v656, 7
    %v658 = vsub.s32 3, %v657
    %v659 = vrot.slane %v642, %v658
    %v660 = vlaneseq
    %v661 = vshrl.u32 %v660, 7
    %v662 = vsub.s32 4, %v661
    %v663 = vrot.slane %v642, %v662
    %v664 = vlaneseq
    %v665 = vshrl.u32 %v664, 7
    %v666 = vsub.s32 5, %v665
    %v667 = vrot.slane %v642, %v666
    %674 = vmatprep.subr.mxu0 %v67
    %675 = vmatpush1.msra.mxu0 %v66
    %676 = vmatprep.subr.mxu0 %v73
    %677 = vmatpush1.msra.mxu0 %v72
    %678 = vmatprep.subr.mxu0 %v79
    %679 = vmatpush1.msra.mxu0 %v78
    %680 = vmatprep.subr.mxu0 %v85
    %681 = vmatpush1.msra.mxu0 %v84
    %682 = vmatprep.subr.mxu0 %v91
    %683 = vmatpush1.msra.mxu0 %v90
    %684 = vmatprep.subr.mxu0 %v97
    %685 = vmatpush1.msra.mxu0 %v96
    %686 = vmatprep.subr.mxu0 %v103
    %687 = vmatpush1.msra.mxu0 %v102
    %688 = vmatprep.subr.mxu0 %v109
    %689 = vmatpush1.msra.mxu0 %v108
    %690 = vmatprep.subr.mxu0 %v115
    %691 = vmatpush1.msra.mxu0 %v114
    %692 = vmatprep.subr.mxu0 %v121
    %693 = vmatpush1.msra.mxu0 %v120
    %694 = vmatprep.subr.mxu0 %v127
    %695 = vmatpush1.msra.mxu0 %v126
    %696 = vmatprep.subr.mxu0 %v133
    %697 = vmatpush1.msra.mxu0 %v132
    %698 = vmatprep.subr.mxu0 %v139
    %699 = vmatpush1.msra.mxu0 %v138
    %700 = vmatprep.subr.mxu0 %v145
    %701 = vmatpush1.msra.mxu0 %v144
    %702 = vmatprep.subr.mxu0 %v151
    %703 = vmatpush1.msra.mxu0 %v150
    %704 = vmatprep.subr.mxu0 %v157
    %705 = vmatpush1.msra.mxu0 %v156
    %706 = vmatprep.subr.mxu0 %v163
    %707 = vmatpush1.msra.mxu0 %v162
    %708 = vmatprep.subr.mxu0 %v169
    %709 = vmatpush1.msra.mxu0 %v168
    %710 = vmatprep.subr.mxu0 %v175
    %711 = vmatpush1.msra.mxu0 %v174
    %712 = vmatprep.subr.mxu0 %v181
    %713 = vmatpush1.msra.mxu0 %v180
    %714 = vmatprep.subr.mxu0 %v187
    %715 = vmatpush1.msra.mxu0 %v186
    %716 = vmatprep.subr.mxu0 %v193
    %717 = vmatpush1.msra.mxu0 %v192
    %718 = vmatprep.subr.mxu0 %v199
    %719 = vmatpush1.msra.mxu0 %v198
    %720 = vmatprep.subr.mxu0 %v205
    %721 = vmatpush1.msra.mxu0 %v204
    %722 = vmatprep.subr.mxu0 %v211
    %723 = vmatpush1.msra.mxu0 %v210
    %724 = vmatprep.subr.mxu0 %v217
    %725 = vmatpush1.msra.mxu0 %v216
    %726 = vmatprep.subr.mxu0 %v223
    %727 = vmatpush1.msra.mxu0 %v222
    %728 = vmatprep.subr.mxu0 %v229
    %729 = vmatpush1.msra.mxu0 %v228
    %730 = vmatprep.subr.mxu0 %v235
    %731 = vmatpush1.msra.mxu0 %v234
    %732 = vmatprep.subr.mxu0 %v241
    %733 = vmatpush1.msra.mxu0 %v240
    %734 = vmatprep.subr.mxu0 %v247
    %735 = vmatpush1.msra.mxu0 %v246
    %736 = vmatprep.subr.mxu0 %v253
    %737 = vmatpush1.msra.mxu0 %v252
    %738 = vmatprep.mubr.f32.mxu0 %v55
    %739 = vmatmul.mubr.f32.gmra.mrb[0].mxu0 %v54
    %v740 = vpop.f32.mrb[0].mxu0
    %v741 = vadd.f32 %v647, %v740
    %v742 = vpop.f32.mrb[0].mxu0
    %v743 = vadd.f32 %v651, %v742
    %744 = vmatprep.mubr.f32.mxu0 %v61
    %745 = vmatmul.mubr.f32.gmra.mrb[0].mxu0 %v60
    %v746 = vpop.f32.mrb[0].mxu0
    %v747 = vadd.f32 %v647, %v746
    %v748 = vpop.f32.mrb[0].mxu0
    %v749 = vadd.f32 %v651, %v748
    %750 = vdwg.mxu0
    %751 = vmatprep.subr.mxu0 %v259
    %752 = vmatpush1.msra.mxu0 %v258
    %753 = vmatprep.subr.mxu0 %v265
    %754 = vmatpush1.msra.mxu0 %v264
    %755 = vmatprep.subr.mxu0 %v271
    %756 = vmatpush1.msra.mxu0 %v270
    %757 = vmatprep.subr.mxu0 %v277
    %758 = vmatpush1.msra.mxu0 %v276
    %759 = vmatprep.subr.mxu0 %v283
    %760 = vmatpush1.msra.mxu0 %v282
    %761 = vmatprep.subr.mxu0 %v289
    %762 = vmatpush1.msra.mxu0 %v288
    %763 = vmatprep.subr.mxu0 %v295
    %764 = vmatpush1.msra.mxu0 %v294
    %765 = vmatprep.subr.mxu0 %v301
    %766 = vmatpush1.msra.mxu0 %v300
    %767 = vmatprep.subr.mxu0 %v307
    %768 = vmatpush1.msra.mxu0 %v306
    %769 = vmatprep.subr.mxu0 %v313
    %770 = vmatpush1.msra.mxu0 %v312
    %771 = vmatprep.subr.mxu0 %v319
    %772 = vmatpush1.msra.mxu0 %v318
    %773 = vmatprep.subr.mxu0 %v325
    %774 = vmatpush1.msra.mxu0 %v324
    %775 = vmatprep.subr.mxu0 %v331
    %776 = vmatpush1.msra.mxu0 %v330
    %777 = vmatprep.subr.mxu0 %v337
    %778 = vmatpush1.msra.mxu0 %v336
    %779 = vmatprep.subr.mxu0 %v343
    %780 = vmatpush1.msra.mxu0 %v342
    %781 = vmatprep.subr.mxu0 %v349
    %782 = vmatpush1.msra.mxu0 %v348
    %783 = vmatprep.subr.mxu0 %v355
    %784 = vmatpush1.msra.mxu0 %v354
    %785 = vmatprep.subr.mxu0 %v361
    %786 = vmatpush1.msra.mxu0 %v360
    %787 = vmatprep.subr.mxu0 %v367
    %788 = vmatpush1.msra.mxu0 %v366
    %789 = vmatprep.subr.mxu0 %v373
    %790 = vmatpush1.msra.mxu0 %v372
    %791 = vmatprep.subr.mxu0 %v379
    %792 = vmatpush1.msra.mxu0 %v378
    %793 = vmatprep.subr.mxu0 %v385
    %794 = vmatpush1.msra.mxu0 %v384
    %795 = vmatprep.subr.mxu0 %v391
    %796 = vmatpush1.msra.mxu0 %v390
    %797 = vmatprep.subr.mxu0 %v397
    %798 = vmatpush1.msra.mxu0 %v396
    %799 = vmatprep.subr.mxu0 %v403
    %800 = vmatpush1.msra.mxu0 %v402
    %801 = vmatprep.subr.mxu0 %v409
    %802 = vmatpush1.msra.mxu0 %v408
    %803 = vmatprep.subr.mxu0 %v415
    %804 = vmatpush1.msra.mxu0 %v414
    %805 = vmatprep.subr.mxu0 %v421
    %806 = vmatpush1.msra.mxu0 %v420
    %807 = vmatprep.subr.mxu0 %v427
    %808 = vmatpush1.msra.mxu0 %v426
    %809 = vmatprep.subr.mxu0 %v433
    %810 = vmatpush1.msra.mxu0 %v432
    %811 = vmatprep.subr.mxu0 %v439
    %812 = vmatpush1.msra.mxu0 %v438
    %813 = vmatprep.subr.mxu0 %v445
    %814 = vmatpush1.msra.mxu0 %v444
    %815 = vmatprep.mubr.f32.mxu0 %v57
    %816 = vmatmul.mubr.f32.gmra.mrb[0].mxu0 %v56
    %v817 = vpop.f32.mrb[0].mxu0
    %v818 = vadd.f32 %v741, %v817
    %v819 = vpop.f32.mrb[0].mxu0
    %v820 = vadd.f32 %v743, %v819
    %821 = vmatprep.mubr.f32.mxu0 %v63
    %822 = vmatmul.mubr.f32.gmra.mrb[0].mxu0 %v62
    %v823 = vpop.f32.mrb[0].mxu0
    %v824 = vadd.f32 %v747, %v823
    %v825 = vpop.f32.mrb[0].mxu0
    %v826 = vadd.f32 %v749, %v825
    %827 = vdwg.mxu0
    %828 = vmatprep.subr.mxu0 %v451
    %829 = vmatpush1.msra.mxu0 %v450
    %830 = vmatprep.subr.mxu0 %v457
    %831 = vmatpush1.msra.mxu0 %v456
    %832 = vmatprep.subr.mxu0 %v463
    %833 = vmatpush1.msra.mxu0 %v462
    %834 = vmatprep.subr.mxu0 %v469
    %835 = vmatpush1.msra.mxu0 %v468
    %836 = vmatprep.subr.mxu0 %v475
    %837 = vmatpush1.msra.mxu0 %v474
    %838 = vmatprep.subr.mxu0 %v481
    %839 = vmatpush1.msra.mxu0 %v480
    %840 = vmatprep.subr.mxu0 %v487
    %841 = vmatpush1.msra.mxu0 %v486
    %842 = vmatprep.subr.mxu0 %v493
    %843 = vmatpush1.msra.mxu0 %v492
    %844 = vmatprep.subr.mxu0 %v499
    %845 = vmatpush1.msra.mxu0 %v498
    %846 = vmatprep.subr.mxu0 %v505
    %847 = vmatpush1.msra.mxu0 %v504
    %848 = vmatprep.subr.mxu0 %v511
    %849 = vmatpush1.msra.mxu0 %v510
    %850 = vmatprep.subr.mxu0 %v517
    %851 = vmatpush1.msra.mxu0 %v516
    %852 = vmatprep.subr.mxu0 %v523
    %853 = vmatpush1.msra.mxu0 %v522
    %854 = vmatprep.subr.mxu0 %v529
    %855 = vmatpush1.msra.mxu0 %v528
    %856 = vmatprep.subr.mxu0 %v535
    %857 = vmatpush1.msra.mxu0 %v534
    %858 = vmatprep.subr.mxu0 %v541
    %859 = vmatpush1.msra.mxu0 %v540
    %860 = vmatprep.subr.mxu0 %v547
    %861 = vmatpush1.msra.mxu0 %v546
    %862 = vmatprep.subr.mxu0 %v553
    %863 = vmatpush1.msra.mxu0 %v552
    %864 = vmatprep.subr.mxu0 %v559
    %865 = vmatpush1.msra.mxu0 %v558
    %866 = vmatprep.subr.mxu0 %v565
    %867 = vmatpush1.msra.mxu0 %v564
    %868 = vmatprep.subr.mxu0 %v571
    %869 = vmatpush1.msra.mxu0 %v570
    %870 = vmatprep.subr.mxu0 %v577
    %871 = vmatpush1.msra.mxu0 %v576
    %872 = vmatprep.subr.mxu0 %v583
    %873 = vmatpush1.msra.mxu0 %v582
    %874 = vmatprep.subr.mxu0 %v589
    %875 = vmatpush1.msra.mxu0 %v588
    %876 = vmatprep.subr.mxu0 %v595
    %877 = vmatpush1.msra.mxu0 %v594
    %878 = vmatprep.subr.mxu0 %v601
    %879 = vmatpush1.msra.mxu0 %v600
    %880 = vmatprep.subr.mxu0 %v607
    %881 = vmatpush1.msra.mxu0 %v606
    %882 = vmatprep.subr.mxu0 %v613
    %883 = vmatpush1.msra.mxu0 %v612
    %884 = vmatprep.subr.mxu0 %v619
    %885 = vmatpush1.msra.mxu0 %v618
    %886 = vmatprep.subr.mxu0 %v625
    %887 = vmatpush1.msra.mxu0 %v624
    %888 = vmatprep.subr.mxu0 %v631
    %889 = vmatpush1.msra.mxu0 %v630
    %890 = vmatprep.subr.mxu0 %v637
    %891 = vmatpush1.msra.mxu0 %v636
    %892 = vmatprep.mubr.f32.mxu0 %v59
    %893 = vmatmul.mubr.f32.gmra.mrb[0].mxu0 %v58
    %v894 = vpop.f32.mrb[0].mxu0
    %v895 = vadd.f32 %v818, %v894
    %v896 = vpop.f32.mrb[0].mxu0
    %v897 = vadd.f32 %v820, %v896
    %898 = vmatprep.mubr.f32.mxu0 %v65
    %899 = vmatmul.mubr.f32.gmra.mrb[0].mxu0 %v64
    %v900 = vpop.f32.mrb[0].mxu0
    %v901 = vadd.f32 %v824, %v900
    %v902 = vpop.f32.mrb[0].mxu0
    %v903 = vadd.f32 %v826, %v902
    %904 = vdwg.mxu0
    %905 = vmatprep.subr.mxu0 %v69
    %906 = vmatpush1.msra.mxu0 %v68
    %907 = vmatprep.subr.mxu0 %v75
    %908 = vmatpush1.msra.mxu0 %v74
    %909 = vmatprep.subr.mxu0 %v81
    %910 = vmatpush1.msra.mxu0 %v80
    %911 = vmatprep.subr.mxu0 %v87
    %912 = vmatpush1.msra.mxu0 %v86
    %913 = vmatprep.subr.mxu0 %v93
    %914 = vmatpush1.msra.mxu0 %v92
    %915 = vmatprep.subr.mxu0 %v99
    %916 = vmatpush1.msra.mxu0 %v98
    %917 = vmatprep.subr.mxu0 %v105
    %918 = vmatpush1.msra.mxu0 %v104
    %919 = vmatprep.subr.mxu0 %v111
    %920 = vmatpush1.msra.mxu0 %v110
    %921 = vmatprep.subr.mxu0 %v117
    %922 = vmatpush1.msra.mxu0 %v116
    %923 = vmatprep.subr.mxu0 %v123
    %924 = vmatpush1.msra.mxu0 %v122
    %925 = vmatprep.subr.mxu0 %v129
    %926 = vmatpush1.msra.mxu0 %v128
    %927 = vmatprep.subr.mxu0 %v135
    %928 = vmatpush1.msra.mxu0 %v134
    %929 = vmatprep.subr.mxu0 %v141
    %930 = vmatpush1.msra.mxu0 %v140
    %931 = vmatprep.subr.mxu0 %v147
    %932 = vmatpush1.msra.mxu0 %v146
    %933 = vmatprep.subr.mxu0 %v153
    %934 = vmatpush1.msra.mxu0 %v152
    %935 = vmatprep.subr.mxu0 %v159
    %936 = vmatpush1.msra.mxu0 %v158
    %937 = vmatprep.subr.mxu0 %v165
    %938 = vmatpush1.msra.mxu0 %v164
    %939 = vmatprep.subr.mxu0 %v171
    %940 = vmatpush1.msra.mxu0 %v170
    %941 = vmatprep.subr.mxu0 %v177
    %942 = vmatpush1.msra.mxu0 %v176
    %943 = vmatprep.subr.mxu0 %v183
    %944 = vmatpush1.msra.mxu0 %v182
    %945 = vmatprep.subr.mxu0 %v189
    %946 = vmatpush1.msra.mxu0 %v188
    %947 = vmatprep.subr.mxu0 %v195
    %948 = vmatpush1.msra.mxu0 %v194
    %949 = vmatprep.subr.mxu0 %v201
    %950 = vmatpush1.msra.mxu0 %v200
    %951 = vmatprep.subr.mxu0 %v207
    %952 = vmatpush1.msra.mxu0 %v206
    %953 = vmatprep.subr.mxu0 %v213
    %954 = vmatpush1.msra.mxu0 %v212
    %955 = vmatprep.subr.mxu0 %v219
    %956 = vmatpush1.msra.mxu0 %v218
    %957 = vmatprep.subr.mxu0 %v225
    %958 = vmatpush1.msra.mxu0 %v224
    %959 = vmatprep.subr.mxu0 %v231
    %960 = vmatpush1.msra.mxu0 %v230
    %961 = vmatprep.subr.mxu0 %v237
    %962 = vmatpush1.msra.mxu0 %v236
    %963 = vmatprep.subr.mxu0 %v243
    %964 = vmatpush1.msra.mxu0 %v242
    %965 = vmatprep.subr.mxu0 %v249
    %966 = vmatpush1.msra.mxu0 %v248
    %967 = vmatprep.subr.mxu0 %v255
    %968 = vmatpush1.msra.mxu0 %v254
    %969 = vmatprep.mubr.f32.mxu0 %v55
    %970 = vmatmul.mubr.f32.gmra.mrb[0].mxu0 %v54
    %v971 = vpop.f32.mrb[0].mxu0
    %v972 = vadd.f32 %v655, %v971
    %v973 = vpop.f32.mrb[0].mxu0
    %v974 = vadd.f32 %v659, %v973
    %975 = vmatprep.mubr.f32.mxu0 %v61
    %976 = vmatmul.mubr.f32.gmra.mrb[0].mxu0 %v60
    %v977 = vpop.f32.mrb[0].mxu0
    %v978 = vadd.f32 %v655, %v977
    %v979 = vpop.f32.mrb[0].mxu0
    %v980 = vadd.f32 %v659, %v979
    %981 = vdwg.mxu0
    %982 = vmatprep.subr.mxu0 %v261
    %983 = vmatpush1.msra.mxu0 %v260
    %984 = vmatprep.subr.mxu0 %v267
    %985 = vmatpush1.msra.mxu0 %v266
    %986 = vmatprep.subr.mxu0 %v273
    %987 = vmatpush1.msra.mxu0 %v272
    %988 = vmatprep.subr.mxu0 %v279
    %989 = vmatpush1.msra.mxu0 %v278
    %990 = vmatprep.subr.mxu0 %v285
    %991 = vmatpush1.msra.mxu0 %v284
    %992 = vmatprep.subr.mxu0 %v291
    %993 = vmatpush1.msra.mxu0 %v290
    %994 = vmatprep.subr.mxu0 %v297
    %995 = vmatpush1.msra.mxu0 %v296
    %996 = vmatprep.subr.mxu0 %v303
    %997 = vmatpush1.msra.mxu0 %v302
    %998 = vmatprep.subr.mxu0 %v309
    %999 = vmatpush1.msra.mxu0 %v308
    %1000 = vmatprep.subr.mxu0 %v315
    %1001 = vmatpush1.msra.mxu0 %v314
    %1002 = vmatprep.subr.mxu0 %v321
    %1003 = vmatpush1.msra.mxu0 %v320
    %1004 = vmatprep.subr.mxu0 %v327
    %1005 = vmatpush1.msra.mxu0 %v326
    %1006 = vmatprep.subr.mxu0 %v333
    %1007 = vmatpush1.msra.mxu0 %v332
    %1008 = vmatprep.subr.mxu0 %v339
    %1009 = vmatpush1.msra.mxu0 %v338
    %1010 = vmatprep.subr.mxu0 %v345
    %1011 = vmatpush1.msra.mxu0 %v344
    %1012 = vmatprep.subr.mxu0 %v351
    %1013 = vmatpush1.msra.mxu0 %v350
    %1014 = vmatprep.subr.mxu0 %v357
    %1015 = vmatpush1.msra.mxu0 %v356
    %1016 = vmatprep.subr.mxu0 %v363
    %1017 = vmatpush1.msra.mxu0 %v362
    %1018 = vmatprep.subr.mxu0 %v369
    %1019 = vmatpush1.msra.mxu0 %v368
    %1020 = vmatprep.subr.mxu0 %v375
    %1021 = vmatpush1.msra.mxu0 %v374
    %1022 = vmatprep.subr.mxu0 %v381
    %1023 = vmatpush1.msra.mxu0 %v380
    %1024 = vmatprep.subr.mxu0 %v387
    %1025 = vmatpush1.msra.mxu0 %v386
    %1026 = vmatprep.subr.mxu0 %v393
    %1027 = vmatpush1.msra.mxu0 %v392
    %1028 = vmatprep.subr.mxu0 %v399
    %1029 = vmatpush1.msra.mxu0 %v398
    %1030 = vmatprep.subr.mxu0 %v405
    %1031 = vmatpush1.msra.mxu0 %v404
    %1032 = vmatprep.subr.mxu0 %v411
    %1033 = vmatpush1.msra.mxu0 %v410
    %1034 = vmatprep.subr.mxu0 %v417
    %1035 = vmatpush1.msra.mxu0 %v416
    %1036 = vmatprep.subr.mxu0 %v423
    %1037 = vmatpush1.msra.mxu0 %v422
    %1038 = vmatprep.subr.mxu0 %v429
    %1039 = vmatpush1.msra.mxu0 %v428
    %1040 = vmatprep.subr.mxu0 %v435
    %1041 = vmatpush1.msra.mxu0 %v434
    %1042 = vmatprep.subr.mxu0 %v441
    %1043 = vmatpush1.msra.mxu0 %v440
    %1044 = vmatprep.subr.mxu0 %v447
    %1045 = vmatpush1.msra.mxu0 %v446
    %1046 = vmatprep.mubr.f32.mxu0 %v57
    %1047 = vmatmul.mubr.f32.gmra.mrb[0].mxu0 %v56
    %v1048 = vpop.f32.mrb[0].mxu0
    %v1049 = vadd.f32 %v972, %v1048
    %v1050 = vpop.f32.mrb[0].mxu0
    %v1051 = vadd.f32 %v974, %v1050
    %1052 = vmatprep.mubr.f32.mxu0 %v63
    %1053 = vmatmul.mubr.f32.gmra.mrb[0].mxu0 %v62
    %v1054 = vpop.f32.mrb[0].mxu0
    %v1055 = vadd.f32 %v978, %v1054
    %v1056 = vpop.f32.mrb[0].mxu0
    %v1057 = vadd.f32 %v980, %v1056
    %1058 = vdwg.mxu0
    %1059 = vmatprep.subr.mxu0 %v453
    %1060 = vmatpush1.msra.mxu0 %v452
    %1061 = vmatprep.subr.mxu0 %v459
    %1062 = vmatpush1.msra.mxu0 %v458
    %1063 = vmatprep.subr.mxu0 %v465
    %1064 = vmatpush1.msra.mxu0 %v464
    %1065 = vmatprep.subr.mxu0 %v471
    %1066 = vmatpush1.msra.mxu0 %v470
    %1067 = vmatprep.subr.mxu0 %v477
    %1068 = vmatpush1.msra.mxu0 %v476
    %1069 = vmatprep.subr.mxu0 %v483
    %1070 = vmatpush1.msra.mxu0 %v482
    %1071 = vmatprep.subr.mxu0 %v489
    %1072 = vmatpush1.msra.mxu0 %v488
    %1073 = vmatprep.subr.mxu0 %v495
    %1074 = vmatpush1.msra.mxu0 %v494
    %1075 = vmatprep.subr.mxu0 %v501
    %1076 = vmatpush1.msra.mxu0 %v500
    %1077 = vmatprep.subr.mxu0 %v507
    %1078 = vmatpush1.msra.mxu0 %v506
    %1079 = vmatprep.subr.mxu0 %v513
    %1080 = vmatpush1.msra.mxu0 %v512
    %1081 = vmatprep.subr.mxu0 %v519
    %1082 = vmatpush1.msra.mxu0 %v518
    %1083 = vmatprep.subr.mxu0 %v525
    %1084 = vmatpush1.msra.mxu0 %v524
    %1085 = vmatprep.subr.mxu0 %v531
    %1086 = vmatpush1.msra.mxu0 %v530
    %1087 = vmatprep.subr.mxu0 %v537
    %1088 = vmatpush1.msra.mxu0 %v536
    %1089 = vmatprep.subr.mxu0 %v543
    %1090 = vmatpush1.msra.mxu0 %v542
    %1091 = vmatprep.subr.mxu0 %v549
    %1092 = vmatpush1.msra.mxu0 %v548
    %1093 = vmatprep.subr.mxu0 %v555
    %1094 = vmatpush1.msra.mxu0 %v554
    %1095 = vmatprep.subr.mxu0 %v561
    %1096 = vmatpush1.msra.mxu0 %v560
    %1097 = vmatprep.subr.mxu0 %v567
    %1098 = vmatpush1.msra.mxu0 %v566
    %1099 = vmatprep.subr.mxu0 %v573
    %1100 = vmatpush1.msra.mxu0 %v572
    %1101 = vmatprep.subr.mxu0 %v579
    %1102 = vmatpush1.msra.mxu0 %v578
    %1103 = vmatprep.subr.mxu0 %v585
    %1104 = vmatpush1.msra.mxu0 %v584
    %1105 = vmatprep.subr.mxu0 %v591
    %1106 = vmatpush1.msra.mxu0 %v590
    %1107 = vmatprep.subr.mxu0 %v597
    %1108 = vmatpush1.msra.mxu0 %v596
    %1109 = vmatprep.subr.mxu0 %v603
    %1110 = vmatpush1.msra.mxu0 %v602
    %1111 = vmatprep.subr.mxu0 %v609
    %1112 = vmatpush1.msra.mxu0 %v608
    %1113 = vmatprep.subr.mxu0 %v615
    %1114 = vmatpush1.msra.mxu0 %v614
    %1115 = vmatprep.subr.mxu0 %v621
    %1116 = vmatpush1.msra.mxu0 %v620
    %1117 = vmatprep.subr.mxu0 %v627
    %1118 = vmatpush1.msra.mxu0 %v626
    %1119 = vmatprep.subr.mxu0 %v633
    %1120 = vmatpush1.msra.mxu0 %v632
    %1121 = vmatprep.subr.mxu0 %v639
    %1122 = vmatpush1.msra.mxu0 %v638
    %1123 = vmatprep.mubr.f32.mxu0 %v59
    %1124 = vmatmul.mubr.f32.gmra.mrb[0].mxu0 %v58
    %v1125 = vpop.f32.mrb[0].mxu0
    %v1126 = vadd.f32 %v1049, %v1125
    %v1127 = vpop.f32.mrb[0].mxu0
    %v1128 = vadd.f32 %v1051, %v1127
    %1129 = vmatprep.mubr.f32.mxu0 %v65
    %1130 = vmatmul.mubr.f32.gmra.mrb[0].mxu0 %v64
    %v1131 = vpop.f32.mrb[0].mxu0
    %v1132 = vadd.f32 %v1055, %v1131
    %v1133 = vpop.f32.mrb[0].mxu0
    %v1134 = vadd.f32 %v1057, %v1133
    %1135 = vdwg.mxu0
    %1136 = vmatprep.subr.mxu0 %v71
    %1137 = vmatpush1.msra.mxu0 %v70
    %1138 = vmatprep.subr.mxu0 %v77
    %1139 = vmatpush1.msra.mxu0 %v76
    %1140 = vmatprep.subr.mxu0 %v83
    %1141 = vmatpush1.msra.mxu0 %v82
    %1142 = vmatprep.subr.mxu0 %v89
    %1143 = vmatpush1.msra.mxu0 %v88
    %1144 = vmatprep.subr.mxu0 %v95
    %1145 = vmatpush1.msra.mxu0 %v94
    %1146 = vmatprep.subr.mxu0 %v101
    %1147 = vmatpush1.msra.mxu0 %v100
    %1148 = vmatprep.subr.mxu0 %v107
    %1149 = vmatpush1.msra.mxu0 %v106
    %1150 = vmatprep.subr.mxu0 %v113
    %1151 = vmatpush1.msra.mxu0 %v112
    %1152 = vmatprep.subr.mxu0 %v119
    %1153 = vmatpush1.msra.mxu0 %v118
    %1154 = vmatprep.subr.mxu0 %v125
    %1155 = vmatpush1.msra.mxu0 %v124
    %1156 = vmatprep.subr.mxu0 %v131
    %1157 = vmatpush1.msra.mxu0 %v130
    %1158 = vmatprep.subr.mxu0 %v137
    %1159 = vmatpush1.msra.mxu0 %v136
    %1160 = vmatprep.subr.mxu0 %v143
    %1161 = vmatpush1.msra.mxu0 %v142
    %1162 = vmatprep.subr.mxu0 %v149
    %1163 = vmatpush1.msra.mxu0 %v148
    %1164 = vmatprep.subr.mxu0 %v155
    %1165 = vmatpush1.msra.mxu0 %v154
    %1166 = vmatprep.subr.mxu0 %v161
    %1167 = vmatpush1.msra.mxu0 %v160
    %1168 = vmatprep.subr.mxu0 %v167
    %1169 = vmatpush1.msra.mxu0 %v166
    %1170 = vmatprep.subr.mxu0 %v173
    %1171 = vmatpush1.msra.mxu0 %v172
    %1172 = vmatprep.subr.mxu0 %v179
    %1173 = vmatpush1.msra.mxu0 %v178
    %1174 = vmatprep.subr.mxu0 %v185
    %1175 = vmatpush1.msra.mxu0 %v184
    %1176 = vmatprep.subr.mxu0 %v191
    %1177 = vmatpush1.msra.mxu0 %v190
    %1178 = vmatprep.subr.mxu0 %v197
    %1179 = vmatpush1.msra.mxu0 %v196
    %1180 = vmatprep.subr.mxu0 %v203
    %1181 = vmatpush1.msra.mxu0 %v202
    %1182 = vmatprep.subr.mxu0 %v209
    %1183 = vmatpush1.msra.mxu0 %v208
    %1184 = vmatprep.subr.mxu0 %v215
    %1185 = vmatpush1.msra.mxu0 %v214
    %1186 = vmatprep.subr.mxu0 %v221
    %1187 = vmatpush1.msra.mxu0 %v220
    %1188 = vmatprep.subr.mxu0 %v227
    %1189 = vmatpush1.msra.mxu0 %v226
    %1190 = vmatprep.subr.mxu0 %v233
    %1191 = vmatpush1.msra.mxu0 %v232
    %1192 = vmatprep.subr.mxu0 %v239
    %1193 = vmatpush1.msra.mxu0 %v238
    %1194 = vmatprep.subr.mxu0 %v245
    %1195 = vmatpush1.msra.mxu0 %v244
    %1196 = vmatprep.subr.mxu0 %v251
    %1197 = vmatpush1.msra.mxu0 %v250
    %1198 = vmatprep.subr.mxu0 %v257
    %1199 = vmatpush1.msra.mxu0 %v256
    %1200 = vmatprep.mubr.f32.mxu0 %v55
    %1201 = vmatmul.mubr.f32.gmra.mrb[0].mxu0 %v54
    %v1202 = vpop.f32.mrb[0].mxu0
    %v1203 = vadd.f32 %v663, %v1202
    %v1204 = vpop.f32.mrb[0].mxu0
    %v1205 = vadd.f32 %v667, %v1204
    %1206 = vmatprep.mubr.f32.mxu0 %v61
    %1207 = vmatmul.mubr.f32.gmra.mrb[0].mxu0 %v60
    %v1208 = vpop.f32.mrb[0].mxu0
    %v1209 = vadd.f32 %v663, %v1208
    %v1210 = vpop.f32.mrb[0].mxu0
    %v1211 = vadd.f32 %v667, %v1210
    %1212 = vdwg.mxu0
    %1213 = vmatprep.subr.mxu0 %v263
    %1214 = vmatpush1.msra.mxu0 %v262
    %1215 = vmatprep.subr.mxu0 %v269
    %1216 = vmatpush1.msra.mxu0 %v268
    %1217 = vmatprep.subr.mxu0 %v275
    %1218 = vmatpush1.msra.mxu0 %v274
    %1219 = vmatprep.subr.mxu0 %v281
    %1220 = vmatpush1.msra.mxu0 %v280
    %1221 = vmatprep.subr.mxu0 %v287
    %1222 = vmatpush1.msra.mxu0 %v286
    %1223 = vmatprep.subr.mxu0 %v293
    %1224 = vmatpush1.msra.mxu0 %v292
    %1225 = vmatprep.subr.mxu0 %v299
    %1226 = vmatpush1.msra.mxu0 %v298
    %1227 = vmatprep.subr.mxu0 %v305
    %1228 = vmatpush1.msra.mxu0 %v304
    %1229 = vmatprep.subr.mxu0 %v311
    %1230 = vmatpush1.msra.mxu0 %v310
    %1231 = vmatprep.subr.mxu0 %v317
    %1232 = vmatpush1.msra.mxu0 %v316
    %1233 = vmatprep.subr.mxu0 %v323
    %1234 = vmatpush1.msra.mxu0 %v322
    %1235 = vmatprep.subr.mxu0 %v329
    %1236 = vmatpush1.msra.mxu0 %v328
    %1237 = vmatprep.subr.mxu0 %v335
    %1238 = vmatpush1.msra.mxu0 %v334
    %1239 = vmatprep.subr.mxu0 %v341
    %1240 = vmatpush1.msra.mxu0 %v340
    %1241 = vmatprep.subr.mxu0 %v347
    %1242 = vmatpush1.msra.mxu0 %v346
    %1243 = vmatprep.subr.mxu0 %v353
    %1244 = vmatpush1.msra.mxu0 %v352
    %1245 = vmatprep.subr.mxu0 %v359
    %1246 = vmatpush1.msra.mxu0 %v358
    %1247 = vmatprep.subr.mxu0 %v365
    %1248 = vmatpush1.msra.mxu0 %v364
    %1249 = vmatprep.subr.mxu0 %v371
    %1250 = vmatpush1.msra.mxu0 %v370
    %1251 = vmatprep.subr.mxu0 %v377
    %1252 = vmatpush1.msra.mxu0 %v376
    %1253 = vmatprep.subr.mxu0 %v383
    %1254 = vmatpush1.msra.mxu0 %v382
    %1255 = vmatprep.subr.mxu0 %v389
    %1256 = vmatpush1.msra.mxu0 %v388
    %1257 = vmatprep.subr.mxu0 %v395
    %1258 = vmatpush1.msra.mxu0 %v394
    %1259 = vmatprep.subr.mxu0 %v401
    %1260 = vmatpush1.msra.mxu0 %v400
    %1261 = vmatprep.subr.mxu0 %v407
    %1262 = vmatpush1.msra.mxu0 %v406
    %1263 = vmatprep.subr.mxu0 %v413
    %1264 = vmatpush1.msra.mxu0 %v412
    %1265 = vmatprep.subr.mxu0 %v419
    %1266 = vmatpush1.msra.mxu0 %v418
    %1267 = vmatprep.subr.mxu0 %v425
    %1268 = vmatpush1.msra.mxu0 %v424
    %1269 = vmatprep.subr.mxu0 %v431
    %1270 = vmatpush1.msra.mxu0 %v430
    %1271 = vmatprep.subr.mxu0 %v437
    %1272 = vmatpush1.msra.mxu0 %v436
    %1273 = vmatprep.subr.mxu0 %v443
    %1274 = vmatpush1.msra.mxu0 %v442
    %1275 = vmatprep.subr.mxu0 %v449
    %1276 = vmatpush1.msra.mxu0 %v448
    %1277 = vmatprep.mubr.f32.mxu0 %v57
    %1278 = vmatmul.mubr.f32.gmra.mrb[0].mxu0 %v56
    %v1279 = vpop.f32.mrb[0].mxu0
    %v1280 = vadd.f32 %v1203, %v1279
    %v1281 = vpop.f32.mrb[0].mxu0
    %v1282 = vadd.f32 %v1205, %v1281
    %1283 = vmatprep.mubr.f32.mxu0 %v63
    %1284 = vmatmul.mubr.f32.gmra.mrb[0].mxu0 %v62
    %v1285 = vpop.f32.mrb[0].mxu0
    %v1286 = vadd.f32 %v1209, %v1285
    %v1287 = vpop.f32.mrb[0].mxu0
    %v1288 = vadd.f32 %v1211, %v1287
    %1289 = vdwg.mxu0
    %1290 = vmatprep.subr.mxu0 %v455
    %1291 = vmatpush1.msra.mxu0 %v454
    %1292 = vmatprep.subr.mxu0 %v461
    %1293 = vmatpush1.msra.mxu0 %v460
    %1294 = vmatprep.subr.mxu0 %v467
    %1295 = vmatpush1.msra.mxu0 %v466
    %1296 = vmatprep.subr.mxu0 %v473
    %1297 = vmatpush1.msra.mxu0 %v472
    %1298 = vmatprep.subr.mxu0 %v479
    %1299 = vmatpush1.msra.mxu0 %v478
    %1300 = vmatprep.subr.mxu0 %v485
    %1301 = vmatpush1.msra.mxu0 %v484
    %1302 = vmatprep.subr.mxu0 %v491
    %1303 = vmatpush1.msra.mxu0 %v490
    %1304 = vmatprep.subr.mxu0 %v497
    %1305 = vmatpush1.msra.mxu0 %v496
    %1306 = vmatprep.subr.mxu0 %v503
    %1307 = vmatpush1.msra.mxu0 %v502
    %1308 = vmatprep.subr.mxu0 %v509
    %1309 = vmatpush1.msra.mxu0 %v508
    %1310 = vmatprep.subr.mxu0 %v515
    %1311 = vmatpush1.msra.mxu0 %v514
    %1312 = vmatprep.subr.mxu0 %v521
    %1313 = vmatpush1.msra.mxu0 %v520
    %1314 = vmatprep.subr.mxu0 %v527
    %1315 = vmatpush1.msra.mxu0 %v526
    %1316 = vmatprep.subr.mxu0 %v533
    %1317 = vmatpush1.msra.mxu0 %v532
    %1318 = vmatprep.subr.mxu0 %v539
    %1319 = vmatpush1.msra.mxu0 %v538
    %1320 = vmatprep.subr.mxu0 %v545
    %1321 = vmatpush1.msra.mxu0 %v544
    %1322 = vmatprep.subr.mxu0 %v551
    %1323 = vmatpush1.msra.mxu0 %v550
    %1324 = vmatprep.subr.mxu0 %v557
    %1325 = vmatpush1.msra.mxu0 %v556
    %1326 = vmatprep.subr.mxu0 %v563
    %1327 = vmatpush1.msra.mxu0 %v562
    %1328 = vmatprep.subr.mxu0 %v569
    %1329 = vmatpush1.msra.mxu0 %v568
    %1330 = vmatprep.subr.mxu0 %v575
    %1331 = vmatpush1.msra.mxu0 %v574
    %1332 = vmatprep.subr.mxu0 %v581
    %1333 = vmatpush1.msra.mxu0 %v580
    %1334 = vmatprep.subr.mxu0 %v587
    %1335 = vmatpush1.msra.mxu0 %v586
    %1336 = vmatprep.subr.mxu0 %v593
    %1337 = vmatpush1.msra.mxu0 %v592
    %1338 = vmatprep.subr.mxu0 %v599
    %1339 = vmatpush1.msra.mxu0 %v598
    %1340 = vmatprep.subr.mxu0 %v605
    %1341 = vmatpush1.msra.mxu0 %v604
    %1342 = vmatprep.subr.mxu0 %v611
    %1343 = vmatpush1.msra.mxu0 %v610
    %1344 = vmatprep.subr.mxu0 %v617
    %1345 = vmatpush1.msra.mxu0 %v616
    %1346 = vmatprep.subr.mxu0 %v623
    %1347 = vmatpush1.msra.mxu0 %v622
    %1348 = vmatprep.subr.mxu0 %v629
    %1349 = vmatpush1.msra.mxu0 %v628
    %1350 = vmatprep.subr.mxu0 %v635
    %1351 = vmatpush1.msra.mxu0 %v634
    %1352 = vmatprep.subr.mxu0 %v641
    %1353 = vmatpush1.msra.mxu0 %v640
    %1354 = vmatprep.mubr.f32.mxu0 %v59
    %1355 = vmatmul.mubr.f32.gmra.mrb[0].mxu0 %v58
    %v1356 = vpop.f32.mrb[0].mxu0
    %v1357 = vadd.f32 %v1280, %v1356
    %v1358 = vpop.f32.mrb[0].mxu0
    %v1359 = vadd.f32 %v1282, %v1358
    %1360 = vmatprep.mubr.f32.mxu0 %v65
    %1361 = vmatmul.mubr.f32.gmra.mrb[0].mxu0 %v64
    %v1362 = vpop.f32.mrb[0].mxu0
    %v1363 = vadd.f32 %v1286, %v1362
    %v1364 = vpop.f32.mrb[0].mxu0
    %v1365 = vadd.f32 %v1288, %v1364
    %1366 = vdwg.mxu0
    %1367 = vst [vmem:[#allocation8] sm:$0xff] %v895
    %1368 = vst [vmem:[#allocation8 + $0x8] sm:$0xff] %v897
    %1369 = vst [vmem:[#allocation8 + $0x10] sm:$0xff] %v1126
    %1370 = vst [vmem:[#allocation8 + $0x18] sm:$0xff] %v1128
    %1371 = vst [vmem:[#allocation8 + $0x20] sm:$0xff] %v1357
    %1372 = vst [vmem:[#allocation8 + $0x28] sm:$0xff] %v1359
    %1373 = vst [vmem:[#allocation8 + $0x30] sm:$0xff] %v901
    %1374 = vst [vmem:[#allocation8 + $0x38] sm:$0xff] %v903
    %1375 = vst [vmem:[#allocation8 + $0x40] sm:$0xff] %v1132
    %1376 = vst [vmem:[#allocation8 + $0x48] sm:$0xff] %v1134
    %1377 = vst [vmem:[#allocation8 + $0x50] sm:$0xff] %v1363
    %1378 = vst [vmem:[#allocation8 + $0x58] sm:$0xff] %v1365
    // Predicated region
    $region26: #{tpu_custom_call.1} parent=1 // pred_check
      _
    $region27: #{tpu_custom_call.1} parent=1 // pred_check_branch
      %1380 = sbr.rel (0) target = $region29
    $region28: #{tpu_custom_call.1} parent=1 // pred_region
      %s1382 = ssub.s32 1536, 1536
      %1383 = vsyncadd [#allocation4], %s1382
      %s1384 = sshll.u32 [#allocation8], 4
      %s1385 = int_to_ptr.vmem [resolvable:$true] %s1384
      %1390 = dma.vmem_to_hbm [thread:$0]  %s1385, 1536, %s3, [#allocation4], 768, 768, 48
    $region29: #{tpu_custom_call.1} parent=1 // pred_fallthru
      _
    // Predicated region
    $region30: #{tpu_custom_call.1} parent=1 // pred_check
      _
    $region31: #{tpu_custom_call.1} parent=1 // pred_check_branch
      %1392 = sbr.rel (0) target = $region33
    $region32: #{tpu_custom_call.1} parent=1 // pred_region
      %1393 = dma.done [#allocation4], 1536
    $region33: #{tpu_custom_call.1} parent=1 // pred_fallthru
      _
    %1394 = vsyncpa [#allocation3], 1
    %1395 = vsyncpa [#allocation6], 1
    %1396 = vsyncpa [#allocation4], 1

</llo_original>
